<compile_context>
chip_gen: v7x
topology: tpu7x:2x2x1
jax: 0.10.0
libtpu: 0.0.40
codegen_flags: <defaults>
</compile_context>

<pallas_src>
import jax
import jax.numpy as jnp
from jax.experimental import pallas as pl
from jax.experimental.pallas import tpu as pltpu

# ----------------------------- config ---------------------------------------
D_MODEL = 32
NHEAD = 4
HEAD_DIM = D_MODEL // NHEAD
NUM_ENC_LAYERS = 2
NUM_DEC_LAYERS = 2
DIM_FF = 64
LN_EPS = 1e-5          # nn.Transformer default layer_norm_eps
BATCH = 2
SEQ = 8

# ----------------------------- weight packing (host-side, once) --------------


def _pack_params(params):
    """Fuse / reorder / pad every parameter into ONE (rows, 128) f32 slab.

    Each tensor starts on an 8-row boundary and is lane-padded to 128, so the
    kernel can recover it with a static, tile-aligned ref slice.  All algebraic
    weight fusions (score scale into Wq, decoder-SA collapse, cross-attention
    K/V concat across layers) happen here, not inside the kernel.
    Returns (slab, layout) with layout[name] = (row_offset, rows, cols).
    """
    E, H, HD, S = D_MODEL, NHEAD, HEAD_DIM, SEQ
    scale = 1.0 / float(HD) ** 0.5
    hi = jax.lax.Precision.HIGHEST
    enc, dec = params["enc"], params["dec"]

    blocks, layout = [], {}
    row = 0

    def add(name, a):
        nonlocal row
        a = jnp.asarray(a, jnp.float32)
        if a.ndim == 1:
            a = a[None, :]
        r, c = a.shape
        r8 = ((r + 7) // 8) * 8
        pad = jnp.zeros((r8, 128), jnp.float32).at[:r, :c].set(a)
        blocks.append(pad)
        layout[name] = (row, r, c)
        row += r8

    # Constant head-block masks shared by encoder self-attn and decoder cross-attn
    # (both attend over Sk = SEQ keys).
    hs = H * S
    ridx = jnp.arange(hs)
    tile_mask = (jnp.arange(E)[None, :] // HD == ridx[:, None] // S).astype(jnp.float32)
    sum_mask = (ridx[None, :] // S == ridx[:, None] // S).astype(jnp.float32)
    add("attn_tile_mask", tile_mask)   # (H*S, E)
    add("attn_sum_mask", sum_mask)     # (H*S, H*S)

    # ------------------------------ encoder ---------------------------------
    for l in range(NUM_ENC_LAYERS):
        wqkv = enc["wqkv"][l]
        bqkv = enc["bqkv"][l][0]
        # fold 1/sqrt(head_dim) into the Q projection (weights + bias)
        add(f"enc{l}_wqkv", jnp.concatenate([wqkv[:, :E] * scale, wqkv[:, E:]], axis=1))
        add(f"enc{l}_bqkv", jnp.concatenate([bqkv[:E] * scale, bqkv[E:]]))
        add(f"enc{l}_wo", enc["wo"][l]);  add(f"enc{l}_bo", enc["bo"][l][0])
        add(f"enc{l}_w1", enc["w1"][l]);  add(f"enc{l}_b1", enc["b1"][l][0])
        add(f"enc{l}_w2", enc["w2"][l]);  add(f"enc{l}_b2", enc["b2"][l][0])
        add(f"enc{l}_ln1g", enc["ln1_g"][l][0]); add(f"enc{l}_ln1b", enc["ln1_b"][l][0])
        add(f"enc{l}_ln2g", enc["ln2_g"][l][0]); add(f"enc{l}_ln2b", enc["ln2_b"][l][0])
    add("enc_norm_g", params["enc_norm_g"][0]); add("enc_norm_b", params["enc_norm_b"][0])

    # ------------------------------ decoder ---------------------------------
    # Cross-attention K/V projection of the loop-invariant encoder memory,
    # fused over BOTH decoder layers -> one lane-dense (E, 128) weight.
    add("dec_ca_wkv_all",
        jnp.concatenate([dec["ca_wkv"][l] for l in range(NUM_DEC_LAYERS)], axis=1))
    add("dec_ca_bkv_all",
        jnp.concatenate([dec["ca_bkv"][l][0] for l in range(NUM_DEC_LAYERS)]))

    for l in range(NUM_DEC_LAYERS):
        # Decoder self-attention (Sq = Sk = 1): softmax over one key == 1, so the
        # whole block is exactly  out @ (Wv @ Wo) + (bv @ Wo + bo).
        wqkv = dec["sa_wqkv"][l]
        bqkv = dec["sa_bqkv"][l][0]
        wv, bv = wqkv[:, 2 * E:], bqkv[2 * E:]
        wo, bo = dec["sa_wo"][l], dec["sa_bo"][l][0]
        add(f"dec{l}_sa_w", jnp.dot(wv, wo, precision=hi))
        add(f"dec{l}_sa_b", jnp.dot(bv, wo, precision=hi) + bo)

        add(f"dec{l}_ca_wq", dec["ca_wq"][l] * scale)
        add(f"dec{l}_ca_bq", dec["ca_bq"][l][0] * scale)
        add(f"dec{l}_ca_wo", dec["ca_wo"][l]); add(f"dec{l}_ca_bo", dec["ca_bo"][l][0])
        add(f"dec{l}_w1", dec["w1"][l]);       add(f"dec{l}_b1", dec["b1"][l][0])
        add(f"dec{l}_w2", dec["w2"][l]);       add(f"dec{l}_b2", dec["b2"][l][0])
        add(f"dec{l}_ln1g", dec["ln1_g"][l][0]); add(f"dec{l}_ln1b", dec["ln1_b"][l][0])
        add(f"dec{l}_ln2g", dec["ln2_g"][l][0]); add(f"dec{l}_ln2b", dec["ln2_b"][l][0])
        add(f"dec{l}_ln3g", dec["ln3_g"][l][0]); add(f"dec{l}_ln3b", dec["ln3_b"][l][0])
    add("dec_norm_g", params["dec_norm_g"][0]); add("dec_norm_b", params["dec_norm_b"][0])

    return jnp.concatenate(blocks, axis=0), layout


# ----------------------------- fused forward kernel --------------------------


def _make_kernel(layout, B, S):
    E, H, HD, HS = D_MODEL, NHEAD, HEAD_DIM, NHEAD * SEQ

    def kernel(x_ref, w_ref, out_ref):
        def get(name):
            r0, r, c = layout[name]
            return w_ref[r0:r0 + r, :c]

        def recip(z):
            r = pl.reciprocal(z, approx=True)     # EUP slot
            return r * (2.0 - z * r)              # one Newton step -> f32 accuracy

        def layer_norm(z, gname, bname):
            mu = jnp.mean(z, axis=-1, keepdims=True)
            c = z - mu
            var = jnp.mean(c * c, axis=-1, keepdims=True)
            return c * jax.lax.rsqrt(var + LN_EPS) * get(gname) + get(bname)

        tile_mask = get("attn_tile_mask")         # (H*S, E)
        sum_mask = get("attn_sum_mask")           # (H*S, H*S)

        def mha(q3, k3, v3, wo_name, bo_name):
            """All heads at once via block-diagonal masking (no per-head loop).

            q3: (B, Sq, E) with the 1/sqrt(hd) scale already folded into Wq.
            k3/v3: (B, S, E).  Output: (B*Sq, E) after the output projection.
            """
            Bq, Sq, _ = q3.shape
            k_blk = jnp.concatenate([k3] * H, axis=1) * tile_mask   # (B, H*S, E)
            v_blk = jnp.concatenate([v3] * H, axis=1) * tile_mask   # (B, H*S, E)
            # per-head scores for all heads: (B, Sq, H*S)
            s = jax.lax.dot_general(q3, k_blk, (((2,), (2,)), ((0,), (0,))),
                                    preferred_element_type=jnp.float32)
            p = jnp.exp(s)                                          # logits O(1): no max-sub
            p2 = p.reshape(Bq * Sq, HS)
            # per-head softmax denominator broadcast to its 8 lanes via one matmul
            denom = jnp.dot(p2, sum_mask, preferred_element_type=jnp.float32)
            pn = (p2 * recip(denom)).reshape(Bq, Sq, HS)
            # P @ V with the head-concat already baked into v_blk's lane layout
            o = jax.lax.dot_general(pn, v_blk, (((2,), (1,)), ((0,), (0,))),
                                    preferred_element_type=jnp.float32)  # (B, Sq, E)
            o2 = o.reshape(Bq * Sq, E)
            return jnp.dot(o2, get(wo_name),
                           preferred_element_type=jnp.float32) + get(bo_name)

        def ffn(z, w1n, b1n, w2n, b2n):
            h = jnp.maximum(jnp.dot(z, get(w1n),
                                    preferred_element_type=jnp.float32) + get(b1n), 0.0)
            return jnp.dot(h, get(w2n), preferred_element_type=jnp.float32) + get(b2n)

        x3 = x_ref[...]                           # (B, S, E)
        mem2 = x3.reshape(B * S, E)               # activations never leave VMEM/vregs

        # ------------------------- encoder stack -----------------------------
        for l in range(NUM_ENC_LAYERS):
            qkv = (jnp.dot(mem2, get(f"enc{l}_wqkv"),
                           preferred_element_type=jnp.float32) + get(f"enc{l}_bqkv"))
            q3 = qkv[:, :E].reshape(B, S, E)
            k3 = qkv[:, E:2 * E].reshape(B, S, E)
            v3 = qkv[:, 2 * E:].reshape(B, S, E)
            sa = mha(q3, k3, v3, f"enc{l}_wo", f"enc{l}_bo")
            mem2 = layer_norm(mem2 + sa, f"enc{l}_ln1g", f"enc{l}_ln1b")
            ff = ffn(mem2, f"enc{l}_w1", f"enc{l}_b1", f"enc{l}_w2", f"enc{l}_b2")
            mem2 = layer_norm(mem2 + ff, f"enc{l}_ln2g", f"enc{l}_ln2b")
        mem2 = layer_norm(mem2, "enc_norm_g", "enc_norm_b")

        # Cross-attention K/V of the loop-invariant memory, both decoder layers
        # in ONE fully lane-dense (B*S, 128) matmul.
        kv_all = (jnp.dot(mem2, get("dec_ca_wkv_all"),
                          preferred_element_type=jnp.float32) + get("dec_ca_bkv_all"))

        # ------------------------- decoder stack (tgt = last step) -----------
        out2 = x3[:, S - 1:S, :].reshape(B, E)
        for l in range(NUM_DEC_LAYERS):
            # self-attention over one key == identity softmax, pre-fused at pack time
            sa = (jnp.dot(out2, get(f"dec{l}_sa_w"),
                          preferred_element_type=jnp.float32) + get(f"dec{l}_sa_b"))
            out2 = layer_norm(out2 + sa, f"dec{l}_ln1g", f"dec{l}_ln1b")

            # cross-attention (queries from tgt, keys/values precomputed above)
            q = (jnp.dot(out2, get(f"dec{l}_ca_wq"),
                         preferred_element_type=jnp.float32) + get(f"dec{l}_ca_bq"))
            k3 = kv_all[:, 2 * E * l:2 * E * l + E].reshape(B, S, E)
            v3 = kv_all[:, 2 * E * l + E:2 * E * (l + 1)].reshape(B, S, E)
            ca = mha(q.reshape(B, 1, E), k3, v3, f"dec{l}_ca_wo", f"dec{l}_ca_bo")
            out2 = layer_norm(out2 + ca, f"dec{l}_ln2g", f"dec{l}_ln2b")

            ff = ffn(out2, f"dec{l}_w1", f"dec{l}_b1", f"dec{l}_w2", f"dec{l}_b2")
            out2 = layer_norm(out2 + ff, f"dec{l}_ln3g", f"dec{l}_ln3b")
        out2 = layer_norm(out2, "dec_norm_g", "dec_norm_b")

        out_ref[...] = out2.reshape(B, 1, E)

    return kernel


# ----------------------------- wrapper ---------------------------------------


def build_temporal_transformer_forward(layout, batch, seq):
    """Returns a jitted forward(x, slab) -> (batch, 1, d_model)."""
    kernel = _make_kernel(layout, batch, seq)
    vmem = pl.BlockSpec(memory_space=pltpu.MemorySpace.VMEM)

    @jax.jit
    def forward(x, slab):
        return pl.pallas_call(
            kernel,
            out_shape=jax.ShapeDtypeStruct((batch, 1, D_MODEL), jnp.float32),
            in_specs=[vmem, vmem],     # x + ONE packed weight slab -> 2 DMAs total
            out_specs=vmem,
        )(x, slab)

    return forward


# ----------------------------- parameter init --------------------------------


def _init_params(key):
    E, F = D_MODEL, DIM_FF
    Le, Ld = NUM_ENC_LAYERS, NUM_DEC_LAYERS

    def w(k, shape, scale=0.1):
        return jax.random.normal(k, shape, jnp.float32) * scale

    k = jax.random.split(key, 20)
    enc = dict(
        wqkv=w(k[0], (Le, E, 3 * E)), bqkv=w(k[1], (Le, 1, 3 * E), 0.02),
        wo=w(k[2], (Le, E, E)),       bo=w(k[3], (Le, 1, E), 0.02),
        w1=w(k[4], (Le, E, F)),       b1=w(k[5], (Le, 1, F), 0.02),
        w2=w(k[6], (Le, F, E)),       b2=w(k[7], (Le, 1, E), 0.02),
        ln1_g=jnp.ones((Le, 1, E)), ln1_b=jnp.zeros((Le, 1, E)),
        ln2_g=jnp.ones((Le, 1, E)), ln2_b=jnp.zeros((Le, 1, E)),
    )
    dec = dict(
        sa_wqkv=w(k[8], (Ld, E, 3 * E)), sa_bqkv=w(k[9], (Ld, 1, 3 * E), 0.02),
        sa_wo=w(k[10], (Ld, E, E)),      sa_bo=w(k[11], (Ld, 1, E), 0.02),
        ca_wq=w(k[12], (Ld, E, E)),      ca_bq=w(k[13], (Ld, 1, E), 0.02),
        ca_wkv=w(k[14], (Ld, E, 2 * E)), ca_bkv=w(k[15], (Ld, 1, 2 * E), 0.02),
        ca_wo=w(k[16], (Ld, E, E)),      ca_bo=w(k[17], (Ld, 1, E), 0.02),
        w1=w(k[18], (Ld, E, F)),         b1=jnp.zeros((Ld, 1, F)),
        w2=w(k[19], (Ld, F, E)),         b2=jnp.zeros((Ld, 1, E)),
        ln1_g=jnp.ones((Ld, 1, E)), ln1_b=jnp.zeros((Ld, 1, E)),
        ln2_g=jnp.ones((Ld, 1, E)), ln2_b=jnp.zeros((Ld, 1, E)),
        ln3_g=jnp.ones((Ld, 1, E)), ln3_b=jnp.zeros((Ld, 1, E)),
    )
    return dict(
        enc=enc, dec=dec,
        enc_norm_g=jnp.ones((1, E)), enc_norm_b=jnp.zeros((1, E)),
        dec_norm_g=jnp.ones((1, E)), dec_norm_b=jnp.zeros((1, E)),
    )


# ----------------------------- pure-JAX reference -----------------------------


def _ref_forward(x, params):
    B, S, E = x.shape
    enc, dec = params["enc"], params["dec"]

    def ln(z, g, b):
        mu = z.mean(-1, keepdims=True)
        var = ((z - mu) ** 2).mean(-1, keepdims=True)
        return (z - mu) / jnp.sqrt(var + LN_EPS) * g.reshape(-1) + b.reshape(-1)

    def mha(q_in, k_in, v_in, wq, bq, wk, bk, wv, bv, wo, bo):
        Bq, Sq, _ = q_in.shape
        Sk = k_in.shape[1]
        q = (q_in @ wq + bq).reshape(Bq, Sq, NHEAD, HEAD_DIM).transpose(0, 2, 1, 3)
        k = (k_in @ wk + bk).reshape(Bq, Sk, NHEAD, HEAD_DIM).transpose(0, 2, 1, 3)
        v = (v_in @ wv + bv).reshape(Bq, Sk, NHEAD, HEAD_DIM).transpose(0, 2, 1, 3)
        s = jnp.einsum("bhqd,bhkd->bhqk", q, k) / jnp.sqrt(float(HEAD_DIM))
        a = jax.nn.softmax(s, axis=-1)
        o = jnp.einsum("bhqk,bhkd->bhqd", a, v).transpose(0, 2, 1, 3).reshape(Bq, Sq, E)
        return o @ wo + bo.reshape(-1)

    mem = x
    for l in range(NUM_ENC_LAYERS):
        wqkv, bqkv = enc["wqkv"][l], enc["bqkv"][l][0]
        sa = mha(mem, mem, mem,
                 wqkv[:, :E], bqkv[:E], wqkv[:, E:2 * E], bqkv[E:2 * E],
                 wqkv[:, 2 * E:], bqkv[2 * E:], enc["wo"][l], enc["bo"][l])
        mem = ln(mem + sa, enc["ln1_g"][l], enc["ln1_b"][l])
        ff = (jnp.maximum(mem @ enc["w1"][l] + enc["b1"][l][0], 0.0)
              @ enc["w2"][l] + enc["b2"][l][0])
        mem = ln(mem + ff, enc["ln2_g"][l], enc["ln2_b"][l])
    mem = ln(mem, params["enc_norm_g"], params["enc_norm_b"])

    out = x[:, -1:, :]
    for l in range(NUM_DEC_LAYERS):
        wqkv, bqkv = dec["sa_wqkv"][l], dec["sa_bqkv"][l][0]
        sa = mha(out, out, out,
                 wqkv[:, :E], bqkv[:E], wqkv[:, E:2 * E], bqkv[E:2 * E],
                 wqkv[:, 2 * E:], bqkv[2 * E:], dec["sa_wo"][l], dec["sa_bo"][l])
        out = ln(out + sa, dec["ln1_g"][l], dec["ln1_b"][l])

        wkv, bkv = dec["ca_wkv"][l], dec["ca_bkv"][l][0]
        ca = mha(out, mem, mem,
                 dec["ca_wq"][l], dec["ca_bq"][l][0],
                 wkv[:, :E], bkv[:E], wkv[:, E:], bkv[E:],
                 dec["ca_wo"][l], dec["ca_bo"][l])
        out = ln(out + ca, dec["ln2_g"][l], dec["ln2_b"][l])

        ff = (jnp.maximum(out @ dec["w1"][l] + dec["b1"][l][0], 0.0)
              @ dec["w2"][l] + dec["b2"][l][0])
        out = ln(out + ff, dec["ln3_g"][l], dec["ln3_b"][l])
    out = ln(out, params["dec_norm_g"], params["dec_norm_b"])
    return out


# ----------------------------- main -------------------------------------------

if __name__ == "__main__":
    key = jax.random.PRNGKey(0)
    k_param, k_x = jax.random.split(key)
    params = _init_params(k_param)
    x = jax.random.normal(k_x, (BATCH, SEQ, D_MODEL), jnp.float32)

    # One-time host-side weight fusion / packing (outside the hot path).
    slab, layout = _pack_params(params)
    fwd = build_temporal_transformer_forward(layout, BATCH, SEQ)
    out = jax.block_until_ready(fwd(x, slab))

    with jax.default_matmul_precision("highest"):
        ref = jax.block_until_ready(jax.jit(_ref_forward)(x, params))

    assert out.shape == (BATCH, 1, D_MODEL), out.shape
    max_diff = float(jnp.max(jnp.abs(out - ref)))
    assert max_diff < 2e-3, f"mismatch vs JAX reference: {max_diff}"

    print("KERNEL_OK")
</pallas_src>

<mosaic_0001>
module attributes {stable_mosaic.version = 11 : i64} {
  func.func @kernel(%arg0: memref<2x8x32xf32, #tpu.memory_space<vmem>>, %arg1: memref<1144x128xf32, #tpu.memory_space<vmem>>, %arg2: memref<2x1x32xf32, #tpu.memory_space<vmem>>) attributes {dimension_semantics = [], scalar_prefetch = 0 : i64, scratch_operands = 0 : i64, tpu.core_type = #tpu.core_type<tc>} {
    %c0 = arith.constant 0 : index
    %c0_0 = arith.constant 0 : index
    %0 = vector.load %arg1[%c0, %c0_0] : memref<1144x128xf32, #tpu.memory_space<vmem>>, vector<32x32xf32>
    %c32 = arith.constant 32 : index
    %c0_1 = arith.constant 0 : index
    %1 = vector.load %arg1[%c32, %c0_1] : memref<1144x128xf32, #tpu.memory_space<vmem>>, vector<32x32xf32>
    %c0_2 = arith.constant 0 : index
    %c0_3 = arith.constant 0 : index
    %c0_4 = arith.constant 0 : index
    %2 = vector.load %arg0[%c0_2, %c0_3, %c0_4] : memref<2x8x32xf32, #tpu.memory_space<vmem>>, vector<2x8x32xf32>
    %3 = vector.shape_cast %2 : vector<2x8x32xf32> to vector<16x32xf32>
    %c64 = arith.constant 64 : index
    %c0_5 = arith.constant 0 : index
    %4 = vector.load %arg1[%c64, %c0_5] : memref<1144x128xf32, #tpu.memory_space<vmem>>, vector<32x96xf32>
    %cst = arith.constant dense<0.000000e+00> : vector<16x96xf32>
    %5 = tpu.matmul %3, %4, %cst {dimension_numbers = #tpu.dot_dimension_numbers<[1], [0], [0], [1], [0, 0, 1, 1], [], []>} : vector<16x32xf32>, vector<32x96xf32>, vector<16x96xf32> -> vector<16x96xf32>
    %c96 = arith.constant 96 : index
    %c0_6 = arith.constant 0 : index
    %6 = vector.load %arg1[%c96, %c0_6] : memref<1144x128xf32, #tpu.memory_space<vmem>>, vector<1x96xf32>
    %7 = vector.broadcast %6 : vector<1x96xf32> to vector<16x96xf32>
    %8 = arith.addf %5, %7 : vector<16x96xf32>
    %9 = vector.extract_strided_slice %8 {offsets = [0, 0], sizes = [16, 32], strides = [1, 1]} : vector<16x96xf32> to vector<16x32xf32>
    %10 = vector.shape_cast %9 : vector<16x32xf32> to vector<2x8x32xf32>
    %11 = vector.extract_strided_slice %8 {offsets = [0, 32], sizes = [16, 32], strides = [1, 1]} : vector<16x96xf32> to vector<16x32xf32>
    %12 = vector.shape_cast %11 : vector<16x32xf32> to vector<2x8x32xf32>
    %13 = vector.extract_strided_slice %8 {offsets = [0, 64], sizes = [16, 32], strides = [1, 1]} : vector<16x96xf32> to vector<16x32xf32>
    %14 = vector.shape_cast %13 : vector<16x32xf32> to vector<2x8x32xf32>
    %15 = tpu.concatenate %12, %12, %12, %12 in 1 : vector<2x8x32xf32>, vector<2x8x32xf32>, vector<2x8x32xf32>, vector<2x8x32xf32> -> vector<2x32x32xf32>
    %16 = vector.shape_cast %0 : vector<32x32xf32> to vector<1x32x32xf32>
    %17 = vector.broadcast %16 : vector<1x32x32xf32> to vector<2x32x32xf32>
    %18 = arith.mulf %15, %17 : vector<2x32x32xf32>
    %19 = tpu.concatenate %14, %14, %14, %14 in 1 : vector<2x8x32xf32>, vector<2x8x32xf32>, vector<2x8x32xf32>, vector<2x8x32xf32> -> vector<2x32x32xf32>
    %20 = vector.shape_cast %0 : vector<32x32xf32> to vector<1x32x32xf32>
    %21 = vector.broadcast %20 : vector<1x32x32xf32> to vector<2x32x32xf32>
    %22 = arith.mulf %19, %21 : vector<2x32x32xf32>
    %cst_7 = arith.constant dense<0.000000e+00> : vector<2x8x32xf32>
    %23 = tpu.matmul %10, %18, %cst_7 {dimension_numbers = #tpu.dot_dimension_numbers<[2], [2], [1], [1], [0, 0, 0, 1, 1, 1], [0], [0]>} : vector<2x8x32xf32>, vector<2x32x32xf32>, vector<2x8x32xf32> -> vector<2x8x32xf32>
    %24 = math.exp %23 : vector<2x8x32xf32>
    %25 = vector.shape_cast %24 : vector<2x8x32xf32> to vector<16x32xf32>
    %cst_8 = arith.constant dense<0.000000e+00> : vector<16x32xf32>
    %26 = tpu.matmul %25, %1, %cst_8 {dimension_numbers = #tpu.dot_dimension_numbers<[1], [0], [0], [1], [0, 0, 1, 1], [], []>} : vector<16x32xf32>, vector<32x32xf32>, vector<16x32xf32> -> vector<16x32xf32>
    %27 = tpu.reciprocal %26 {approx = true} : vector<16x32xf32> -> vector<16x32xf32>
    %28 = arith.mulf %26, %27 : vector<16x32xf32>
    %cst_9 = arith.constant 2.000000e+00 : f32
    %29 = vector.broadcast %cst_9 : f32 to vector<16x32xf32>
    %30 = arith.subf %29, %28 : vector<16x32xf32>
    %31 = arith.mulf %27, %30 : vector<16x32xf32>
    %32 = arith.mulf %25, %31 : vector<16x32xf32>
    %33 = vector.shape_cast %32 : vector<16x32xf32> to vector<2x8x32xf32>
    %cst_10 = arith.constant dense<0.000000e+00> : vector<2x8x32xf32>
    %34 = tpu.matmul %33, %22, %cst_10 {dimension_numbers = #tpu.dot_dimension_numbers<[2], [1], [1], [2], [0, 0, 0, 1, 1, 2], [0], [0]>} : vector<2x8x32xf32>, vector<2x32x32xf32>, vector<2x8x32xf32> -> vector<2x8x32xf32>
    %35 = vector.shape_cast %34 : vector<2x8x32xf32> to vector<16x32xf32>
    %c104 = arith.constant 104 : index
    %c0_11 = arith.constant 0 : index
    %36 = vector.load %arg1[%c104, %c0_11] : memref<1144x128xf32, #tpu.memory_space<vmem>>, vector<32x32xf32>
    %cst_12 = arith.constant dense<0.000000e+00> : vector<16x32xf32>
    %37 = tpu.matmul %35, %36, %cst_12 {dimension_numbers = #tpu.dot_dimension_numbers<[1], [0], [0], [1], [0, 0, 1, 1], [], []>} : vector<16x32xf32>, vector<32x32xf32>, vector<16x32xf32> -> vector<16x32xf32>
    %c136 = arith.constant 136 : index
    %c0_13 = arith.constant 0 : index
    %38 = vector.load %arg1[%c136, %c0_13] : memref<1144x128xf32, #tpu.memory_space<vmem>>, vector<1x32xf32>
    %39 = vector.broadcast %38 : vector<1x32xf32> to vector<16x32xf32>
    %40 = arith.addf %37, %39 : vector<16x32xf32>
    %41 = arith.addf %3, %40 : vector<16x32xf32>
    %cst_14 = arith.constant dense<0.000000e+00> : vector<16xf32>
    %42 = vector.multi_reduction <add>, %41, %cst_14 [1] : vector<16x32xf32> to vector<16xf32>
    %43 = vector.shape_cast %42 : vector<16xf32> to vector<16x1xf32>
    %cst_15 = arith.constant 3.200000e+01 : f32
    %44 = vector.broadcast %cst_15 : f32 to vector<16x1xf32>
    %45 = arith.divf %43, %44 : vector<16x1xf32>
    %46 = vector.broadcast %45 : vector<16x1xf32> to vector<16x32xf32>
    %47 = arith.subf %41, %46 : vector<16x32xf32>
    %48 = arith.mulf %47, %47 : vector<16x32xf32>
    %cst_16 = arith.constant dense<0.000000e+00> : vector<16xf32>
    %49 = vector.multi_reduction <add>, %48, %cst_16 [1] : vector<16x32xf32> to vector<16xf32>
    %50 = vector.shape_cast %49 : vector<16xf32> to vector<16x1xf32>
    %cst_17 = arith.constant 3.200000e+01 : f32
    %51 = vector.broadcast %cst_17 : f32 to vector<16x1xf32>
    %52 = arith.divf %50, %51 : vector<16x1xf32>
    %cst_18 = arith.constant 9.99999974E-6 : f32
    %53 = vector.broadcast %cst_18 : f32 to vector<16x1xf32>
    %54 = arith.addf %52, %53 : vector<16x1xf32>
    %55 = math.rsqrt %54 : vector<16x1xf32>
    %56 = vector.broadcast %55 : vector<16x1xf32> to vector<16x32xf32>
    %57 = arith.mulf %47, %56 : vector<16x32xf32>
    %c256 = arith.constant 256 : index
    %c0_19 = arith.constant 0 : index
    %58 = vector.load %arg1[%c256, %c0_19] : memref<1144x128xf32, #tpu.memory_space<vmem>>, vector<1x32xf32>
    %59 = vector.broadcast %58 : vector<1x32xf32> to vector<16x32xf32>
    %60 = arith.mulf %57, %59 : vector<16x32xf32>
    %c264 = arith.constant 264 : index
    %c0_20 = arith.constant 0 : index
    %61 = vector.load %arg1[%c264, %c0_20] : memref<1144x128xf32, #tpu.memory_space<vmem>>, vector<1x32xf32>
    %62 = vector.broadcast %61 : vector<1x32xf32> to vector<16x32xf32>
    %63 = arith.addf %60, %62 : vector<16x32xf32>
    %c144 = arith.constant 144 : index
    %c0_21 = arith.constant 0 : index
    %64 = vector.load %arg1[%c144, %c0_21] : memref<1144x128xf32, #tpu.memory_space<vmem>>, vector<32x64xf32>
    %cst_22 = arith.constant dense<0.000000e+00> : vector<16x64xf32>
    %65 = tpu.matmul %63, %64, %cst_22 {dimension_numbers = #tpu.dot_dimension_numbers<[1], [0], [0], [1], [0, 0, 1, 1], [], []>} : vector<16x32xf32>, vector<32x64xf32>, vector<16x64xf32> -> vector<16x64xf32>
    %c176 = arith.constant 176 : index
    %c0_23 = arith.constant 0 : index
    %66 = vector.load %arg1[%c176, %c0_23] : memref<1144x128xf32, #tpu.memory_space<vmem>>, vector<1x64xf32>
    %67 = vector.broadcast %66 : vector<1x64xf32> to vector<16x64xf32>
    %68 = arith.addf %65, %67 : vector<16x64xf32>
    %cst_24 = arith.constant 0.000000e+00 : f32
    %69 = vector.broadcast %cst_24 : f32 to vector<16x64xf32>
    %70 = arith.maximumf %68, %69 : vector<16x64xf32>
    %c184 = arith.constant 184 : index
    %c0_25 = arith.constant 0 : index
    %71 = vector.load %arg1[%c184, %c0_25] : memref<1144x128xf32, #tpu.memory_space<vmem>>, vector<64x32xf32>
    %cst_26 = arith.constant dense<0.000000e+00> : vector<16x32xf32>
    %72 = tpu.matmul %70, %71, %cst_26 {dimension_numbers = #tpu.dot_dimension_numbers<[1], [0], [0], [1], [0, 0, 1, 1], [], []>} : vector<16x64xf32>, vector<64x32xf32>, vector<16x32xf32> -> vector<16x32xf32>
    %c248 = arith.constant 248 : index
    %c0_27 = arith.constant 0 : index
    %73 = vector.load %arg1[%c248, %c0_27] : memref<1144x128xf32, #tpu.memory_space<vmem>>, vector<1x32xf32>
    %74 = vector.broadcast %73 : vector<1x32xf32> to vector<16x32xf32>
    %75 = arith.addf %72, %74 : vector<16x32xf32>
    %76 = arith.addf %63, %75 : vector<16x32xf32>
    %cst_28 = arith.constant dense<0.000000e+00> : vector<16xf32>
    %77 = vector.multi_reduction <add>, %76, %cst_28 [1] : vector<16x32xf32> to vector<16xf32>
    %78 = vector.shape_cast %77 : vector<16xf32> to vector<16x1xf32>
    %cst_29 = arith.constant 3.200000e+01 : f32
    %79 = vector.broadcast %cst_29 : f32 to vector<16x1xf32>
    %80 = arith.divf %78, %79 : vector<16x1xf32>
    %81 = vector.broadcast %80 : vector<16x1xf32> to vector<16x32xf32>
    %82 = arith.subf %76, %81 : vector<16x32xf32>
    %83 = arith.mulf %82, %82 : vector<16x32xf32>
    %cst_30 = arith.constant dense<0.000000e+00> : vector<16xf32>
    %84 = vector.multi_reduction <add>, %83, %cst_30 [1] : vector<16x32xf32> to vector<16xf32>
    %85 = vector.shape_cast %84 : vector<16xf32> to vector<16x1xf32>
    %cst_31 = arith.constant 3.200000e+01 : f32
    %86 = vector.broadcast %cst_31 : f32 to vector<16x1xf32>
    %87 = arith.divf %85, %86 : vector<16x1xf32>
    %cst_32 = arith.constant 9.99999974E-6 : f32
    %88 = vector.broadcast %cst_32 : f32 to vector<16x1xf32>
    %89 = arith.addf %87, %88 : vector<16x1xf32>
    %90 = math.rsqrt %89 : vector<16x1xf32>
    %91 = vector.broadcast %90 : vector<16x1xf32> to vector<16x32xf32>
    %92 = arith.mulf %82, %91 : vector<16x32xf32>
    %c272 = arith.constant 272 : index
    %c0_33 = arith.constant 0 : index
    %93 = vector.load %arg1[%c272, %c0_33] : memref<1144x128xf32, #tpu.memory_space<vmem>>, vector<1x32xf32>
    %94 = vector.broadcast %93 : vector<1x32xf32> to vector<16x32xf32>
    %95 = arith.mulf %92, %94 : vector<16x32xf32>
    %c280 = arith.constant 280 : index
    %c0_34 = arith.constant 0 : index
    %96 = vector.load %arg1[%c280, %c0_34] : memref<1144x128xf32, #tpu.memory_space<vmem>>, vector<1x32xf32>
    %97 = vector.broadcast %96 : vector<1x32xf32> to vector<16x32xf32>
    %98 = arith.addf %95, %97 : vector<16x32xf32>
    %c288 = arith.constant 288 : index
    %c0_35 = arith.constant 0 : index
    %99 = vector.load %arg1[%c288, %c0_35] : memref<1144x128xf32, #tpu.memory_space<vmem>>, vector<32x96xf32>
    %cst_36 = arith.constant dense<0.000000e+00> : vector<16x96xf32>
    %100 = tpu.matmul %98, %99, %cst_36 {dimension_numbers = #tpu.dot_dimension_numbers<[1], [0], [0], [1], [0, 0, 1, 1], [], []>} : vector<16x32xf32>, vector<32x96xf32>, vector<16x96xf32> -> vector<16x96xf32>
    %c320 = arith.constant 320 : index
    %c0_37 = arith.constant 0 : index
    %101 = vector.load %arg1[%c320, %c0_37] : memref<1144x128xf32, #tpu.memory_space<vmem>>, vector<1x96xf32>
    %102 = vector.broadcast %101 : vector<1x96xf32> to vector<16x96xf32>
    %103 = arith.addf %100, %102 : vector<16x96xf32>
    %104 = vector.extract_strided_slice %103 {offsets = [0, 0], sizes = [16, 32], strides = [1, 1]} : vector<16x96xf32> to vector<16x32xf32>
    %105 = vector.shape_cast %104 : vector<16x32xf32> to vector<2x8x32xf32>
    %106 = vector.extract_strided_slice %103 {offsets = [0, 32], sizes = [16, 32], strides = [1, 1]} : vector<16x96xf32> to vector<16x32xf32>
    %107 = vector.shape_cast %106 : vector<16x32xf32> to vector<2x8x32xf32>
    %108 = vector.extract_strided_slice %103 {offsets = [0, 64], sizes = [16, 32], strides = [1, 1]} : vector<16x96xf32> to vector<16x32xf32>
    %109 = vector.shape_cast %108 : vector<16x32xf32> to vector<2x8x32xf32>
    %110 = tpu.concatenate %107, %107, %107, %107 in 1 : vector<2x8x32xf32>, vector<2x8x32xf32>, vector<2x8x32xf32>, vector<2x8x32xf32> -> vector<2x32x32xf32>
    %111 = vector.shape_cast %0 : vector<32x32xf32> to vector<1x32x32xf32>
    %112 = vector.broadcast %111 : vector<1x32x32xf32> to vector<2x32x32xf32>
    %113 = arith.mulf %110, %112 : vector<2x32x32xf32>
    %114 = tpu.concatenate %109, %109, %109, %109 in 1 : vector<2x8x32xf32>, vector<2x8x32xf32>, vector<2x8x32xf32>, vector<2x8x32xf32> -> vector<2x32x32xf32>
    %115 = vector.shape_cast %0 : vector<32x32xf32> to vector<1x32x32xf32>
    %116 = vector.broadcast %115 : vector<1x32x32xf32> to vector<2x32x32xf32>
    %117 = arith.mulf %114, %116 : vector<2x32x32xf32>
    %cst_38 = arith.constant dense<0.000000e+00> : vector<2x8x32xf32>
    %118 = tpu.matmul %105, %113, %cst_38 {dimension_numbers = #tpu.dot_dimension_numbers<[2], [2], [1], [1], [0, 0, 0, 1, 1, 1], [0], [0]>} : vector<2x8x32xf32>, vector<2x32x32xf32>, vector<2x8x32xf32> -> vector<2x8x32xf32>
    %119 = math.exp %118 : vector<2x8x32xf32>
    %120 = vector.shape_cast %119 : vector<2x8x32xf32> to vector<16x32xf32>
    %cst_39 = arith.constant dense<0.000000e+00> : vector<16x32xf32>
    %121 = tpu.matmul %120, %1, %cst_39 {dimension_numbers = #tpu.dot_dimension_numbers<[1], [0], [0], [1], [0, 0, 1, 1], [], []>} : vector<16x32xf32>, vector<32x32xf32>, vector<16x32xf32> -> vector<16x32xf32>
    %122 = tpu.reciprocal %121 {approx = true} : vector<16x32xf32> -> vector<16x32xf32>
    %123 = arith.mulf %121, %122 : vector<16x32xf32>
    %cst_40 = arith.constant 2.000000e+00 : f32
    %124 = vector.broadcast %cst_40 : f32 to vector<16x32xf32>
    %125 = arith.subf %124, %123 : vector<16x32xf32>
    %126 = arith.mulf %122, %125 : vector<16x32xf32>
    %127 = arith.mulf %120, %126 : vector<16x32xf32>
    %128 = vector.shape_cast %127 : vector<16x32xf32> to vector<2x8x32xf32>
    %cst_41 = arith.constant dense<0.000000e+00> : vector<2x8x32xf32>
    %129 = tpu.matmul %128, %117, %cst_41 {dimension_numbers = #tpu.dot_dimension_numbers<[2], [1], [1], [2], [0, 0, 0, 1, 1, 2], [0], [0]>} : vector<2x8x32xf32>, vector<2x32x32xf32>, vector<2x8x32xf32> -> vector<2x8x32xf32>
    %130 = vector.shape_cast %129 : vector<2x8x32xf32> to vector<16x32xf32>
    %c328 = arith.constant 328 : index
    %c0_42 = arith.constant 0 : index
    %131 = vector.load %arg1[%c328, %c0_42] : memref<1144x128xf32, #tpu.memory_space<vmem>>, vector<32x32xf32>
    %cst_43 = arith.constant dense<0.000000e+00> : vector<16x32xf32>
    %132 = tpu.matmul %130, %131, %cst_43 {dimension_numbers = #tpu.dot_dimension_numbers<[1], [0], [0], [1], [0, 0, 1, 1], [], []>} : vector<16x32xf32>, vector<32x32xf32>, vector<16x32xf32> -> vector<16x32xf32>
    %c360 = arith.constant 360 : index
    %c0_44 = arith.constant 0 : index
    %133 = vector.load %arg1[%c360, %c0_44] : memref<1144x128xf32, #tpu.memory_space<vmem>>, vector<1x32xf32>
    %134 = vector.broadcast %133 : vector<1x32xf32> to vector<16x32xf32>
    %135 = arith.addf %132, %134 : vector<16x32xf32>
    %136 = arith.addf %98, %135 : vector<16x32xf32>
    %cst_45 = arith.constant dense<0.000000e+00> : vector<16xf32>
    %137 = vector.multi_reduction <add>, %136, %cst_45 [1] : vector<16x32xf32> to vector<16xf32>
    %138 = vector.shape_cast %137 : vector<16xf32> to vector<16x1xf32>
    %cst_46 = arith.constant 3.200000e+01 : f32
    %139 = vector.broadcast %cst_46 : f32 to vector<16x1xf32>
    %140 = arith.divf %138, %139 : vector<16x1xf32>
    %141 = vector.broadcast %140 : vector<16x1xf32> to vector<16x32xf32>
    %142 = arith.subf %136, %141 : vector<16x32xf32>
    %143 = arith.mulf %142, %142 : vector<16x32xf32>
    %cst_47 = arith.constant dense<0.000000e+00> : vector<16xf32>
    %144 = vector.multi_reduction <add>, %143, %cst_47 [1] : vector<16x32xf32> to vector<16xf32>
    %145 = vector.shape_cast %144 : vector<16xf32> to vector<16x1xf32>
    %cst_48 = arith.constant 3.200000e+01 : f32
    %146 = vector.broadcast %cst_48 : f32 to vector<16x1xf32>
    %147 = arith.divf %145, %146 : vector<16x1xf32>
    %cst_49 = arith.constant 9.99999974E-6 : f32
    %148 = vector.broadcast %cst_49 : f32 to vector<16x1xf32>
    %149 = arith.addf %147, %148 : vector<16x1xf32>
    %150 = math.rsqrt %149 : vector<16x1xf32>
    %151 = vector.broadcast %150 : vector<16x1xf32> to vector<16x32xf32>
    %152 = arith.mulf %142, %151 : vector<16x32xf32>
    %c480 = arith.constant 480 : index
    %c0_50 = arith.constant 0 : index
    %153 = vector.load %arg1[%c480, %c0_50] : memref<1144x128xf32, #tpu.memory_space<vmem>>, vector<1x32xf32>
    %154 = vector.broadcast %153 : vector<1x32xf32> to vector<16x32xf32>
    %155 = arith.mulf %152, %154 : vector<16x32xf32>
    %c488 = arith.constant 488 : index
    %c0_51 = arith.constant 0 : index
    %156 = vector.load %arg1[%c488, %c0_51] : memref<1144x128xf32, #tpu.memory_space<vmem>>, vector<1x32xf32>
    %157 = vector.broadcast %156 : vector<1x32xf32> to vector<16x32xf32>
    %158 = arith.addf %155, %157 : vector<16x32xf32>
    %c368 = arith.constant 368 : index
    %c0_52 = arith.constant 0 : index
    %159 = vector.load %arg1[%c368, %c0_52] : memref<1144x128xf32, #tpu.memory_space<vmem>>, vector<32x64xf32>
    %cst_53 = arith.constant dense<0.000000e+00> : vector<16x64xf32>
    %160 = tpu.matmul %158, %159, %cst_53 {dimension_numbers = #tpu.dot_dimension_numbers<[1], [0], [0], [1], [0, 0, 1, 1], [], []>} : vector<16x32xf32>, vector<32x64xf32>, vector<16x64xf32> -> vector<16x64xf32>
    %c400 = arith.constant 400 : index
    %c0_54 = arith.constant 0 : index
    %161 = vector.load %arg1[%c400, %c0_54] : memref<1144x128xf32, #tpu.memory_space<vmem>>, vector<1x64xf32>
    %162 = vector.broadcast %161 : vector<1x64xf32> to vector<16x64xf32>
    %163 = arith.addf %160, %162 : vector<16x64xf32>
    %cst_55 = arith.constant 0.000000e+00 : f32
    %164 = vector.broadcast %cst_55 : f32 to vector<16x64xf32>
    %165 = arith.maximumf %163, %164 : vector<16x64xf32>
    %c408 = arith.constant 408 : index
    %c0_56 = arith.constant 0 : index
    %166 = vector.load %arg1[%c408, %c0_56] : memref<1144x128xf32, #tpu.memory_space<vmem>>, vector<64x32xf32>
    %cst_57 = arith.constant dense<0.000000e+00> : vector<16x32xf32>
    %167 = tpu.matmul %165, %166, %cst_57 {dimension_numbers = #tpu.dot_dimension_numbers<[1], [0], [0], [1], [0, 0, 1, 1], [], []>} : vector<16x64xf32>, vector<64x32xf32>, vector<16x32xf32> -> vector<16x32xf32>
    %c472 = arith.constant 472 : index
    %c0_58 = arith.constant 0 : index
    %168 = vector.load %arg1[%c472, %c0_58] : memref<1144x128xf32, #tpu.memory_space<vmem>>, vector<1x32xf32>
    %169 = vector.broadcast %168 : vector<1x32xf32> to vector<16x32xf32>
    %170 = arith.addf %167, %169 : vector<16x32xf32>
    %171 = arith.addf %158, %170 : vector<16x32xf32>
    %cst_59 = arith.constant dense<0.000000e+00> : vector<16xf32>
    %172 = vector.multi_reduction <add>, %171, %cst_59 [1] : vector<16x32xf32> to vector<16xf32>
    %173 = vector.shape_cast %172 : vector<16xf32> to vector<16x1xf32>
    %cst_60 = arith.constant 3.200000e+01 : f32
    %174 = vector.broadcast %cst_60 : f32 to vector<16x1xf32>
    %175 = arith.divf %173, %174 : vector<16x1xf32>
    %176 = vector.broadcast %175 : vector<16x1xf32> to vector<16x32xf32>
    %177 = arith.subf %171, %176 : vector<16x32xf32>
    %178 = arith.mulf %177, %177 : vector<16x32xf32>
    %cst_61 = arith.constant dense<0.000000e+00> : vector<16xf32>
    %179 = vector.multi_reduction <add>, %178, %cst_61 [1] : vector<16x32xf32> to vector<16xf32>
    %180 = vector.shape_cast %179 : vector<16xf32> to vector<16x1xf32>
    %cst_62 = arith.constant 3.200000e+01 : f32
    %181 = vector.broadcast %cst_62 : f32 to vector<16x1xf32>
    %182 = arith.divf %180, %181 : vector<16x1xf32>
    %cst_63 = arith.constant 9.99999974E-6 : f32
    %183 = vector.broadcast %cst_63 : f32 to vector<16x1xf32>
    %184 = arith.addf %182, %183 : vector<16x1xf32>
    %185 = math.rsqrt %184 : vector<16x1xf32>
    %186 = vector.broadcast %185 : vector<16x1xf32> to vector<16x32xf32>
    %187 = arith.mulf %177, %186 : vector<16x32xf32>
    %c496 = arith.constant 496 : index
    %c0_64 = arith.constant 0 : index
    %188 = vector.load %arg1[%c496, %c0_64] : memref<1144x128xf32, #tpu.memory_space<vmem>>, vector<1x32xf32>
    %189 = vector.broadcast %188 : vector<1x32xf32> to vector<16x32xf32>
    %190 = arith.mulf %187, %189 : vector<16x32xf32>
    %c504 = arith.constant 504 : index
    %c0_65 = arith.constant 0 : index
    %191 = vector.load %arg1[%c504, %c0_65] : memref<1144x128xf32, #tpu.memory_space<vmem>>, vector<1x32xf32>
    %192 = vector.broadcast %191 : vector<1x32xf32> to vector<16x32xf32>
    %193 = arith.addf %190, %192 : vector<16x32xf32>
    %cst_66 = arith.constant dense<0.000000e+00> : vector<16xf32>
    %194 = vector.multi_reduction <add>, %193, %cst_66 [1] : vector<16x32xf32> to vector<16xf32>
    %195 = vector.shape_cast %194 : vector<16xf32> to vector<16x1xf32>
    %cst_67 = arith.constant 3.200000e+01 : f32
    %196 = vector.broadcast %cst_67 : f32 to vector<16x1xf32>
    %197 = arith.divf %195, %196 : vector<16x1xf32>
    %198 = vector.broadcast %197 : vector<16x1xf32> to vector<16x32xf32>
    %199 = arith.subf %193, %198 : vector<16x32xf32>
    %200 = arith.mulf %199, %199 : vector<16x32xf32>
    %cst_68 = arith.constant dense<0.000000e+00> : vector<16xf32>
    %201 = vector.multi_reduction <add>, %200, %cst_68 [1] : vector<16x32xf32> to vector<16xf32>
    %202 = vector.shape_cast %201 : vector<16xf32> to vector<16x1xf32>
    %cst_69 = arith.constant 3.200000e+01 : f32
    %203 = vector.broadcast %cst_69 : f32 to vector<16x1xf32>
    %204 = arith.divf %202, %203 : vector<16x1xf32>
    %cst_70 = arith.constant 9.99999974E-6 : f32
    %205 = vector.broadcast %cst_70 : f32 to vector<16x1xf32>
    %206 = arith.addf %204, %205 : vector<16x1xf32>
    %207 = math.rsqrt %206 : vector<16x1xf32>
    %208 = vector.broadcast %207 : vector<16x1xf32> to vector<16x32xf32>
    %209 = arith.mulf %199, %208 : vector<16x32xf32>
    %c512 = arith.constant 512 : index
    %c0_71 = arith.constant 0 : index
    %210 = vector.load %arg1[%c512, %c0_71] : memref<1144x128xf32, #tpu.memory_space<vmem>>, vector<1x32xf32>
    %211 = vector.broadcast %210 : vector<1x32xf32> to vector<16x32xf32>
    %212 = arith.mulf %209, %211 : vector<16x32xf32>
    %c520 = arith.constant 520 : index
    %c0_72 = arith.constant 0 : index
    %213 = vector.load %arg1[%c520, %c0_72] : memref<1144x128xf32, #tpu.memory_space<vmem>>, vector<1x32xf32>
    %214 = vector.broadcast %213 : vector<1x32xf32> to vector<16x32xf32>
    %215 = arith.addf %212, %214 : vector<16x32xf32>
    %c528 = arith.constant 528 : index
    %c0_73 = arith.constant 0 : index
    %216 = vector.load %arg1[%c528, %c0_73] : memref<1144x128xf32, #tpu.memory_space<vmem>>, vector<32x128xf32>
    %cst_74 = arith.constant dense<0.000000e+00> : vector<16x128xf32>
    %217 = tpu.matmul %215, %216, %cst_74 {dimension_numbers = #tpu.dot_dimension_numbers<[1], [0], [0], [1], [0, 0, 1, 1], [], []>} : vector<16x32xf32>, vector<32x128xf32>, vector<16x128xf32> -> vector<16x128xf32>
    %c560 = arith.constant 560 : index
    %c0_75 = arith.constant 0 : index
    %218 = vector.load %arg1[%c560, %c0_75] : memref<1144x128xf32, #tpu.memory_space<vmem>>, vector<1x128xf32>
    %219 = vector.broadcast %218 : vector<1x128xf32> to vector<16x128xf32>
    %220 = arith.addf %217, %219 : vector<16x128xf32>
    %221 = vector.extract_strided_slice %2 {offsets = [0, 7, 0], sizes = [2, 1, 32], strides = [1, 1, 1]} : vector<2x8x32xf32> to vector<2x1x32xf32>
    %222 = vector.shape_cast %221 : vector<2x1x32xf32> to vector<2x32xf32>
    %c568 = arith.constant 568 : index
    %c0_76 = arith.constant 0 : index
    %223 = vector.load %arg1[%c568, %c0_76] : memref<1144x128xf32, #tpu.memory_space<vmem>>, vector<32x32xf32>
    %cst_77 = arith.constant dense<0.000000e+00> : vector<2x32xf32>
    %224 = tpu.matmul %222, %223, %cst_77 {dimension_numbers = #tpu.dot_dimension_numbers<[1], [0], [0], [1], [0, 0, 1, 1], [], []>} : vector<2x32xf32>, vector<32x32xf32>, vector<2x32xf32> -> vector<2x32xf32>
    %c600 = arith.constant 600 : index
    %c0_78 = arith.constant 0 : index
    %225 = vector.load %arg1[%c600, %c0_78] : memref<1144x128xf32, #tpu.memory_space<vmem>>, vector<1x32xf32>
    %226 = vector.broadcast %225 : vector<1x32xf32> to vector<2x32xf32>
    %227 = arith.addf %224, %226 : vector<2x32xf32>
    %228 = arith.addf %222, %227 : vector<2x32xf32>
    %cst_79 = arith.constant dense<0.000000e+00> : vector<2xf32>
    %229 = vector.multi_reduction <add>, %228, %cst_79 [1] : vector<2x32xf32> to vector<2xf32>
    %230 = vector.shape_cast %229 : vector<2xf32> to vector<2x1xf32>
    %cst_80 = arith.constant 3.200000e+01 : f32
    %231 = vector.broadcast %cst_80 : f32 to vector<2x1xf32>
    %232 = arith.divf %230, %231 : vector<2x1xf32>
    %233 = vector.broadcast %232 : vector<2x1xf32> to vector<2x32xf32>
    %234 = arith.subf %228, %233 : vector<2x32xf32>
    %235 = arith.mulf %234, %234 : vector<2x32xf32>
    %cst_81 = arith.constant dense<0.000000e+00> : vector<2xf32>
    %236 = vector.multi_reduction <add>, %235, %cst_81 [1] : vector<2x32xf32> to vector<2xf32>
    %237 = vector.shape_cast %236 : vector<2xf32> to vector<2x1xf32>
    %cst_82 = arith.constant 3.200000e+01 : f32
    %238 = vector.broadcast %cst_82 : f32 to vector<2x1xf32>
    %239 = arith.divf %237, %238 : vector<2x1xf32>
    %cst_83 = arith.constant 9.99999974E-6 : f32
    %240 = vector.broadcast %cst_83 : f32 to vector<2x1xf32>
    %241 = arith.addf %239, %240 : vector<2x1xf32>
    %242 = math.rsqrt %241 : vector<2x1xf32>
    %243 = vector.broadcast %242 : vector<2x1xf32> to vector<2x32xf32>
    %244 = arith.mulf %234, %243 : vector<2x32xf32>
    %c800 = arith.constant 800 : index
    %c0_84 = arith.constant 0 : index
    %245 = vector.load %arg1[%c800, %c0_84] : memref<1144x128xf32, #tpu.memory_space<vmem>>, vector<1x32xf32>
    %246 = vector.broadcast %245 : vector<1x32xf32> to vector<2x32xf32>
    %247 = arith.mulf %244, %246 : vector<2x32xf32>
    %c808 = arith.constant 808 : index
    %c0_85 = arith.constant 0 : index
    %248 = vector.load %arg1[%c808, %c0_85] : memref<1144x128xf32, #tpu.memory_space<vmem>>, vector<1x32xf32>
    %249 = vector.broadcast %248 : vector<1x32xf32> to vector<2x32xf32>
    %250 = arith.addf %247, %249 : vector<2x32xf32>
    %c608 = arith.constant 608 : index
    %c0_86 = arith.constant 0 : index
    %251 = vector.load %arg1[%c608, %c0_86] : memref<1144x128xf32, #tpu.memory_space<vmem>>, vector<32x32xf32>
    %cst_87 = arith.constant dense<0.000000e+00> : vector<2x32xf32>
    %252 = tpu.matmul %250, %251, %cst_87 {dimension_numbers = #tpu.dot_dimension_numbers<[1], [0], [0], [1], [0, 0, 1, 1], [], []>} : vector<2x32xf32>, vector<32x32xf32>, vector<2x32xf32> -> vector<2x32xf32>
    %c640 = arith.constant 640 : index
    %c0_88 = arith.constant 0 : index
    %253 = vector.load %arg1[%c640, %c0_88] : memref<1144x128xf32, #tpu.memory_space<vmem>>, vector<1x32xf32>
    %254 = vector.broadcast %253 : vector<1x32xf32> to vector<2x32xf32>
    %255 = arith.addf %252, %254 : vector<2x32xf32>
    %256 = vector.extract_strided_slice %220 {offsets = [0, 0], sizes = [16, 32], strides = [1, 1]} : vector<16x128xf32> to vector<16x32xf32>
    %257 = vector.shape_cast %256 : vector<16x32xf32> to vector<2x8x32xf32>
    %258 = vector.extract_strided_slice %220 {offsets = [0, 32], sizes = [16, 32], strides = [1, 1]} : vector<16x128xf32> to vector<16x32xf32>
    %259 = vector.shape_cast %258 : vector<16x32xf32> to vector<2x8x32xf32>
    %260 = vector.shape_cast %255 : vector<2x32xf32> to vector<2x1x32xf32>
    %261 = tpu.concatenate %257, %257, %257, %257 in 1 : vector<2x8x32xf32>, vector<2x8x32xf32>, vector<2x8x32xf32>, vector<2x8x32xf32> -> vector<2x32x32xf32>
    %262 = vector.shape_cast %0 : vector<32x32xf32> to vector<1x32x32xf32>
    %263 = vector.broadcast %262 : vector<1x32x32xf32> to vector<2x32x32xf32>
    %264 = arith.mulf %261, %263 : vector<2x32x32xf32>
    %265 = tpu.concatenate %259, %259, %259, %259 in 1 : vector<2x8x32xf32>, vector<2x8x32xf32>, vector<2x8x32xf32>, vector<2x8x32xf32> -> vector<2x32x32xf32>
    %266 = vector.shape_cast %0 : vector<32x32xf32> to vector<1x32x32xf32>
    %267 = vector.broadcast %266 : vector<1x32x32xf32> to vector<2x32x32xf32>
    %268 = arith.mulf %265, %267 : vector<2x32x32xf32>
    %cst_89 = arith.constant dense<0.000000e+00> : vector<2x1x32xf32>
    %269 = tpu.matmul %260, %264, %cst_89 {dimension_numbers = #tpu.dot_dimension_numbers<[2], [2], [1], [1], [0, 0, 0, 1, 1, 1], [0], [0]>} : vector<2x1x32xf32>, vector<2x32x32xf32>, vector<2x1x32xf32> -> vector<2x1x32xf32>
    %270 = math.exp %269 : vector<2x1x32xf32>
    %271 = vector.shape_cast %270 : vector<2x1x32xf32> to vector<2x32xf32>
    %cst_90 = arith.constant dense<0.000000e+00> : vector<2x32xf32>
    %272 = tpu.matmul %271, %1, %cst_90 {dimension_numbers = #tpu.dot_dimension_numbers<[1], [0], [0], [1], [0, 0, 1, 1], [], []>} : vector<2x32xf32>, vector<32x32xf32>, vector<2x32xf32> -> vector<2x32xf32>
    %273 = tpu.reciprocal %272 {approx = true} : vector<2x32xf32> -> vector<2x32xf32>
    %274 = arith.mulf %272, %273 : vector<2x32xf32>
    %cst_91 = arith.constant 2.000000e+00 : f32
    %275 = vector.broadcast %cst_91 : f32 to vector<2x32xf32>
    %276 = arith.subf %275, %274 : vector<2x32xf32>
    %277 = arith.mulf %273, %276 : vector<2x32xf32>
    %278 = arith.mulf %271, %277 : vector<2x32xf32>
    %279 = vector.shape_cast %278 : vector<2x32xf32> to vector<2x1x32xf32>
    %cst_92 = arith.constant dense<0.000000e+00> : vector<2x1x32xf32>
    %280 = tpu.matmul %279, %268, %cst_92 {dimension_numbers = #tpu.dot_dimension_numbers<[2], [1], [1], [2], [0, 0, 0, 1, 1, 2], [0], [0]>} : vector<2x1x32xf32>, vector<2x32x32xf32>, vector<2x1x32xf32> -> vector<2x1x32xf32>
    %281 = vector.shape_cast %280 : vector<2x1x32xf32> to vector<2x32xf32>
    %c648 = arith.constant 648 : index
    %c0_93 = arith.constant 0 : index
    %282 = vector.load %arg1[%c648, %c0_93] : memref<1144x128xf32, #tpu.memory_space<vmem>>, vector<32x32xf32>
    %cst_94 = arith.constant dense<0.000000e+00> : vector<2x32xf32>
    %283 = tpu.matmul %281, %282, %cst_94 {dimension_numbers = #tpu.dot_dimension_numbers<[1], [0], [0], [1], [0, 0, 1, 1], [], []>} : vector<2x32xf32>, vector<32x32xf32>, vector<2x32xf32> -> vector<2x32xf32>
    %c680 = arith.constant 680 : index
    %c0_95 = arith.constant 0 : index
    %284 = vector.load %arg1[%c680, %c0_95] : memref<1144x128xf32, #tpu.memory_space<vmem>>, vector<1x32xf32>
    %285 = vector.broadcast %284 : vector<1x32xf32> to vector<2x32xf32>
    %286 = arith.addf %283, %285 : vector<2x32xf32>
    %287 = arith.addf %250, %286 : vector<2x32xf32>
    %cst_96 = arith.constant dense<0.000000e+00> : vector<2xf32>
    %288 = vector.multi_reduction <add>, %287, %cst_96 [1] : vector<2x32xf32> to vector<2xf32>
    %289 = vector.shape_cast %288 : vector<2xf32> to vector<2x1xf32>
    %cst_97 = arith.constant 3.200000e+01 : f32
    %290 = vector.broadcast %cst_97 : f32 to vector<2x1xf32>
    %291 = arith.divf %289, %290 : vector<2x1xf32>
    %292 = vector.broadcast %291 : vector<2x1xf32> to vector<2x32xf32>
    %293 = arith.subf %287, %292 : vector<2x32xf32>
    %294 = arith.mulf %293, %293 : vector<2x32xf32>
    %cst_98 = arith.constant dense<0.000000e+00> : vector<2xf32>
    %295 = vector.multi_reduction <add>, %294, %cst_98 [1] : vector<2x32xf32> to vector<2xf32>
    %296 = vector.shape_cast %295 : vector<2xf32> to vector<2x1xf32>
    %cst_99 = arith.constant 3.200000e+01 : f32
    %297 = vector.broadcast %cst_99 : f32 to vector<2x1xf32>
    %298 = arith.divf %296, %297 : vector<2x1xf32>
    %cst_100 = arith.constant 9.99999974E-6 : f32
    %299 = vector.broadcast %cst_100 : f32 to vector<2x1xf32>
    %300 = arith.addf %298, %299 : vector<2x1xf32>
    %301 = math.rsqrt %300 : vector<2x1xf32>
    %302 = vector.broadcast %301 : vector<2x1xf32> to vector<2x32xf32>
    %303 = arith.mulf %293, %302 : vector<2x32xf32>
    %c816 = arith.constant 816 : index
    %c0_101 = arith.constant 0 : index
    %304 = vector.load %arg1[%c816, %c0_101] : memref<1144x128xf32, #tpu.memory_space<vmem>>, vector<1x32xf32>
    %305 = vector.broadcast %304 : vector<1x32xf32> to vector<2x32xf32>
    %306 = arith.mulf %303, %305 : vector<2x32xf32>
    %c824 = arith.constant 824 : index
    %c0_102 = arith.constant 0 : index
    %307 = vector.load %arg1[%c824, %c0_102] : memref<1144x128xf32, #tpu.memory_space<vmem>>, vector<1x32xf32>
    %308 = vector.broadcast %307 : vector<1x32xf32> to vector<2x32xf32>
    %309 = arith.addf %306, %308 : vector<2x32xf32>
    %c688 = arith.constant 688 : index
    %c0_103 = arith.constant 0 : index
    %310 = vector.load %arg1[%c688, %c0_103] : memref<1144x128xf32, #tpu.memory_space<vmem>>, vector<32x64xf32>
    %cst_104 = arith.constant dense<0.000000e+00> : vector<2x64xf32>
    %311 = tpu.matmul %309, %310, %cst_104 {dimension_numbers = #tpu.dot_dimension_numbers<[1], [0], [0], [1], [0, 0, 1, 1], [], []>} : vector<2x32xf32>, vector<32x64xf32>, vector<2x64xf32> -> vector<2x64xf32>
    %c720 = arith.constant 720 : index
    %c0_105 = arith.constant 0 : index
    %312 = vector.load %arg1[%c720, %c0_105] : memref<1144x128xf32, #tpu.memory_space<vmem>>, vector<1x64xf32>
    %313 = vector.broadcast %312 : vector<1x64xf32> to vector<2x64xf32>
    %314 = arith.addf %311, %313 : vector<2x64xf32>
    %cst_106 = arith.constant 0.000000e+00 : f32
    %315 = vector.broadcast %cst_106 : f32 to vector<2x64xf32>
    %316 = arith.maximumf %314, %315 : vector<2x64xf32>
    %c728 = arith.constant 728 : index
    %c0_107 = arith.constant 0 : index
    %317 = vector.load %arg1[%c728, %c0_107] : memref<1144x128xf32, #tpu.memory_space<vmem>>, vector<64x32xf32>
    %cst_108 = arith.constant dense<0.000000e+00> : vector<2x32xf32>
    %318 = tpu.matmul %316, %317, %cst_108 {dimension_numbers = #tpu.dot_dimension_numbers<[1], [0], [0], [1], [0, 0, 1, 1], [], []>} : vector<2x64xf32>, vector<64x32xf32>, vector<2x32xf32> -> vector<2x32xf32>
    %c792 = arith.constant 792 : index
    %c0_109 = arith.constant 0 : index
    %319 = vector.load %arg1[%c792, %c0_109] : memref<1144x128xf32, #tpu.memory_space<vmem>>, vector<1x32xf32>
    %320 = vector.broadcast %319 : vector<1x32xf32> to vector<2x32xf32>
    %321 = arith.addf %318, %320 : vector<2x32xf32>
    %322 = arith.addf %309, %321 : vector<2x32xf32>
    %cst_110 = arith.constant dense<0.000000e+00> : vector<2xf32>
    %323 = vector.multi_reduction <add>, %322, %cst_110 [1] : vector<2x32xf32> to vector<2xf32>
    %324 = vector.shape_cast %323 : vector<2xf32> to vector<2x1xf32>
    %cst_111 = arith.constant 3.200000e+01 : f32
    %325 = vector.broadcast %cst_111 : f32 to vector<2x1xf32>
    %326 = arith.divf %324, %325 : vector<2x1xf32>
    %327 = vector.broadcast %326 : vector<2x1xf32> to vector<2x32xf32>
    %328 = arith.subf %322, %327 : vector<2x32xf32>
    %329 = arith.mulf %328, %328 : vector<2x32xf32>
    %cst_112 = arith.constant dense<0.000000e+00> : vector<2xf32>
    %330 = vector.multi_reduction <add>, %329, %cst_112 [1] : vector<2x32xf32> to vector<2xf32>
    %331 = vector.shape_cast %330 : vector<2xf32> to vector<2x1xf32>
    %cst_113 = arith.constant 3.200000e+01 : f32
    %332 = vector.broadcast %cst_113 : f32 to vector<2x1xf32>
    %333 = arith.divf %331, %332 : vector<2x1xf32>
    %cst_114 = arith.constant 9.99999974E-6 : f32
    %334 = vector.broadcast %cst_114 : f32 to vector<2x1xf32>
    %335 = arith.addf %333, %334 : vector<2x1xf32>
    %336 = math.rsqrt %335 : vector<2x1xf32>
    %337 = vector.broadcast %336 : vector<2x1xf32> to vector<2x32xf32>
    %338 = arith.mulf %328, %337 : vector<2x32xf32>
    %c832 = arith.constant 832 : index
    %c0_115 = arith.constant 0 : index
    %339 = vector.load %arg1[%c832, %c0_115] : memref<1144x128xf32, #tpu.memory_space<vmem>>, vector<1x32xf32>
    %340 = vector.broadcast %339 : vector<1x32xf32> to vector<2x32xf32>
    %341 = arith.mulf %338, %340 : vector<2x32xf32>
    %c840 = arith.constant 840 : index
    %c0_116 = arith.constant 0 : index
    %342 = vector.load %arg1[%c840, %c0_116] : memref<1144x128xf32, #tpu.memory_space<vmem>>, vector<1x32xf32>
    %343 = vector.broadcast %342 : vector<1x32xf32> to vector<2x32xf32>
    %344 = arith.addf %341, %343 : vector<2x32xf32>
    %c848 = arith.constant 848 : index
    %c0_117 = arith.constant 0 : index
    %345 = vector.load %arg1[%c848, %c0_117] : memref<1144x128xf32, #tpu.memory_space<vmem>>, vector<32x32xf32>
    %cst_118 = arith.constant dense<0.000000e+00> : vector<2x32xf32>
    %346 = tpu.matmul %344, %345, %cst_118 {dimension_numbers = #tpu.dot_dimension_numbers<[1], [0], [0], [1], [0, 0, 1, 1], [], []>} : vector<2x32xf32>, vector<32x32xf32>, vector<2x32xf32> -> vector<2x32xf32>
    %c880 = arith.constant 880 : index
    %c0_119 = arith.constant 0 : index
    %347 = vector.load %arg1[%c880, %c0_119] : memref<1144x128xf32, #tpu.memory_space<vmem>>, vector<1x32xf32>
    %348 = vector.broadcast %347 : vector<1x32xf32> to vector<2x32xf32>
    %349 = arith.addf %346, %348 : vector<2x32xf32>
    %350 = arith.addf %344, %349 : vector<2x32xf32>
    %cst_120 = arith.constant dense<0.000000e+00> : vector<2xf32>
    %351 = vector.multi_reduction <add>, %350, %cst_120 [1] : vector<2x32xf32> to vector<2xf32>
    %352 = vector.shape_cast %351 : vector<2xf32> to vector<2x1xf32>
    %cst_121 = arith.constant 3.200000e+01 : f32
    %353 = vector.broadcast %cst_121 : f32 to vector<2x1xf32>
    %354 = arith.divf %352, %353 : vector<2x1xf32>
    %355 = vector.broadcast %354 : vector<2x1xf32> to vector<2x32xf32>
    %356 = arith.subf %350, %355 : vector<2x32xf32>
    %357 = arith.mulf %356, %356 : vector<2x32xf32>
    %cst_122 = arith.constant dense<0.000000e+00> : vector<2xf32>
    %358 = vector.multi_reduction <add>, %357, %cst_122 [1] : vector<2x32xf32> to vector<2xf32>
    %359 = vector.shape_cast %358 : vector<2xf32> to vector<2x1xf32>
    %cst_123 = arith.constant 3.200000e+01 : f32
    %360 = vector.broadcast %cst_123 : f32 to vector<2x1xf32>
    %361 = arith.divf %359, %360 : vector<2x1xf32>
    %cst_124 = arith.constant 9.99999974E-6 : f32
    %362 = vector.broadcast %cst_124 : f32 to vector<2x1xf32>
    %363 = arith.addf %361, %362 : vector<2x1xf32>
    %364 = math.rsqrt %363 : vector<2x1xf32>
    %365 = vector.broadcast %364 : vector<2x1xf32> to vector<2x32xf32>
    %366 = arith.mulf %356, %365 : vector<2x32xf32>
    %c1080 = arith.constant 1080 : index
    %c0_125 = arith.constant 0 : index
    %367 = vector.load %arg1[%c1080, %c0_125] : memref<1144x128xf32, #tpu.memory_space<vmem>>, vector<1x32xf32>
    %368 = vector.broadcast %367 : vector<1x32xf32> to vector<2x32xf32>
    %369 = arith.mulf %366, %368 : vector<2x32xf32>
    %c1088 = arith.constant 1088 : index
    %c0_126 = arith.constant 0 : index
    %370 = vector.load %arg1[%c1088, %c0_126] : memref<1144x128xf32, #tpu.memory_space<vmem>>, vector<1x32xf32>
    %371 = vector.broadcast %370 : vector<1x32xf32> to vector<2x32xf32>
    %372 = arith.addf %369, %371 : vector<2x32xf32>
    %c888 = arith.constant 888 : index
    %c0_127 = arith.constant 0 : index
    %373 = vector.load %arg1[%c888, %c0_127] : memref<1144x128xf32, #tpu.memory_space<vmem>>, vector<32x32xf32>
    %cst_128 = arith.constant dense<0.000000e+00> : vector<2x32xf32>
    %374 = tpu.matmul %372, %373, %cst_128 {dimension_numbers = #tpu.dot_dimension_numbers<[1], [0], [0], [1], [0, 0, 1, 1], [], []>} : vector<2x32xf32>, vector<32x32xf32>, vector<2x32xf32> -> vector<2x32xf32>
    %c920 = arith.constant 920 : index
    %c0_129 = arith.constant 0 : index
    %375 = vector.load %arg1[%c920, %c0_129] : memref<1144x128xf32, #tpu.memory_space<vmem>>, vector<1x32xf32>
    %376 = vector.broadcast %375 : vector<1x32xf32> to vector<2x32xf32>
    %377 = arith.addf %374, %376 : vector<2x32xf32>
    %378 = vector.extract_strided_slice %220 {offsets = [0, 64], sizes = [16, 32], strides = [1, 1]} : vector<16x128xf32> to vector<16x32xf32>
    %379 = vector.shape_cast %378 : vector<16x32xf32> to vector<2x8x32xf32>
    %380 = vector.extract_strided_slice %220 {offsets = [0, 96], sizes = [16, 32], strides = [1, 1]} : vector<16x128xf32> to vector<16x32xf32>
    %381 = vector.shape_cast %380 : vector<16x32xf32> to vector<2x8x32xf32>
    %382 = vector.shape_cast %377 : vector<2x32xf32> to vector<2x1x32xf32>
    %383 = tpu.concatenate %379, %379, %379, %379 in 1 : vector<2x8x32xf32>, vector<2x8x32xf32>, vector<2x8x32xf32>, vector<2x8x32xf32> -> vector<2x32x32xf32>
    %384 = vector.shape_cast %0 : vector<32x32xf32> to vector<1x32x32xf32>
    %385 = vector.broadcast %384 : vector<1x32x32xf32> to vector<2x32x32xf32>
    %386 = arith.mulf %383, %385 : vector<2x32x32xf32>
    %387 = tpu.concatenate %381, %381, %381, %381 in 1 : vector<2x8x32xf32>, vector<2x8x32xf32>, vector<2x8x32xf32>, vector<2x8x32xf32> -> vector<2x32x32xf32>
    %388 = vector.shape_cast %0 : vector<32x32xf32> to vector<1x32x32xf32>
    %389 = vector.broadcast %388 : vector<1x32x32xf32> to vector<2x32x32xf32>
    %390 = arith.mulf %387, %389 : vector<2x32x32xf32>
    %cst_130 = arith.constant dense<0.000000e+00> : vector<2x1x32xf32>
    %391 = tpu.matmul %382, %386, %cst_130 {dimension_numbers = #tpu.dot_dimension_numbers<[2], [2], [1], [1], [0, 0, 0, 1, 1, 1], [0], [0]>} : vector<2x1x32xf32>, vector<2x32x32xf32>, vector<2x1x32xf32> -> vector<2x1x32xf32>
    %392 = math.exp %391 : vector<2x1x32xf32>
    %393 = vector.shape_cast %392 : vector<2x1x32xf32> to vector<2x32xf32>
    %cst_131 = arith.constant dense<0.000000e+00> : vector<2x32xf32>
    %394 = tpu.matmul %393, %1, %cst_131 {dimension_numbers = #tpu.dot_dimension_numbers<[1], [0], [0], [1], [0, 0, 1, 1], [], []>} : vector<2x32xf32>, vector<32x32xf32>, vector<2x32xf32> -> vector<2x32xf32>
    %395 = tpu.reciprocal %394 {approx = true} : vector<2x32xf32> -> vector<2x32xf32>
    %396 = arith.mulf %394, %395 : vector<2x32xf32>
    %cst_132 = arith.constant 2.000000e+00 : f32
    %397 = vector.broadcast %cst_132 : f32 to vector<2x32xf32>
    %398 = arith.subf %397, %396 : vector<2x32xf32>
    %399 = arith.mulf %395, %398 : vector<2x32xf32>
    %400 = arith.mulf %393, %399 : vector<2x32xf32>
    %401 = vector.shape_cast %400 : vector<2x32xf32> to vector<2x1x32xf32>
    %cst_133 = arith.constant dense<0.000000e+00> : vector<2x1x32xf32>
    %402 = tpu.matmul %401, %390, %cst_133 {dimension_numbers = #tpu.dot_dimension_numbers<[2], [1], [1], [2], [0, 0, 0, 1, 1, 2], [0], [0]>} : vector<2x1x32xf32>, vector<2x32x32xf32>, vector<2x1x32xf32> -> vector<2x1x32xf32>
    %403 = vector.shape_cast %402 : vector<2x1x32xf32> to vector<2x32xf32>
    %c928 = arith.constant 928 : index
    %c0_134 = arith.constant 0 : index
    %404 = vector.load %arg1[%c928, %c0_134] : memref<1144x128xf32, #tpu.memory_space<vmem>>, vector<32x32xf32>
    %cst_135 = arith.constant dense<0.000000e+00> : vector<2x32xf32>
    %405 = tpu.matmul %403, %404, %cst_135 {dimension_numbers = #tpu.dot_dimension_numbers<[1], [0], [0], [1], [0, 0, 1, 1], [], []>} : vector<2x32xf32>, vector<32x32xf32>, vector<2x32xf32> -> vector<2x32xf32>
    %c960 = arith.constant 960 : index
    %c0_136 = arith.constant 0 : index
    %406 = vector.load %arg1[%c960, %c0_136] : memref<1144x128xf32, #tpu.memory_space<vmem>>, vector<1x32xf32>
    %407 = vector.broadcast %406 : vector<1x32xf32> to vector<2x32xf32>
    %408 = arith.addf %405, %407 : vector<2x32xf32>
    %409 = arith.addf %372, %408 : vector<2x32xf32>
    %cst_137 = arith.constant dense<0.000000e+00> : vector<2xf32>
    %410 = vector.multi_reduction <add>, %409, %cst_137 [1] : vector<2x32xf32> to vector<2xf32>
    %411 = vector.shape_cast %410 : vector<2xf32> to vector<2x1xf32>
    %cst_138 = arith.constant 3.200000e+01 : f32
    %412 = vector.broadcast %cst_138 : f32 to vector<2x1xf32>
    %413 = arith.divf %411, %412 : vector<2x1xf32>
    %414 = vector.broadcast %413 : vector<2x1xf32> to vector<2x32xf32>
    %415 = arith.subf %409, %414 : vector<2x32xf32>
    %416 = arith.mulf %415, %415 : vector<2x32xf32>
    %cst_139 = arith.constant dense<0.000000e+00> : vector<2xf32>
    %417 = vector.multi_reduction <add>, %416, %cst_139 [1] : vector<2x32xf32> to vector<2xf32>
    %418 = vector.shape_cast %417 : vector<2xf32> to vector<2x1xf32>
    %cst_140 = arith.constant 3.200000e+01 : f32
    %419 = vector.broadcast %cst_140 : f32 to vector<2x1xf32>
    %420 = arith.divf %418, %419 : vector<2x1xf32>
    %cst_141 = arith.constant 9.99999974E-6 : f32
    %421 = vector.broadcast %cst_141 : f32 to vector<2x1xf32>
    %422 = arith.addf %420, %421 : vector<2x1xf32>
    %423 = math.rsqrt %422 : vector<2x1xf32>
    %424 = vector.broadcast %423 : vector<2x1xf32> to vector<2x32xf32>
    %425 = arith.mulf %415, %424 : vector<2x32xf32>
    %c1096 = arith.constant 1096 : index
    %c0_142 = arith.constant 0 : index
    %426 = vector.load %arg1[%c1096, %c0_142] : memref<1144x128xf32, #tpu.memory_space<vmem>>, vector<1x32xf32>
    %427 = vector.broadcast %426 : vector<1x32xf32> to vector<2x32xf32>
    %428 = arith.mulf %425, %427 : vector<2x32xf32>
    %c1104 = arith.constant 1104 : index
    %c0_143 = arith.constant 0 : index
    %429 = vector.load %arg1[%c1104, %c0_143] : memref<1144x128xf32, #tpu.memory_space<vmem>>, vector<1x32xf32>
    %430 = vector.broadcast %429 : vector<1x32xf32> to vector<2x32xf32>
    %431 = arith.addf %428, %430 : vector<2x32xf32>
    %c968 = arith.constant 968 : index
    %c0_144 = arith.constant 0 : index
    %432 = vector.load %arg1[%c968, %c0_144] : memref<1144x128xf32, #tpu.memory_space<vmem>>, vector<32x64xf32>
    %cst_145 = arith.constant dense<0.000000e+00> : vector<2x64xf32>
    %433 = tpu.matmul %431, %432, %cst_145 {dimension_numbers = #tpu.dot_dimension_numbers<[1], [0], [0], [1], [0, 0, 1, 1], [], []>} : vector<2x32xf32>, vector<32x64xf32>, vector<2x64xf32> -> vector<2x64xf32>
    %c1000 = arith.constant 1000 : index
    %c0_146 = arith.constant 0 : index
    %434 = vector.load %arg1[%c1000, %c0_146] : memref<1144x128xf32, #tpu.memory_space<vmem>>, vector<1x64xf32>
    %435 = vector.broadcast %434 : vector<1x64xf32> to vector<2x64xf32>
    %436 = arith.addf %433, %435 : vector<2x64xf32>
    %cst_147 = arith.constant 0.000000e+00 : f32
    %437 = vector.broadcast %cst_147 : f32 to vector<2x64xf32>
    %438 = arith.maximumf %436, %437 : vector<2x64xf32>
    %c1008 = arith.constant 1008 : index
    %c0_148 = arith.constant 0 : index
    %439 = vector.load %arg1[%c1008, %c0_148] : memref<1144x128xf32, #tpu.memory_space<vmem>>, vector<64x32xf32>
    %cst_149 = arith.constant dense<0.000000e+00> : vector<2x32xf32>
    %440 = tpu.matmul %438, %439, %cst_149 {dimension_numbers = #tpu.dot_dimension_numbers<[1], [0], [0], [1], [0, 0, 1, 1], [], []>} : vector<2x64xf32>, vector<64x32xf32>, vector<2x32xf32> -> vector<2x32xf32>
    %c1072 = arith.constant 1072 : index
    %c0_150 = arith.constant 0 : index
    %441 = vector.load %arg1[%c1072, %c0_150] : memref<1144x128xf32, #tpu.memory_space<vmem>>, vector<1x32xf32>
    %442 = vector.broadcast %441 : vector<1x32xf32> to vector<2x32xf32>
    %443 = arith.addf %440, %442 : vector<2x32xf32>
    %444 = arith.addf %431, %443 : vector<2x32xf32>
    %cst_151 = arith.constant dense<0.000000e+00> : vector<2xf32>
    %445 = vector.multi_reduction <add>, %444, %cst_151 [1] : vector<2x32xf32> to vector<2xf32>
    %446 = vector.shape_cast %445 : vector<2xf32> to vector<2x1xf32>
    %cst_152 = arith.constant 3.200000e+01 : f32
    %447 = vector.broadcast %cst_152 : f32 to vector<2x1xf32>
    %448 = arith.divf %446, %447 : vector<2x1xf32>
    %449 = vector.broadcast %448 : vector<2x1xf32> to vector<2x32xf32>
    %450 = arith.subf %444, %449 : vector<2x32xf32>
    %451 = arith.mulf %450, %450 : vector<2x32xf32>
    %cst_153 = arith.constant dense<0.000000e+00> : vector<2xf32>
    %452 = vector.multi_reduction <add>, %451, %cst_153 [1] : vector<2x32xf32> to vector<2xf32>
    %453 = vector.shape_cast %452 : vector<2xf32> to vector<2x1xf32>
    %cst_154 = arith.constant 3.200000e+01 : f32
    %454 = vector.broadcast %cst_154 : f32 to vector<2x1xf32>
    %455 = arith.divf %453, %454 : vector<2x1xf32>
    %cst_155 = arith.constant 9.99999974E-6 : f32
    %456 = vector.broadcast %cst_155 : f32 to vector<2x1xf32>
    %457 = arith.addf %455, %456 : vector<2x1xf32>
    %458 = math.rsqrt %457 : vector<2x1xf32>
    %459 = vector.broadcast %458 : vector<2x1xf32> to vector<2x32xf32>
    %460 = arith.mulf %450, %459 : vector<2x32xf32>
    %c1112 = arith.constant 1112 : index
    %c0_156 = arith.constant 0 : index
    %461 = vector.load %arg1[%c1112, %c0_156] : memref<1144x128xf32, #tpu.memory_space<vmem>>, vector<1x32xf32>
    %462 = vector.broadcast %461 : vector<1x32xf32> to vector<2x32xf32>
    %463 = arith.mulf %460, %462 : vector<2x32xf32>
    %c1120 = arith.constant 1120 : index
    %c0_157 = arith.constant 0 : index
    %464 = vector.load %arg1[%c1120, %c0_157] : memref<1144x128xf32, #tpu.memory_space<vmem>>, vector<1x32xf32>
    %465 = vector.broadcast %464 : vector<1x32xf32> to vector<2x32xf32>
    %466 = arith.addf %463, %465 : vector<2x32xf32>
    %cst_158 = arith.constant dense<0.000000e+00> : vector<2xf32>
    %467 = vector.multi_reduction <add>, %466, %cst_158 [1] : vector<2x32xf32> to vector<2xf32>
    %468 = vector.shape_cast %467 : vector<2xf32> to vector<2x1xf32>
    %cst_159 = arith.constant 3.200000e+01 : f32
    %469 = vector.broadcast %cst_159 : f32 to vector<2x1xf32>
    %470 = arith.divf %468, %469 : vector<2x1xf32>
    %471 = vector.broadcast %470 : vector<2x1xf32> to vector<2x32xf32>
    %472 = arith.subf %466, %471 : vector<2x32xf32>
    %473 = arith.mulf %472, %472 : vector<2x32xf32>
    %cst_160 = arith.constant dense<0.000000e+00> : vector<2xf32>
    %474 = vector.multi_reduction <add>, %473, %cst_160 [1] : vector<2x32xf32> to vector<2xf32>
    %475 = vector.shape_cast %474 : vector<2xf32> to vector<2x1xf32>
    %cst_161 = arith.constant 3.200000e+01 : f32
    %476 = vector.broadcast %cst_161 : f32 to vector<2x1xf32>
    %477 = arith.divf %475, %476 : vector<2x1xf32>
    %cst_162 = arith.constant 9.99999974E-6 : f32
    %478 = vector.broadcast %cst_162 : f32 to vector<2x1xf32>
    %479 = arith.addf %477, %478 : vector<2x1xf32>
    %480 = math.rsqrt %479 : vector<2x1xf32>
    %481 = vector.broadcast %480 : vector<2x1xf32> to vector<2x32xf32>
    %482 = arith.mulf %472, %481 : vector<2x32xf32>
    %c1128 = arith.constant 1128 : index
    %c0_163 = arith.constant 0 : index
    %483 = vector.load %arg1[%c1128, %c0_163] : memref<1144x128xf32, #tpu.memory_space<vmem>>, vector<1x32xf32>
    %484 = vector.broadcast %483 : vector<1x32xf32> to vector<2x32xf32>
    %485 = arith.mulf %482, %484 : vector<2x32xf32>
    %c1136 = arith.constant 1136 : index
    %c0_164 = arith.constant 0 : index
    %486 = vector.load %arg1[%c1136, %c0_164] : memref<1144x128xf32, #tpu.memory_space<vmem>>, vector<1x32xf32>
    %487 = vector.broadcast %486 : vector<1x32xf32> to vector<2x32xf32>
    %488 = arith.addf %485, %487 : vector<2x32xf32>
    %489 = vector.shape_cast %488 : vector<2x32xf32> to vector<2x1x32xf32>
    %c0_165 = arith.constant 0 : index
    %c0_166 = arith.constant 0 : index
    %c0_167 = arith.constant 0 : index
    %490 = vector.load %arg2[%c0_165, %c0_166, %c0_167] : memref<2x1x32xf32, #tpu.memory_space<vmem>>, vector<2x1x32xf32>
    tpu.vector_store %arg2[%c0_165, %c0_166, %c0_167], %489 {strides = array<i32>} : memref<2x1x32xf32, #tpu.memory_space<vmem>>, vector<2x1x32xf32>,
    return
  }
}

</mosaic_0001>

<llo_original>
// kernel: forward.1
$region0: #{forward.1}
  #allocation0 [shape = 'u32[]', space=smem, size = 0x4, offset = 0x4, fixed_abs, tag = 'smem constant byte address 0x4 - core index']
  #allocation1 [shape = 'u32[144,128]{1,0:T(1,128)}', space=vmem, size = 0x12000, scoped, tag = 'internal scratch']
  %s0 = inlined_call_operand.hbm [shape: f32[2,8,32], index: 0, kind: input, shape index: {}]
  %s1 = inlined_call_operand.hbm [shape: f32[1144,128], index: 1, kind: input, shape index: {}]
  %s2 = inlined_call_operand.hbm [shape: f32[2,1,32], index: 2, kind: output, shape index: {}]
  %s3 = sld [smem:[#allocation0]]
  $region26: #{forward.1} parent=0
    _
  %s5 = ssub.s32 1, %s3
  %s6 = scalar_select 0, %s5, %s3
  $region1: #{forward.1} parent=0
    #allocation2 [shape = 'u8[8192]{0}', space=vmem, size = 0x2000, scoped, tag = 'input window, operand 0, single buffered']
    #allocation3 [shape = 's32[1]{0}', space=sflag, size = 0x4, scoped, tag = 'scoped memory for forward.1']
    #allocation4 [shape = 's32[1]{0}', space=sflag, size = 0x4, scoped, tag = 'scoped memory for forward.1']
    #allocation5 [shape = 'u8[585728]{0}', space=vmem, size = 0x8f000, scoped, tag = 'input window, operand 1, single buffered']
    #allocation6 [shape = 's32[1]{0}', space=sflag, size = 0x4, scoped, tag = 'scoped memory for forward.1']
    #allocation7 [shape = 'u8[1024]{0}', space=vmem, size = 0x400, scoped, tag = 'output window, operand 0, single buffered']
    %7 = vsyncpa [#allocation3], 0
    %8 = vsyncpa [#allocation6], 0
    %9 = vsyncpa [#allocation4], 0
    // Predicated region
    $region2: #{forward.1} parent=1 // pred_check
      _
    $region3: #{forward.1} parent=1 // pred_check_branch
      %11 = sbr.rel (0) target = $region5
    $region4: #{forward.1} parent=1 // pred_region
      %s13 = ssub.s32 256, 256
      %14 = vsyncadd [#allocation3], %s13
      %s15 = sshll.u32 [#allocation2], 4
      %s16 = int_to_ptr.vmem [resolvable:$true] %s15
      %21 = dma.hbm_to_vmem [thread:$0]  %s0, 256, %s16, [#allocation3], 128, 128, 8
    $region5: #{forward.1} parent=1 // pred_fallthru
      _
    // Predicated region
    $region6: #{forward.1} parent=1 // pred_check
      _
    $region7: #{forward.1} parent=1 // pred_check_branch
      %23 = sbr.rel (0) target = $region9
    $region8: #{forward.1} parent=1 // pred_region
      %s25 = ssub.s32 18304, 18304
      %26 = vsyncadd [#allocation6], %s25
      %s27 = sshll.u32 [#allocation5], 4
      %s28 = int_to_ptr.vmem [resolvable:$true] %s27
      %33 = dma.hbm_to_vmem [thread:$0]  %s1, 18304, %s28, [#allocation6], 128, 128, 8
    $region9: #{forward.1} parent=1 // pred_fallthru
      _
    // Predicated region
    $region10: #{forward.1} parent=1 // pred_check
      _
    $region11: #{forward.1} parent=1 // pred_check_branch
      %35 = sbr.rel (0) target = $region13
    $region12: #{forward.1} parent=1 // pred_region
      %36 = dma.done [#allocation3], 256
    $region13: #{forward.1} parent=1 // pred_fallthru
      _
    // Predicated region
    $region14: #{forward.1} parent=1 // pred_check
      _
    $region15: #{forward.1} parent=1 // pred_check_branch
      %38 = sbr.rel (0) target = $region17
    $region16: #{forward.1} parent=1 // pred_region
      %39 = dma.done [#allocation6], 18304
    $region17: #{forward.1} parent=1 // pred_fallthru
      _
    %v40 = vld [vmem:[#allocation5] sm:$0xff]
    %v41 = vld [vmem:[#allocation5 + $0x8] sm:$0xff]
    %v42 = vld [vmem:[#allocation5 + $0x10] sm:$0xff]
    %v43 = vld [vmem:[#allocation5 + $0x18] sm:$0xff]
    %v44 = vld [vmem:[#allocation5 + $0x20] sm:$0xff]
    %v45 = vld [vmem:[#allocation5 + $0x28] sm:$0xff]
    %v46 = vld [vmem:[#allocation5 + $0x30] sm:$0xff]
    %v47 = vld [vmem:[#allocation5 + $0x38] sm:$0xff]
    %v48 = vld [vmem:[#allocation2] sm:$0xff]
    %v49 = vld [vmem:[#allocation2 + $0x8] sm:$0xff]
    %v50 = vld [vmem:[#allocation5 + $0x40] sm:$0xff]
    %v51 = vld [vmem:[#allocation5 + $0x48] sm:$0xff]
    %v52 = vld [vmem:[#allocation5 + $0x50] sm:$0xff]
    %v53 = vld [vmem:[#allocation5 + $0x58] sm:$0xff]
    %v54 = vld [vmem:[#allocation5 + $0x60] sm:$0x1]
    %v55 = vlaneseq
    %v56 = vshrl.u32 %v55, 7
    %v57 = vsub.s32 0, %v56
    %v58 = vrot.slane %v54, %v57
    %vm59 = vcmask 261120
    %v61 = vsel %vm59, %v48, 0
    %v64 = vsel %vm59, %v49, 0
    %66 = vmatprep.subr.mxu0 0.0
    %67 = vmatpush1.msra.mxu0 %v50
    %68 = vmatprep.subr.mxu0 0.0
    %69 = vmatpush1.msra.mxu0 %v51
    %70 = vmatprep.subr.mxu0 0.0
    %71 = vmatpush1.msra.mxu0 %v52
    %72 = vmatprep.subr.mxu0 0.0
    %73 = vmatpush1.msra.mxu0 %v53
    %74 = vmatprep.subr.mxu0 0.0
    %75 = vmatpush1.msra.mxu0 0.0
    %76 = vmatprep.subr.mxu0 0.0
    %77 = vmatpush1.msra.mxu0 0.0
    %78 = vmatprep.subr.mxu0 0.0
    %79 = vmatpush1.msra.mxu0 0.0
    %80 = vmatprep.subr.mxu0 0.0
    %81 = vmatpush1.msra.mxu0 0.0
    %82 = vmatprep.subr.mxu0 0.0
    %83 = vmatpush1.msra.mxu0 0.0
    %84 = vmatprep.subr.mxu0 0.0
    %85 = vmatpush1.msra.mxu0 0.0
    %86 = vmatprep.subr.mxu0 0.0
    %87 = vmatpush1.msra.mxu0 0.0
    %88 = vmatprep.subr.mxu0 0.0
    %89 = vmatpush1.msra.mxu0 0.0
    %90 = vmatprep.subr.mxu0 0.0
    %91 = vmatpush1.msra.mxu0 0.0
    %92 = vmatprep.subr.mxu0 0.0
    %93 = vmatpush1.msra.mxu0 0.0
    %94 = vmatprep.subr.mxu0 0.0
    %95 = vmatpush1.msra.mxu0 0.0
    %96 = vmatprep.subr.mxu0 0.0
    %97 = vmatpush1.msra.mxu0 0.0
    %98 = vmatprep.subr.mxu0 0.0
    %99 = vmatpush1.msra.mxu0 0.0
    %100 = vmatprep.subr.mxu0 0.0
    %101 = vmatpush1.msra.mxu0 0.0
    %102 = vmatprep.subr.mxu0 0.0
    %103 = vmatpush1.msra.mxu0 0.0
    %104 = vmatprep.subr.mxu0 0.0
    %105 = vmatpush1.msra.mxu0 0.0
    %106 = vmatprep.subr.mxu0 0.0
    %107 = vmatpush1.msra.mxu0 0.0
    %108 = vmatprep.subr.mxu0 0.0
    %109 = vmatpush1.msra.mxu0 0.0
    %110 = vmatprep.subr.mxu0 0.0
    %111 = vmatpush1.msra.mxu0 0.0
    %112 = vmatprep.subr.mxu0 0.0
    %113 = vmatpush1.msra.mxu0 0.0
    %114 = vmatprep.subr.mxu0 0.0
    %115 = vmatpush1.msra.mxu0 0.0
    %116 = vmatprep.subr.mxu0 0.0
    %117 = vmatpush1.msra.mxu0 0.0
    %118 = vmatprep.subr.mxu0 0.0
    %119 = vmatpush1.msra.mxu0 0.0
    %120 = vmatprep.subr.mxu0 0.0
    %121 = vmatpush1.msra.mxu0 0.0
    %122 = vmatprep.subr.mxu0 0.0
    %123 = vmatpush1.msra.mxu0 0.0
    %124 = vmatprep.subr.mxu0 0.0
    %125 = vmatpush1.msra.mxu0 0.0
    %126 = vmatprep.subr.mxu0 0.0
    %127 = vmatpush1.msra.mxu0 0.0
    %128 = vmatprep.subr.mxu0 0.0
    %129 = vmatpush1.msra.mxu0 0.0
    %130 = vmatprep.mubr.f32.mxu0 0.0
    %131 = vmatmul.mubr.f32.gmra.mrb[0].mxu0 %v61
    %v132 = vpop.f32.mrb[0].mxu0
    %v133 = vadd.f32 %v58, %v132
    %v134 = vpop.f32.mrb[0].mxu0
    %135 = vmatprep.mubr.f32.mxu0 0.0
    %136 = vmatmul.mubr.f32.gmra.mrb[0].mxu0 %v64
    %v137 = vpop.f32.mrb[0].mxu0
    %v138 = vadd.f32 %v58, %v137
    %v139 = vpop.f32.mrb[0].mxu0
    %140 = vdwg.mxu0
    %145 = vrot.lane.b32.xlu0 %v40, 32
    %v146 = vpop.permute.xlu0 %145
    %147 = vrot.lane.b32.xlu0 %v41, 32
    %v148 = vpop.permute.xlu0 %147
    %149 = vrot.lane.b32.xlu0 %v42, 32
    %v150 = vpop.permute.xlu0 %149
    %151 = vrot.lane.b32.xlu0 %v43, 32
    %v152 = vpop.permute.xlu0 %151
    %v157 = vmul.f32 %v133, %v146
    %v158 = vmul.f32 %v133, %v148
    %v159 = vmul.f32 %v133, %v150
    %v160 = vmul.f32 %v133, %v152
    %v161 = vmul.f32 %v138, %v146
    %v162 = vmul.f32 %v138, %v148
    %v163 = vmul.f32 %v138, %v150
    %v164 = vmul.f32 %v138, %v152
    %165 = vrot.lane.b32.xlu0 %v40, 64
    %v166 = vpop.permute.xlu0 %165
    %167 = vrot.lane.b32.xlu0 %v41, 64
    %v168 = vpop.permute.xlu0 %167
    %169 = vrot.lane.b32.xlu0 %v42, 64
    %v170 = vpop.permute.xlu0 %169
    %171 = vrot.lane.b32.xlu0 %v43, 64
    %v172 = vpop.permute.xlu0 %171
    %v177 = vmul.f32 %v133, %v166
    %v178 = vmul.f32 %v133, %v168
    %v179 = vmul.f32 %v133, %v170
    %v180 = vmul.f32 %v133, %v172
    %v181 = vmul.f32 %v138, %v166
    %v182 = vmul.f32 %v138, %v168
    %v183 = vmul.f32 %v138, %v170
    %v184 = vmul.f32 %v138, %v172
    %189 = vrot.lane.b32.xlu0 %v157, 96
    %v190 = vpop.permute.xlu0 %189
    %191 = vrot.lane.b32.xlu0 %v158, 96
    %v192 = vpop.permute.xlu0 %191
    %193 = vrot.lane.b32.xlu0 %v159, 96
    %v194 = vpop.permute.xlu0 %193
    %195 = vrot.lane.b32.xlu0 %v160, 96
    %v196 = vpop.permute.xlu0 %195
    %v198 = vsel %vm59, %v133, 0
    %v200 = vsel %vm59, %v190, 0
    %v202 = vsel %vm59, %v192, 0
    %v204 = vsel %vm59, %v194, 0
    %v206 = vsel %vm59, %v196, 0
    %208 = vmatprep.subr.mxu0 0.0
    %209 = vmatpush1.xpose.msra.mxu0 %v200
    %210 = vmatprep.subr.mxu0 0.0
    %211 = vmatpush1.xpose.msra.mxu0 %v202
    %212 = vmatprep.subr.mxu0 0.0
    %213 = vmatpush1.xpose.msra.mxu0 %v204
    %214 = vmatprep.subr.mxu0 0.0
    %215 = vmatpush1.xpose.msra.mxu0 %v206
    %216 = vmatprep.subr.mxu0 0.0
    %217 = vmatpush1.xpose.msra.mxu0 0.0
    %218 = vmatprep.subr.mxu0 0.0
    %219 = vmatpush1.xpose.msra.mxu0 0.0
    %220 = vmatprep.subr.mxu0 0.0
    %221 = vmatpush1.xpose.msra.mxu0 0.0
    %222 = vmatprep.subr.mxu0 0.0
    %223 = vmatpush1.xpose.msra.mxu0 0.0
    %224 = vmatprep.subr.mxu0 0.0
    %225 = vmatpush1.xpose.msra.mxu0 0.0
    %226 = vmatprep.subr.mxu0 0.0
    %227 = vmatpush1.xpose.msra.mxu0 0.0
    %228 = vmatprep.subr.mxu0 0.0
    %229 = vmatpush1.xpose.msra.mxu0 0.0
    %230 = vmatprep.subr.mxu0 0.0
    %231 = vmatpush1.xpose.msra.mxu0 0.0
    %232 = vmatprep.subr.mxu0 0.0
    %233 = vmatpush1.xpose.msra.mxu0 0.0
    %234 = vmatprep.subr.mxu0 0.0
    %235 = vmatpush1.xpose.msra.mxu0 0.0
    %236 = vmatprep.subr.mxu0 0.0
    %237 = vmatpush1.xpose.msra.mxu0 0.0
    %238 = vmatprep.subr.mxu0 0.0
    %239 = vmatpush1.xpose.msra.mxu0 0.0
    %240 = vmatprep.subr.mxu0 0.0
    %241 = vmatpush1.xpose.msra.mxu0 0.0
    %242 = vmatprep.subr.mxu0 0.0
    %243 = vmatpush1.xpose.msra.mxu0 0.0
    %244 = vmatprep.subr.mxu0 0.0
    %245 = vmatpush1.xpose.msra.mxu0 0.0
    %246 = vmatprep.subr.mxu0 0.0
    %247 = vmatpush1.xpose.msra.mxu0 0.0
    %248 = vmatprep.subr.mxu0 0.0
    %249 = vmatpush1.xpose.msra.mxu0 0.0
    %250 = vmatprep.subr.mxu0 0.0
    %251 = vmatpush1.xpose.msra.mxu0 0.0
    %252 = vmatprep.subr.mxu0 0.0
    %253 = vmatpush1.xpose.msra.mxu0 0.0
    %254 = vmatprep.subr.mxu0 0.0
    %255 = vmatpush1.xpose.msra.mxu0 0.0
    %256 = vmatprep.subr.mxu0 0.0
    %257 = vmatpush1.xpose.msra.mxu0 0.0
    %258 = vmatprep.subr.mxu0 0.0
    %259 = vmatpush1.xpose.msra.mxu0 0.0
    %260 = vmatprep.subr.mxu0 0.0
    %261 = vmatpush1.xpose.msra.mxu0 0.0
    %262 = vmatprep.subr.mxu0 0.0
    %263 = vmatpush1.xpose.msra.mxu0 0.0
    %264 = vmatprep.subr.mxu0 0.0
    %265 = vmatpush1.xpose.msra.mxu0 0.0
    %266 = vmatprep.subr.mxu0 0.0
    %267 = vmatpush1.xpose.msra.mxu0 0.0
    %268 = vmatprep.subr.mxu0 0.0
    %269 = vmatpush1.xpose.msra.mxu0 0.0
    %270 = vmatprep.subr.mxu0 0.0
    %271 = vmatpush1.xpose.msra.mxu0 0.0
    %272 = vmatprep.mubr.f32.mxu0 0.0
    %273 = vmatmul.mubr.f32.gmra.mrb[0].mxu0 %v198
    %v274 = vpop.f32.mrb[0].mxu0
    %v275 = vadd.f32 0.0, %v274
    %v276 = vpop.f32.mrb[0].mxu0
    %277 = vdwg.mxu0
    %282 = vrot.lane.b32.xlu0 %v161, 96
    %v283 = vpop.permute.xlu0 %282
    %284 = vrot.lane.b32.xlu0 %v162, 96
    %v285 = vpop.permute.xlu0 %284
    %286 = vrot.lane.b32.xlu0 %v163, 96
    %v287 = vpop.permute.xlu0 %286
    %288 = vrot.lane.b32.xlu0 %v164, 96
    %v289 = vpop.permute.xlu0 %288
    %v291 = vsel %vm59, %v138, 0
    %v293 = vsel %vm59, %v283, 0
    %v295 = vsel %vm59, %v285, 0
    %v297 = vsel %vm59, %v287, 0
    %v299 = vsel %vm59, %v289, 0
    %301 = vmatprep.subr.mxu0 0.0
    %302 = vmatpush1.xpose.msra.mxu0 %v293
    %303 = vmatprep.subr.mxu0 0.0
    %304 = vmatpush1.xpose.msra.mxu0 %v295
    %305 = vmatprep.subr.mxu0 0.0
    %306 = vmatpush1.xpose.msra.mxu0 %v297
    %307 = vmatprep.subr.mxu0 0.0
    %308 = vmatpush1.xpose.msra.mxu0 %v299
    %309 = vmatprep.subr.mxu0 0.0
    %310 = vmatpush1.xpose.msra.mxu0 0.0
    %311 = vmatprep.subr.mxu0 0.0
    %312 = vmatpush1.xpose.msra.mxu0 0.0
    %313 = vmatprep.subr.mxu0 0.0
    %314 = vmatpush1.xpose.msra.mxu0 0.0
    %315 = vmatprep.subr.mxu0 0.0
    %316 = vmatpush1.xpose.msra.mxu0 0.0
    %317 = vmatprep.subr.mxu0 0.0
    %318 = vmatpush1.xpose.msra.mxu0 0.0
    %319 = vmatprep.subr.mxu0 0.0
    %320 = vmatpush1.xpose.msra.mxu0 0.0
    %321 = vmatprep.subr.mxu0 0.0
    %322 = vmatpush1.xpose.msra.mxu0 0.0
    %323 = vmatprep.subr.mxu0 0.0
    %324 = vmatpush1.xpose.msra.mxu0 0.0
    %325 = vmatprep.subr.mxu0 0.0
    %326 = vmatpush1.xpose.msra.mxu0 0.0
    %327 = vmatprep.subr.mxu0 0.0
    %328 = vmatpush1.xpose.msra.mxu0 0.0
    %329 = vmatprep.subr.mxu0 0.0
    %330 = vmatpush1.xpose.msra.mxu0 0.0
    %331 = vmatprep.subr.mxu0 0.0
    %332 = vmatpush1.xpose.msra.mxu0 0.0
    %333 = vmatprep.subr.mxu0 0.0
    %334 = vmatpush1.xpose.msra.mxu0 0.0
    %335 = vmatprep.subr.mxu0 0.0
    %336 = vmatpush1.xpose.msra.mxu0 0.0
    %337 = vmatprep.subr.mxu0 0.0
    %338 = vmatpush1.xpose.msra.mxu0 0.0
    %339 = vmatprep.subr.mxu0 0.0
    %340 = vmatpush1.xpose.msra.mxu0 0.0
    %341 = vmatprep.subr.mxu0 0.0
    %342 = vmatpush1.xpose.msra.mxu0 0.0
    %343 = vmatprep.subr.mxu0 0.0
    %344 = vmatpush1.xpose.msra.mxu0 0.0
    %345 = vmatprep.subr.mxu0 0.0
    %346 = vmatpush1.xpose.msra.mxu0 0.0
    %347 = vmatprep.subr.mxu0 0.0
    %348 = vmatpush1.xpose.msra.mxu0 0.0
    %349 = vmatprep.subr.mxu0 0.0
    %350 = vmatpush1.xpose.msra.mxu0 0.0
    %351 = vmatprep.subr.mxu0 0.0
    %352 = vmatpush1.xpose.msra.mxu0 0.0
    %353 = vmatprep.subr.mxu0 0.0
    %354 = vmatpush1.xpose.msra.mxu0 0.0
    %355 = vmatprep.subr.mxu0 0.0
    %356 = vmatpush1.xpose.msra.mxu0 0.0
    %357 = vmatprep.subr.mxu0 0.0
    %358 = vmatpush1.xpose.msra.mxu0 0.0
    %359 = vmatprep.subr.mxu0 0.0
    %360 = vmatpush1.xpose.msra.mxu0 0.0
    %361 = vmatprep.subr.mxu0 0.0
    %362 = vmatpush1.xpose.msra.mxu0 0.0
    %363 = vmatprep.subr.mxu0 0.0
    %364 = vmatpush1.xpose.msra.mxu0 0.0
    %365 = vmatprep.mubr.f32.mxu0 0.0
    %366 = vmatmul.mubr.f32.gmra.mrb[0].mxu0 %v291
    %v367 = vpop.f32.mrb[0].mxu0
    %v368 = vadd.f32 0.0, %v367
    %v369 = vpop.f32.mrb[0].mxu0
    %370 = vdwg.mxu0
    %v371 = vmul.f32 %v275, 1.442695
    %v372 = vpow.pop %v371
    %v373 = vmul.f32 %v368, 1.442695
    %v374 = vpow.pop %v373
    %v376 = vsel %vm59, %v372, 0
    %v379 = vsel %vm59, %v374, 0
    %381 = vmatprep.subr.mxu0 0.0
    %382 = vmatpush1.msra.mxu0 %v44
    %383 = vmatprep.subr.mxu0 0.0
    %384 = vmatpush1.msra.mxu0 %v45
    %385 = vmatprep.subr.mxu0 0.0
    %386 = vmatpush1.msra.mxu0 %v46
    %387 = vmatprep.subr.mxu0 0.0
    %388 = vmatpush1.msra.mxu0 %v47
    %389 = vmatprep.subr.mxu0 0.0
    %390 = vmatpush1.msra.mxu0 0.0
    %391 = vmatprep.subr.mxu0 0.0
    %392 = vmatpush1.msra.mxu0 0.0
    %393 = vmatprep.subr.mxu0 0.0
    %394 = vmatpush1.msra.mxu0 0.0
    %395 = vmatprep.subr.mxu0 0.0
    %396 = vmatpush1.msra.mxu0 0.0
    %397 = vmatprep.subr.mxu0 0.0
    %398 = vmatpush1.msra.mxu0 0.0
    %399 = vmatprep.subr.mxu0 0.0
    %400 = vmatpush1.msra.mxu0 0.0
    %401 = vmatprep.subr.mxu0 0.0
    %402 = vmatpush1.msra.mxu0 0.0
    %403 = vmatprep.subr.mxu0 0.0
    %404 = vmatpush1.msra.mxu0 0.0
    %405 = vmatprep.subr.mxu0 0.0
    %406 = vmatpush1.msra.mxu0 0.0
    %407 = vmatprep.subr.mxu0 0.0
    %408 = vmatpush1.msra.mxu0 0.0
    %409 = vmatprep.subr.mxu0 0.0
    %410 = vmatpush1.msra.mxu0 0.0
    %411 = vmatprep.subr.mxu0 0.0
    %412 = vmatpush1.msra.mxu0 0.0
    %413 = vmatprep.subr.mxu0 0.0
    %414 = vmatpush1.msra.mxu0 0.0
    %415 = vmatprep.subr.mxu0 0.0
    %416 = vmatpush1.msra.mxu0 0.0
    %417 = vmatprep.subr.mxu0 0.0
    %418 = vmatpush1.msra.mxu0 0.0
    %419 = vmatprep.subr.mxu0 0.0
    %420 = vmatpush1.msra.mxu0 0.0
    %421 = vmatprep.subr.mxu0 0.0
    %422 = vmatpush1.msra.mxu0 0.0
    %423 = vmatprep.subr.mxu0 0.0
    %424 = vmatpush1.msra.mxu0 0.0
    %425 = vmatprep.subr.mxu0 0.0
    %426 = vmatpush1.msra.mxu0 0.0
    %427 = vmatprep.subr.mxu0 0.0
    %428 = vmatpush1.msra.mxu0 0.0
    %429 = vmatprep.subr.mxu0 0.0
    %430 = vmatpush1.msra.mxu0 0.0
    %431 = vmatprep.subr.mxu0 0.0
    %432 = vmatpush1.msra.mxu0 0.0
    %433 = vmatprep.subr.mxu0 0.0
    %434 = vmatpush1.msra.mxu0 0.0
    %435 = vmatprep.subr.mxu0 0.0
    %436 = vmatpush1.msra.mxu0 0.0
    %437 = vmatprep.subr.mxu0 0.0
    %438 = vmatpush1.msra.mxu0 0.0
    %439 = vmatprep.subr.mxu0 0.0
    %440 = vmatpush1.msra.mxu0 0.0
    %441 = vmatprep.subr.mxu0 0.0
    %442 = vmatpush1.msra.mxu0 0.0
    %443 = vmatprep.subr.mxu0 0.0
    %444 = vmatpush1.msra.mxu0 0.0
    %445 = vmatprep.mubr.f32.mxu0 0.0
    %446 = vmatmul.mubr.f32.gmra.mrb[0].mxu0 %v376
    %v447 = vpop.f32.mrb[0].mxu0
    %v448 = vadd.f32 0.0, %v447
    %v449 = vpop.f32.mrb[0].mxu0
    %450 = vmatprep.mubr.f32.mxu0 0.0
    %451 = vmatmul.mubr.f32.gmra.mrb[0].mxu0 %v379
    %v452 = vpop.f32.mrb[0].mxu0
    %v453 = vadd.f32 0.0, %v452
    %v454 = vpop.f32.mrb[0].mxu0
    %455 = vdwg.mxu0
    %v456 = vrcp.pop %v448
    %v457 = vrcp.pop %v453
    %v458 = vmul.f32 %v448, %v456
    %v459 = vmul.f32 %v453, %v457
    %v460 = vsub.f32 2.0, %v458
    %v461 = vsub.f32 2.0, %v459
    %v462 = vmul.f32 %v456, %v460
    %v463 = vmul.f32 %v457, %v461
    %v464 = vmul.f32 %v372, %v462
    %v465 = vmul.f32 %v374, %v463
    %470 = vrot.lane.b32.xlu0 %v177, 64
    %v471 = vpop.permute.xlu0 %470
    %472 = vrot.lane.b32.xlu0 %v178, 64
    %v473 = vpop.permute.xlu0 %472
    %474 = vrot.lane.b32.xlu0 %v179, 64
    %v475 = vpop.permute.xlu0 %474
    %476 = vrot.lane.b32.xlu0 %v180, 64
    %v477 = vpop.permute.xlu0 %476
    %v483 = vsel %vm59, %v464, 0
    %485 = vmatprep.subr.mxu0 0.0
    %486 = vmatpush1.msra.mxu0 %v471
    %487 = vmatprep.subr.mxu0 0.0
    %488 = vmatpush1.msra.mxu0 %v473
    %489 = vmatprep.subr.mxu0 0.0
    %490 = vmatpush1.msra.mxu0 %v475
    %491 = vmatprep.subr.mxu0 0.0
    %492 = vmatpush1.msra.mxu0 %v477
    %493 = vmatprep.subr.mxu0 0.0
    %494 = vmatpush1.msra.mxu0 0.0
    %495 = vmatprep.subr.mxu0 0.0
    %496 = vmatpush1.msra.mxu0 0.0
    %497 = vmatprep.subr.mxu0 0.0
    %498 = vmatpush1.msra.mxu0 0.0
    %499 = vmatprep.subr.mxu0 0.0
    %500 = vmatpush1.msra.mxu0 0.0
    %501 = vmatprep.subr.mxu0 0.0
    %502 = vmatpush1.msra.mxu0 0.0
    %503 = vmatprep.subr.mxu0 0.0
    %504 = vmatpush1.msra.mxu0 0.0
    %505 = vmatprep.subr.mxu0 0.0
    %506 = vmatpush1.msra.mxu0 0.0
    %507 = vmatprep.subr.mxu0 0.0
    %508 = vmatpush1.msra.mxu0 0.0
    %509 = vmatprep.subr.mxu0 0.0
    %510 = vmatpush1.msra.mxu0 0.0
    %511 = vmatprep.subr.mxu0 0.0
    %512 = vmatpush1.msra.mxu0 0.0
    %513 = vmatprep.subr.mxu0 0.0
    %514 = vmatpush1.msra.mxu0 0.0
    %515 = vmatprep.subr.mxu0 0.0
    %516 = vmatpush1.msra.mxu0 0.0
    %517 = vmatprep.subr.mxu0 0.0
    %518 = vmatpush1.msra.mxu0 0.0
    %519 = vmatprep.subr.mxu0 0.0
    %520 = vmatpush1.msra.mxu0 0.0
    %521 = vmatprep.subr.mxu0 0.0
    %522 = vmatpush1.msra.mxu0 0.0
    %523 = vmatprep.subr.mxu0 0.0
    %524 = vmatpush1.msra.mxu0 0.0
    %525 = vmatprep.subr.mxu0 0.0
    %526 = vmatpush1.msra.mxu0 0.0
    %527 = vmatprep.subr.mxu0 0.0
    %528 = vmatpush1.msra.mxu0 0.0
    %529 = vmatprep.subr.mxu0 0.0
    %530 = vmatpush1.msra.mxu0 0.0
    %531 = vmatprep.subr.mxu0 0.0
    %532 = vmatpush1.msra.mxu0 0.0
    %533 = vmatprep.subr.mxu0 0.0
    %534 = vmatpush1.msra.mxu0 0.0
    %535 = vmatprep.subr.mxu0 0.0
    %536 = vmatpush1.msra.mxu0 0.0
    %537 = vmatprep.subr.mxu0 0.0
    %538 = vmatpush1.msra.mxu0 0.0
    %539 = vmatprep.subr.mxu0 0.0
    %540 = vmatpush1.msra.mxu0 0.0
    %541 = vmatprep.subr.mxu0 0.0
    %542 = vmatpush1.msra.mxu0 0.0
    %543 = vmatprep.subr.mxu0 0.0
    %544 = vmatpush1.msra.mxu0 0.0
    %545 = vmatprep.subr.mxu0 0.0
    %546 = vmatpush1.msra.mxu0 0.0
    %547 = vmatprep.subr.mxu0 0.0
    %548 = vmatpush1.msra.mxu0 0.0
    %549 = vmatprep.mubr.f32.mxu0 0.0
    %550 = vmatmul.mubr.f32.gmra.mrb[0].mxu0 %v483
    %v551 = vpop.f32.mrb[0].mxu0
    %v552 = vadd.f32 0.0, %v551
    %v553 = vpop.f32.mrb[0].mxu0
    %554 = vdwg.mxu0
    %559 = vrot.lane.b32.xlu0 %v181, 64
    %v560 = vpop.permute.xlu0 %559
    %561 = vrot.lane.b32.xlu0 %v182, 64
    %v562 = vpop.permute.xlu0 %561
    %563 = vrot.lane.b32.xlu0 %v183, 64
    %v564 = vpop.permute.xlu0 %563
    %565 = vrot.lane.b32.xlu0 %v184, 64
    %v566 = vpop.permute.xlu0 %565
    %v572 = vsel %vm59, %v465, 0
    %574 = vmatprep.subr.mxu0 0.0
    %575 = vmatpush1.msra.mxu0 %v560
    %576 = vmatprep.subr.mxu0 0.0
    %577 = vmatpush1.msra.mxu0 %v562
    %578 = vmatprep.subr.mxu0 0.0
    %579 = vmatpush1.msra.mxu0 %v564
    %580 = vmatprep.subr.mxu0 0.0
    %581 = vmatpush1.msra.mxu0 %v566
    %582 = vmatprep.subr.mxu0 0.0
    %583 = vmatpush1.msra.mxu0 0.0
    %584 = vmatprep.subr.mxu0 0.0
    %585 = vmatpush1.msra.mxu0 0.0
    %586 = vmatprep.subr.mxu0 0.0
    %587 = vmatpush1.msra.mxu0 0.0
    %588 = vmatprep.subr.mxu0 0.0
    %589 = vmatpush1.msra.mxu0 0.0
    %590 = vmatprep.subr.mxu0 0.0
    %591 = vmatpush1.msra.mxu0 0.0
    %592 = vmatprep.subr.mxu0 0.0
    %593 = vmatpush1.msra.mxu0 0.0
    %594 = vmatprep.subr.mxu0 0.0
    %595 = vmatpush1.msra.mxu0 0.0
    %596 = vmatprep.subr.mxu0 0.0
    %597 = vmatpush1.msra.mxu0 0.0
    %598 = vmatprep.subr.mxu0 0.0
    %599 = vmatpush1.msra.mxu0 0.0
    %600 = vmatprep.subr.mxu0 0.0
    %601 = vmatpush1.msra.mxu0 0.0
    %602 = vmatprep.subr.mxu0 0.0
    %603 = vmatpush1.msra.mxu0 0.0
    %604 = vmatprep.subr.mxu0 0.0
    %605 = vmatpush1.msra.mxu0 0.0
    %606 = vmatprep.subr.mxu0 0.0
    %607 = vmatpush1.msra.mxu0 0.0
    %608 = vmatprep.subr.mxu0 0.0
    %609 = vmatpush1.msra.mxu0 0.0
    %610 = vmatprep.subr.mxu0 0.0
    %611 = vmatpush1.msra.mxu0 0.0
    %612 = vmatprep.subr.mxu0 0.0
    %613 = vmatpush1.msra.mxu0 0.0
    %614 = vmatprep.subr.mxu0 0.0
    %615 = vmatpush1.msra.mxu0 0.0
    %616 = vmatprep.subr.mxu0 0.0
    %617 = vmatpush1.msra.mxu0 0.0
    %618 = vmatprep.subr.mxu0 0.0
    %619 = vmatpush1.msra.mxu0 0.0
    %620 = vmatprep.subr.mxu0 0.0
    %621 = vmatpush1.msra.mxu0 0.0
    %622 = vmatprep.subr.mxu0 0.0
    %623 = vmatpush1.msra.mxu0 0.0
    %624 = vmatprep.subr.mxu0 0.0
    %625 = vmatpush1.msra.mxu0 0.0
    %626 = vmatprep.subr.mxu0 0.0
    %627 = vmatpush1.msra.mxu0 0.0
    %628 = vmatprep.subr.mxu0 0.0
    %629 = vmatpush1.msra.mxu0 0.0
    %630 = vmatprep.subr.mxu0 0.0
    %631 = vmatpush1.msra.mxu0 0.0
    %632 = vmatprep.subr.mxu0 0.0
    %633 = vmatpush1.msra.mxu0 0.0
    %634 = vmatprep.subr.mxu0 0.0
    %635 = vmatpush1.msra.mxu0 0.0
    %636 = vmatprep.subr.mxu0 0.0
    %637 = vmatpush1.msra.mxu0 0.0
    %638 = vmatprep.mubr.f32.mxu0 0.0
    %639 = vmatmul.mubr.f32.gmra.mrb[0].mxu0 %v572
    %v640 = vpop.f32.mrb[0].mxu0
    %v641 = vadd.f32 0.0, %v640
    %v642 = vpop.f32.mrb[0].mxu0
    %643 = vdwg.mxu0
    %v644 = vld [vmem:[#allocation5 + $0x68] sm:$0xff]
    %v645 = vld [vmem:[#allocation5 + $0x70] sm:$0xff]
    %v646 = vld [vmem:[#allocation5 + $0x78] sm:$0xff]
    %v647 = vld [vmem:[#allocation5 + $0x80] sm:$0xff]
    %v648 = vld [vmem:[#allocation5 + $0x88] sm:$0x1]
    %v649 = vlaneseq
    %v650 = vshrl.u32 %v649, 7
    %v651 = vsub.s32 0, %v650
    %v652 = vrot.slane %v648, %v651
    %v654 = vsel %vm59, %v552, 0
    %v657 = vsel %vm59, %v641, 0
    %659 = vmatprep.subr.mxu0 0.0
    %660 = vmatpush1.msra.mxu0 %v644
    %661 = vmatprep.subr.mxu0 0.0
    %662 = vmatpush1.msra.mxu0 %v645
    %663 = vmatprep.subr.mxu0 0.0
    %664 = vmatpush1.msra.mxu0 %v646
    %665 = vmatprep.subr.mxu0 0.0
    %666 = vmatpush1.msra.mxu0 %v647
    %667 = vmatprep.subr.mxu0 0.0
    %668 = vmatpush1.msra.mxu0 0.0
    %669 = vmatprep.subr.mxu0 0.0
    %670 = vmatpush1.msra.mxu0 0.0
    %671 = vmatprep.subr.mxu0 0.0
    %672 = vmatpush1.msra.mxu0 0.0
    %673 = vmatprep.subr.mxu0 0.0
    %674 = vmatpush1.msra.mxu0 0.0
    %675 = vmatprep.subr.mxu0 0.0
    %676 = vmatpush1.msra.mxu0 0.0
    %677 = vmatprep.subr.mxu0 0.0
    %678 = vmatpush1.msra.mxu0 0.0
    %679 = vmatprep.subr.mxu0 0.0
    %680 = vmatpush1.msra.mxu0 0.0
    %681 = vmatprep.subr.mxu0 0.0
    %682 = vmatpush1.msra.mxu0 0.0
    %683 = vmatprep.subr.mxu0 0.0
    %684 = vmatpush1.msra.mxu0 0.0
    %685 = vmatprep.subr.mxu0 0.0
    %686 = vmatpush1.msra.mxu0 0.0
    %687 = vmatprep.subr.mxu0 0.0
    %688 = vmatpush1.msra.mxu0 0.0
    %689 = vmatprep.subr.mxu0 0.0
    %690 = vmatpush1.msra.mxu0 0.0
    %691 = vmatprep.subr.mxu0 0.0
    %692 = vmatpush1.msra.mxu0 0.0
    %693 = vmatprep.subr.mxu0 0.0
    %694 = vmatpush1.msra.mxu0 0.0
    %695 = vmatprep.subr.mxu0 0.0
    %696 = vmatpush1.msra.mxu0 0.0
    %697 = vmatprep.subr.mxu0 0.0
    %698 = vmatpush1.msra.mxu0 0.0
    %699 = vmatprep.subr.mxu0 0.0
    %700 = vmatpush1.msra.mxu0 0.0
    %701 = vmatprep.subr.mxu0 0.0
    %702 = vmatpush1.msra.mxu0 0.0
    %703 = vmatprep.subr.mxu0 0.0
    %704 = vmatpush1.msra.mxu0 0.0
    %705 = vmatprep.subr.mxu0 0.0
    %706 = vmatpush1.msra.mxu0 0.0
    %707 = vmatprep.subr.mxu0 0.0
    %708 = vmatpush1.msra.mxu0 0.0
    %709 = vmatprep.subr.mxu0 0.0
    %710 = vmatpush1.msra.mxu0 0.0
    %711 = vmatprep.subr.mxu0 0.0
    %712 = vmatpush1.msra.mxu0 0.0
    %713 = vmatprep.subr.mxu0 0.0
    %714 = vmatpush1.msra.mxu0 0.0
    %715 = vmatprep.subr.mxu0 0.0
    %716 = vmatpush1.msra.mxu0 0.0
    %717 = vmatprep.subr.mxu0 0.0
    %718 = vmatpush1.msra.mxu0 0.0
    %719 = vmatprep.subr.mxu0 0.0
    %720 = vmatpush1.msra.mxu0 0.0
    %721 = vmatprep.subr.mxu0 0.0
    %722 = vmatpush1.msra.mxu0 0.0
    %723 = vmatprep.mubr.f32.mxu0 0.0
    %724 = vmatmul.mubr.f32.gmra.mrb[0].mxu0 %v654
    %v725 = vpop.f32.mrb[0].mxu0
    %v726 = vadd.f32 %v652, %v725
    %v727 = vpop.f32.mrb[0].mxu0
    %728 = vmatprep.mubr.f32.mxu0 0.0
    %729 = vmatmul.mubr.f32.gmra.mrb[0].mxu0 %v657
    %v730 = vpop.f32.mrb[0].mxu0
    %v731 = vadd.f32 %v652, %v730
    %v732 = vpop.f32.mrb[0].mxu0
    %733 = vdwg.mxu0
    %v734 = vadd.f32 %v48, %v726
    %v735 = vadd.f32 %v49, %v731
    %v736 = vsel %vm59, %v734, 0.0
    %737 = vadd.xlane.f32.xlu0 %v736
    %v738 = vpop.xlane.xlu0 %737
    %v739 = vsel %vm59, %v735, 0.0
    %740 = vadd.xlane.f32.xlu0 %v739
    %v741 = vpop.xlane.xlu0 %740
    %v742 = vrcp.pop 32.0
    %v743 = vmul.f32 %v738, %v742
    %v744 = vmul.f32 %v741, %v742
    %v745 = vsub.f32 %v734, %v743
    %v746 = vsub.f32 %v735, %v744
    %v747 = vmul.f32 %v745, %v745
    %v748 = vmul.f32 %v746, %v746
    %v749 = vsel %vm59, %v747, 0.0
    %750 = vadd.xlane.f32.xlu0 %v749
    %v751 = vpop.xlane.xlu0 %750
    %v752 = vsel %vm59, %v748, 0.0
    %753 = vadd.xlane.f32.xlu0 %v752
    %v754 = vpop.xlane.xlu0 %753
    %v755 = vmul.f32 %v751, %v742
    %v756 = vmul.f32 %v754, %v742
    %v757 = vadd.f32 %v755, 1e-05
    %v758 = vadd.f32 %v756, 1e-05
    %v759 = vrsqrt.pop %v757
    %v760 = vrsqrt.pop %v758
    %v761 = vmul.f32 %v745, %v759
    %v762 = vmul.f32 %v746, %v760
    %v763 = vld [vmem:[#allocation5 + $0x100] sm:$0x1]
    %v764 = vlaneseq
    %v765 = vshrl.u32 %v764, 7
    %v766 = vsub.s32 0, %v765
    %v767 = vrot.slane %v763, %v766
    %v768 = vmul.f32 %v761, %v767
    %v769 = vmul.f32 %v762, %v767
    %v770 = vld [vmem:[#allocation5 + $0x108] sm:$0x1]
    %v771 = vlaneseq
    %v772 = vshrl.u32 %v771, 7
    %v773 = vsub.s32 0, %v772
    %v774 = vrot.slane %v770, %v773
    %v775 = vadd.f32 %v768, %v774
    %v776 = vadd.f32 %v769, %v774
    %v777 = vld [vmem:[#allocation5 + $0x90] sm:$0xff]
    %v778 = vld [vmem:[#allocation5 + $0x98] sm:$0xff]
    %v779 = vld [vmem:[#allocation5 + $0xa0] sm:$0xff]
    %v780 = vld [vmem:[#allocation5 + $0xa8] sm:$0xff]
    %v781 = vld [vmem:[#allocation5 + $0xb0] sm:$0x1]
    %v782 = vlaneseq
    %v783 = vshrl.u32 %v782, 7
    %v784 = vsub.s32 0, %v783
    %v785 = vrot.slane %v781, %v784
    %v787 = vsel %vm59, %v775, 0
    %v790 = vsel %vm59, %v776, 0
    %792 = vmatprep.subr.mxu0 0.0
    %793 = vmatpush1.msra.mxu0 %v777
    %794 = vmatprep.subr.mxu0 0.0
    %795 = vmatpush1.msra.mxu0 %v778
    %796 = vmatprep.subr.mxu0 0.0
    %797 = vmatpush1.msra.mxu0 %v779
    %798 = vmatprep.subr.mxu0 0.0
    %799 = vmatpush1.msra.mxu0 %v780
    %800 = vmatprep.subr.mxu0 0.0
    %801 = vmatpush1.msra.mxu0 0.0
    %802 = vmatprep.subr.mxu0 0.0
    %803 = vmatpush1.msra.mxu0 0.0
    %804 = vmatprep.subr.mxu0 0.0
    %805 = vmatpush1.msra.mxu0 0.0
    %806 = vmatprep.subr.mxu0 0.0
    %807 = vmatpush1.msra.mxu0 0.0
    %808 = vmatprep.subr.mxu0 0.0
    %809 = vmatpush1.msra.mxu0 0.0
    %810 = vmatprep.subr.mxu0 0.0
    %811 = vmatpush1.msra.mxu0 0.0
    %812 = vmatprep.subr.mxu0 0.0
    %813 = vmatpush1.msra.mxu0 0.0
    %814 = vmatprep.subr.mxu0 0.0
    %815 = vmatpush1.msra.mxu0 0.0
    %816 = vmatprep.subr.mxu0 0.0
    %817 = vmatpush1.msra.mxu0 0.0
    %818 = vmatprep.subr.mxu0 0.0
    %819 = vmatpush1.msra.mxu0 0.0
    %820 = vmatprep.subr.mxu0 0.0
    %821 = vmatpush1.msra.mxu0 0.0
    %822 = vmatprep.subr.mxu0 0.0
    %823 = vmatpush1.msra.mxu0 0.0
    %824 = vmatprep.subr.mxu0 0.0
    %825 = vmatpush1.msra.mxu0 0.0
    %826 = vmatprep.subr.mxu0 0.0
    %827 = vmatpush1.msra.mxu0 0.0
    %828 = vmatprep.subr.mxu0 0.0
    %829 = vmatpush1.msra.mxu0 0.0
    %830 = vmatprep.subr.mxu0 0.0
    %831 = vmatpush1.msra.mxu0 0.0
    %832 = vmatprep.subr.mxu0 0.0
    %833 = vmatpush1.msra.mxu0 0.0
    %834 = vmatprep.subr.mxu0 0.0
    %835 = vmatpush1.msra.mxu0 0.0
    %836 = vmatprep.subr.mxu0 0.0
    %837 = vmatpush1.msra.mxu0 0.0
    %838 = vmatprep.subr.mxu0 0.0
    %839 = vmatpush1.msra.mxu0 0.0
    %840 = vmatprep.subr.mxu0 0.0
    %841 = vmatpush1.msra.mxu0 0.0
    %842 = vmatprep.subr.mxu0 0.0
    %843 = vmatpush1.msra.mxu0 0.0
    %844 = vmatprep.subr.mxu0 0.0
    %845 = vmatpush1.msra.mxu0 0.0
    %846 = vmatprep.subr.mxu0 0.0
    %847 = vmatpush1.msra.mxu0 0.0
    %848 = vmatprep.subr.mxu0 0.0
    %849 = vmatpush1.msra.mxu0 0.0
    %850 = vmatprep.subr.mxu0 0.0
    %851 = vmatpush1.msra.mxu0 0.0
    %852 = vmatprep.subr.mxu0 0.0
    %853 = vmatpush1.msra.mxu0 0.0
    %854 = vmatprep.subr.mxu0 0.0
    %855 = vmatpush1.msra.mxu0 0.0
    %856 = vmatprep.mubr.f32.mxu0 0.0
    %857 = vmatmul.mubr.f32.gmra.mrb[0].mxu0 %v787
    %v858 = vpop.f32.mrb[0].mxu0
    %v859 = vadd.f32 %v785, %v858
    %v860 = vpop.f32.mrb[0].mxu0
    %861 = vmatprep.mubr.f32.mxu0 0.0
    %862 = vmatmul.mubr.f32.gmra.mrb[0].mxu0 %v790
    %v863 = vpop.f32.mrb[0].mxu0
    %v864 = vadd.f32 %v785, %v863
    %v865 = vpop.f32.mrb[0].mxu0
    %866 = vdwg.mxu0
    %v867 = vmax.f32 %v859, 0.0
    %v868 = vmax.f32 %v864, 0.0
    %v869 = vld [vmem:[#allocation5 + $0xb8] sm:$0xff]
    %v870 = vld [vmem:[#allocation5 + $0xc0] sm:$0xff]
    %v871 = vld [vmem:[#allocation5 + $0xc8] sm:$0xff]
    %v872 = vld [vmem:[#allocation5 + $0xd0] sm:$0xff]
    %v873 = vld [vmem:[#allocation5 + $0xd8] sm:$0xff]
    %v874 = vld [vmem:[#allocation5 + $0xe0] sm:$0xff]
    %v875 = vld [vmem:[#allocation5 + $0xe8] sm:$0xff]
    %v876 = vld [vmem:[#allocation5 + $0xf0] sm:$0xff]
    %v877 = vld [vmem:[#allocation5 + $0xf8] sm:$0x1]
    %v878 = vlaneseq
    %v879 = vshrl.u32 %v878, 7
    %v880 = vsub.s32 0, %v879
    %v881 = vrot.slane %v877, %v880
    %vm882 = vcmask 523264
    %v884 = vsel %vm882, %v867, 0
    %v887 = vsel %vm882, %v868, 0
    %889 = vmatprep.subr.mxu0 0.0
    %890 = vmatpush1.msra.mxu0 %v869
    %891 = vmatprep.subr.mxu0 0.0
    %892 = vmatpush1.msra.mxu0 %v870
    %893 = vmatprep.subr.mxu0 0.0
    %894 = vmatpush1.msra.mxu0 %v871
    %895 = vmatprep.subr.mxu0 0.0
    %896 = vmatpush1.msra.mxu0 %v872
    %897 = vmatprep.subr.mxu0 0.0
    %898 = vmatpush1.msra.mxu0 %v873
    %899 = vmatprep.subr.mxu0 0.0
    %900 = vmatpush1.msra.mxu0 %v874
    %901 = vmatprep.subr.mxu0 0.0
    %902 = vmatpush1.msra.mxu0 %v875
    %903 = vmatprep.subr.mxu0 0.0
    %904 = vmatpush1.msra.mxu0 %v876
    %905 = vmatprep.subr.mxu0 0.0
    %906 = vmatpush1.msra.mxu0 0.0
    %907 = vmatprep.subr.mxu0 0.0
    %908 = vmatpush1.msra.mxu0 0.0
    %909 = vmatprep.subr.mxu0 0.0
    %910 = vmatpush1.msra.mxu0 0.0
    %911 = vmatprep.subr.mxu0 0.0
    %912 = vmatpush1.msra.mxu0 0.0
    %913 = vmatprep.subr.mxu0 0.0
    %914 = vmatpush1.msra.mxu0 0.0
    %915 = vmatprep.subr.mxu0 0.0
    %916 = vmatpush1.msra.mxu0 0.0
    %917 = vmatprep.subr.mxu0 0.0
    %918 = vmatpush1.msra.mxu0 0.0
    %919 = vmatprep.subr.mxu0 0.0
    %920 = vmatpush1.msra.mxu0 0.0
    %921 = vmatprep.subr.mxu0 0.0
    %922 = vmatpush1.msra.mxu0 0.0
    %923 = vmatprep.subr.mxu0 0.0
    %924 = vmatpush1.msra.mxu0 0.0
    %925 = vmatprep.subr.mxu0 0.0
    %926 = vmatpush1.msra.mxu0 0.0
    %927 = vmatprep.subr.mxu0 0.0
    %928 = vmatpush1.msra.mxu0 0.0
    %929 = vmatprep.subr.mxu0 0.0
    %930 = vmatpush1.msra.mxu0 0.0
    %931 = vmatprep.subr.mxu0 0.0
    %932 = vmatpush1.msra.mxu0 0.0
    %933 = vmatprep.subr.mxu0 0.0
    %934 = vmatpush1.msra.mxu0 0.0
    %935 = vmatprep.subr.mxu0 0.0
    %936 = vmatpush1.msra.mxu0 0.0
    %937 = vmatprep.subr.mxu0 0.0
    %938 = vmatpush1.msra.mxu0 0.0
    %939 = vmatprep.subr.mxu0 0.0
    %940 = vmatpush1.msra.mxu0 0.0
    %941 = vmatprep.subr.mxu0 0.0
    %942 = vmatpush1.msra.mxu0 0.0
    %943 = vmatprep.subr.mxu0 0.0
    %944 = vmatpush1.msra.mxu0 0.0
    %945 = vmatprep.subr.mxu0 0.0
    %946 = vmatpush1.msra.mxu0 0.0
    %947 = vmatprep.subr.mxu0 0.0
    %948 = vmatpush1.msra.mxu0 0.0
    %949 = vmatprep.subr.mxu0 0.0
    %950 = vmatpush1.msra.mxu0 0.0
    %951 = vmatprep.subr.mxu0 0.0
    %952 = vmatpush1.msra.mxu0 0.0
    %953 = vmatprep.mubr.f32.mxu0 0.0
    %954 = vmatmul.mubr.f32.gmra.mrb[0].mxu0 %v884
    %v955 = vpop.f32.mrb[0].mxu0
    %v956 = vadd.f32 %v881, %v955
    %v957 = vpop.f32.mrb[0].mxu0
    %958 = vmatprep.mubr.f32.mxu0 0.0
    %959 = vmatmul.mubr.f32.gmra.mrb[0].mxu0 %v887
    %v960 = vpop.f32.mrb[0].mxu0
    %v961 = vadd.f32 %v881, %v960
    %v962 = vpop.f32.mrb[0].mxu0
    %963 = vdwg.mxu0
    %v964 = vadd.f32 %v775, %v956
    %v965 = vadd.f32 %v776, %v961
    %v966 = vsel %vm59, %v964, 0.0
    %967 = vadd.xlane.f32.xlu0 %v966
    %v968 = vpop.xlane.xlu0 %967
    %v969 = vsel %vm59, %v965, 0.0
    %970 = vadd.xlane.f32.xlu0 %v969
    %v971 = vpop.xlane.xlu0 %970
    %v972 = vmul.f32 %v968, %v742
    %v973 = vmul.f32 %v971, %v742
    %v974 = vsub.f32 %v964, %v972
    %v975 = vsub.f32 %v965, %v973
    %v976 = vmul.f32 %v974, %v974
    %v977 = vmul.f32 %v975, %v975
    %v978 = vsel %vm59, %v976, 0.0
    %979 = vadd.xlane.f32.xlu0 %v978
    %v980 = vpop.xlane.xlu0 %979
    %v981 = vsel %vm59, %v977, 0.0
    %982 = vadd.xlane.f32.xlu0 %v981
    %v983 = vpop.xlane.xlu0 %982
    %v984 = vmul.f32 %v980, %v742
    %v985 = vmul.f32 %v983, %v742
    %v986 = vadd.f32 %v984, 1e-05
    %v987 = vadd.f32 %v985, 1e-05
    %v988 = vrsqrt.pop %v986
    %v989 = vrsqrt.pop %v987
    %v990 = vmul.f32 %v974, %v988
    %v991 = vmul.f32 %v975, %v989
    %v992 = vld [vmem:[#allocation5 + $0x110] sm:$0x1]
    %v993 = vlaneseq
    %v994 = vshrl.u32 %v993, 7
    %v995 = vsub.s32 0, %v994
    %v996 = vrot.slane %v992, %v995
    %v997 = vmul.f32 %v990, %v996
    %v998 = vmul.f32 %v991, %v996
    %v999 = vld [vmem:[#allocation5 + $0x118] sm:$0x1]
    %v1000 = vlaneseq
    %v1001 = vshrl.u32 %v1000, 7
    %v1002 = vsub.s32 0, %v1001
    %v1003 = vrot.slane %v999, %v1002
    %v1004 = vadd.f32 %v997, %v1003
    %v1005 = vadd.f32 %v998, %v1003
    %v1006 = vld [vmem:[#allocation5 + $0x120] sm:$0xff]
    %v1007 = vld [vmem:[#allocation5 + $0x128] sm:$0xff]
    %v1008 = vld [vmem:[#allocation5 + $0x130] sm:$0xff]
    %v1009 = vld [vmem:[#allocation5 + $0x138] sm:$0xff]
    %v1010 = vld [vmem:[#allocation5 + $0x140] sm:$0x1]
    %v1011 = vlaneseq
    %v1012 = vshrl.u32 %v1011, 7
    %v1013 = vsub.s32 0, %v1012
    %v1014 = vrot.slane %v1010, %v1013
    %v1016 = vsel %vm59, %v1004, 0
    %v1019 = vsel %vm59, %v1005, 0
    %1021 = vmatprep.subr.mxu0 0.0
    %1022 = vmatpush1.msra.mxu0 %v1006
    %1023 = vmatprep.subr.mxu0 0.0
    %1024 = vmatpush1.msra.mxu0 %v1007
    %1025 = vmatprep.subr.mxu0 0.0
    %1026 = vmatpush1.msra.mxu0 %v1008
    %1027 = vmatprep.subr.mxu0 0.0
    %1028 = vmatpush1.msra.mxu0 %v1009
    %1029 = vmatprep.subr.mxu0 0.0
    %1030 = vmatpush1.msra.mxu0 0.0
    %1031 = vmatprep.subr.mxu0 0.0
    %1032 = vmatpush1.msra.mxu0 0.0
    %1033 = vmatprep.subr.mxu0 0.0
    %1034 = vmatpush1.msra.mxu0 0.0
    %1035 = vmatprep.subr.mxu0 0.0
    %1036 = vmatpush1.msra.mxu0 0.0
    %1037 = vmatprep.subr.mxu0 0.0
    %1038 = vmatpush1.msra.mxu0 0.0
    %1039 = vmatprep.subr.mxu0 0.0
    %1040 = vmatpush1.msra.mxu0 0.0
    %1041 = vmatprep.subr.mxu0 0.0
    %1042 = vmatpush1.msra.mxu0 0.0
    %1043 = vmatprep.subr.mxu0 0.0
    %1044 = vmatpush1.msra.mxu0 0.0
    %1045 = vmatprep.subr.mxu0 0.0
    %1046 = vmatpush1.msra.mxu0 0.0
    %1047 = vmatprep.subr.mxu0 0.0
    %1048 = vmatpush1.msra.mxu0 0.0
    %1049 = vmatprep.subr.mxu0 0.0
    %1050 = vmatpush1.msra.mxu0 0.0
    %1051 = vmatprep.subr.mxu0 0.0
    %1052 = vmatpush1.msra.mxu0 0.0
    %1053 = vmatprep.subr.mxu0 0.0
    %1054 = vmatpush1.msra.mxu0 0.0
    %1055 = vmatprep.subr.mxu0 0.0
    %1056 = vmatpush1.msra.mxu0 0.0
    %1057 = vmatprep.subr.mxu0 0.0
    %1058 = vmatpush1.msra.mxu0 0.0
    %1059 = vmatprep.subr.mxu0 0.0
    %1060 = vmatpush1.msra.mxu0 0.0
    %1061 = vmatprep.subr.mxu0 0.0
    %1062 = vmatpush1.msra.mxu0 0.0
    %1063 = vmatprep.subr.mxu0 0.0
    %1064 = vmatpush1.msra.mxu0 0.0
    %1065 = vmatprep.subr.mxu0 0.0
    %1066 = vmatpush1.msra.mxu0 0.0
    %1067 = vmatprep.subr.mxu0 0.0
    %1068 = vmatpush1.msra.mxu0 0.0
    %1069 = vmatprep.subr.mxu0 0.0
    %1070 = vmatpush1.msra.mxu0 0.0
    %1071 = vmatprep.subr.mxu0 0.0
    %1072 = vmatpush1.msra.mxu0 0.0
    %1073 = vmatprep.subr.mxu0 0.0
    %1074 = vmatpush1.msra.mxu0 0.0
    %1075 = vmatprep.subr.mxu0 0.0
    %1076 = vmatpush1.msra.mxu0 0.0
    %1077 = vmatprep.subr.mxu0 0.0
    %1078 = vmatpush1.msra.mxu0 0.0
    %1079 = vmatprep.subr.mxu0 0.0
    %1080 = vmatpush1.msra.mxu0 0.0
    %1081 = vmatprep.subr.mxu0 0.0
    %1082 = vmatpush1.msra.mxu0 0.0
    %1083 = vmatprep.subr.mxu0 0.0
    %1084 = vmatpush1.msra.mxu0 0.0
    %1085 = vmatprep.mubr.f32.mxu0 0.0
    %1086 = vmatmul.mubr.f32.gmra.mrb[0].mxu0 %v1016
    %v1087 = vpop.f32.mrb[0].mxu0
    %v1088 = vadd.f32 %v1014, %v1087
    %v1089 = vpop.f32.mrb[0].mxu0
    %1090 = vmatprep.mubr.f32.mxu0 0.0
    %1091 = vmatmul.mubr.f32.gmra.mrb[0].mxu0 %v1019
    %v1092 = vpop.f32.mrb[0].mxu0
    %v1093 = vadd.f32 %v1014, %v1092
    %v1094 = vpop.f32.mrb[0].mxu0
    %1095 = vdwg.mxu0
    %v1096 = vmul.f32 %v1088, %v146
    %v1097 = vmul.f32 %v1088, %v148
    %v1098 = vmul.f32 %v1088, %v150
    %v1099 = vmul.f32 %v1088, %v152
    %v1100 = vmul.f32 %v1093, %v146
    %v1101 = vmul.f32 %v1093, %v148
    %v1102 = vmul.f32 %v1093, %v150
    %v1103 = vmul.f32 %v1093, %v152
    %v1104 = vmul.f32 %v1088, %v166
    %v1105 = vmul.f32 %v1088, %v168
    %v1106 = vmul.f32 %v1088, %v170
    %v1107 = vmul.f32 %v1088, %v172
    %v1108 = vmul.f32 %v1093, %v166
    %v1109 = vmul.f32 %v1093, %v168
    %v1110 = vmul.f32 %v1093, %v170
    %v1111 = vmul.f32 %v1093, %v172
    %1116 = vrot.lane.b32.xlu0 %v1096, 96
    %v1117 = vpop.permute.xlu0 %1116
    %1118 = vrot.lane.b32.xlu0 %v1097, 96
    %v1119 = vpop.permute.xlu0 %1118
    %1120 = vrot.lane.b32.xlu0 %v1098, 96
    %v1121 = vpop.permute.xlu0 %1120
    %1122 = vrot.lane.b32.xlu0 %v1099, 96
    %v1123 = vpop.permute.xlu0 %1122
    %v1125 = vsel %vm59, %v1088, 0
    %v1127 = vsel %vm59, %v1117, 0
    %v1129 = vsel %vm59, %v1119, 0
    %v1131 = vsel %vm59, %v1121, 0
    %v1133 = vsel %vm59, %v1123, 0
    %1135 = vmatprep.subr.mxu0 0.0
    %1136 = vmatpush1.xpose.msra.mxu0 %v1127
    %1137 = vmatprep.subr.mxu0 0.0
    %1138 = vmatpush1.xpose.msra.mxu0 %v1129
    %1139 = vmatprep.subr.mxu0 0.0
    %1140 = vmatpush1.xpose.msra.mxu0 %v1131
    %1141 = vmatprep.subr.mxu0 0.0
    %1142 = vmatpush1.xpose.msra.mxu0 %v1133
    %1143 = vmatprep.subr.mxu0 0.0
    %1144 = vmatpush1.xpose.msra.mxu0 0.0
    %1145 = vmatprep.subr.mxu0 0.0
    %1146 = vmatpush1.xpose.msra.mxu0 0.0
    %1147 = vmatprep.subr.mxu0 0.0
    %1148 = vmatpush1.xpose.msra.mxu0 0.0
    %1149 = vmatprep.subr.mxu0 0.0
    %1150 = vmatpush1.xpose.msra.mxu0 0.0
    %1151 = vmatprep.subr.mxu0 0.0
    %1152 = vmatpush1.xpose.msra.mxu0 0.0
    %1153 = vmatprep.subr.mxu0 0.0
    %1154 = vmatpush1.xpose.msra.mxu0 0.0
    %1155 = vmatprep.subr.mxu0 0.0
    %1156 = vmatpush1.xpose.msra.mxu0 0.0
    %1157 = vmatprep.subr.mxu0 0.0
    %1158 = vmatpush1.xpose.msra.mxu0 0.0
    %1159 = vmatprep.subr.mxu0 0.0
    %1160 = vmatpush1.xpose.msra.mxu0 0.0
    %1161 = vmatprep.subr.mxu0 0.0
    %1162 = vmatpush1.xpose.msra.mxu0 0.0
    %1163 = vmatprep.subr.mxu0 0.0
    %1164 = vmatpush1.xpose.msra.mxu0 0.0
    %1165 = vmatprep.subr.mxu0 0.0
    %1166 = vmatpush1.xpose.msra.mxu0 0.0
    %1167 = vmatprep.subr.mxu0 0.0
    %1168 = vmatpush1.xpose.msra.mxu0 0.0
    %1169 = vmatprep.subr.mxu0 0.0
    %1170 = vmatpush1.xpose.msra.mxu0 0.0
    %1171 = vmatprep.subr.mxu0 0.0
    %1172 = vmatpush1.xpose.msra.mxu0 0.0
    %1173 = vmatprep.subr.mxu0 0.0
    %1174 = vmatpush1.xpose.msra.mxu0 0.0
    %1175 = vmatprep.subr.mxu0 0.0
    %1176 = vmatpush1.xpose.msra.mxu0 0.0
    %1177 = vmatprep.subr.mxu0 0.0
    %1178 = vmatpush1.xpose.msra.mxu0 0.0
    %1179 = vmatprep.subr.mxu0 0.0
    %1180 = vmatpush1.xpose.msra.mxu0 0.0
    %1181 = vmatprep.subr.mxu0 0.0
    %1182 = vmatpush1.xpose.msra.mxu0 0.0
    %1183 = vmatprep.subr.mxu0 0.0
    %1184 = vmatpush1.xpose.msra.mxu0 0.0
    %1185 = vmatprep.subr.mxu0 0.0
    %1186 = vmatpush1.xpose.msra.mxu0 0.0
    %1187 = vmatprep.subr.mxu0 0.0
    %1188 = vmatpush1.xpose.msra.mxu0 0.0
    %1189 = vmatprep.subr.mxu0 0.0
    %1190 = vmatpush1.xpose.msra.mxu0 0.0
    %1191 = vmatprep.subr.mxu0 0.0
    %1192 = vmatpush1.xpose.msra.mxu0 0.0
    %1193 = vmatprep.subr.mxu0 0.0
    %1194 = vmatpush1.xpose.msra.mxu0 0.0
    %1195 = vmatprep.subr.mxu0 0.0
    %1196 = vmatpush1.xpose.msra.mxu0 0.0
    %1197 = vmatprep.subr.mxu0 0.0
    %1198 = vmatpush1.xpose.msra.mxu0 0.0
    %1199 = vmatprep.mubr.f32.mxu0 0.0
    %1200 = vmatmul.mubr.f32.gmra.mrb[0].mxu0 %v1125
    %v1201 = vpop.f32.mrb[0].mxu0
    %v1202 = vadd.f32 0.0, %v1201
    %v1203 = vpop.f32.mrb[0].mxu0
    %1204 = vdwg.mxu0
    %1209 = vrot.lane.b32.xlu0 %v1100, 96
    %v1210 = vpop.permute.xlu0 %1209
    %1211 = vrot.lane.b32.xlu0 %v1101, 96
    %v1212 = vpop.permute.xlu0 %1211
    %1213 = vrot.lane.b32.xlu0 %v1102, 96
    %v1214 = vpop.permute.xlu0 %1213
    %1215 = vrot.lane.b32.xlu0 %v1103, 96
    %v1216 = vpop.permute.xlu0 %1215
    %v1218 = vsel %vm59, %v1093, 0
    %v1220 = vsel %vm59, %v1210, 0
    %v1222 = vsel %vm59, %v1212, 0
    %v1224 = vsel %vm59, %v1214, 0
    %v1226 = vsel %vm59, %v1216, 0
    %1228 = vmatprep.subr.mxu0 0.0
    %1229 = vmatpush1.xpose.msra.mxu0 %v1220
    %1230 = vmatprep.subr.mxu0 0.0
    %1231 = vmatpush1.xpose.msra.mxu0 %v1222
    %1232 = vmatprep.subr.mxu0 0.0
    %1233 = vmatpush1.xpose.msra.mxu0 %v1224
    %1234 = vmatprep.subr.mxu0 0.0
    %1235 = vmatpush1.xpose.msra.mxu0 %v1226
    %1236 = vmatprep.subr.mxu0 0.0
    %1237 = vmatpush1.xpose.msra.mxu0 0.0
    %1238 = vmatprep.subr.mxu0 0.0
    %1239 = vmatpush1.xpose.msra.mxu0 0.0
    %1240 = vmatprep.subr.mxu0 0.0
    %1241 = vmatpush1.xpose.msra.mxu0 0.0
    %1242 = vmatprep.subr.mxu0 0.0
    %1243 = vmatpush1.xpose.msra.mxu0 0.0
    %1244 = vmatprep.subr.mxu0 0.0
    %1245 = vmatpush1.xpose.msra.mxu0 0.0
    %1246 = vmatprep.subr.mxu0 0.0
    %1247 = vmatpush1.xpose.msra.mxu0 0.0
    %1248 = vmatprep.subr.mxu0 0.0
    %1249 = vmatpush1.xpose.msra.mxu0 0.0
    %1250 = vmatprep.subr.mxu0 0.0
    %1251 = vmatpush1.xpose.msra.mxu0 0.0
    %1252 = vmatprep.subr.mxu0 0.0
    %1253 = vmatpush1.xpose.msra.mxu0 0.0
    %1254 = vmatprep.subr.mxu0 0.0
    %1255 = vmatpush1.xpose.msra.mxu0 0.0
    %1256 = vmatprep.subr.mxu0 0.0
    %1257 = vmatpush1.xpose.msra.mxu0 0.0
    %1258 = vmatprep.subr.mxu0 0.0
    %1259 = vmatpush1.xpose.msra.mxu0 0.0
    %1260 = vmatprep.subr.mxu0 0.0
    %1261 = vmatpush1.xpose.msra.mxu0 0.0
    %1262 = vmatprep.subr.mxu0 0.0
    %1263 = vmatpush1.xpose.msra.mxu0 0.0
    %1264 = vmatprep.subr.mxu0 0.0
    %1265 = vmatpush1.xpose.msra.mxu0 0.0
    %1266 = vmatprep.subr.mxu0 0.0
    %1267 = vmatpush1.xpose.msra.mxu0 0.0
    %1268 = vmatprep.subr.mxu0 0.0
    %1269 = vmatpush1.xpose.msra.mxu0 0.0
    %1270 = vmatprep.subr.mxu0 0.0
    %1271 = vmatpush1.xpose.msra.mxu0 0.0
    %1272 = vmatprep.subr.mxu0 0.0
    %1273 = vmatpush1.xpose.msra.mxu0 0.0
    %1274 = vmatprep.subr.mxu0 0.0
    %1275 = vmatpush1.xpose.msra.mxu0 0.0
    %1276 = vmatprep.subr.mxu0 0.0
    %1277 = vmatpush1.xpose.msra.mxu0 0.0
    %1278 = vmatprep.subr.mxu0 0.0
    %1279 = vmatpush1.xpose.msra.mxu0 0.0
    %1280 = vmatprep.subr.mxu0 0.0
    %1281 = vmatpush1.xpose.msra.mxu0 0.0
    %1282 = vmatprep.subr.mxu0 0.0
    %1283 = vmatpush1.xpose.msra.mxu0 0.0
    %1284 = vmatprep.subr.mxu0 0.0
    %1285 = vmatpush1.xpose.msra.mxu0 0.0
    %1286 = vmatprep.subr.mxu0 0.0
    %1287 = vmatpush1.xpose.msra.mxu0 0.0
    %1288 = vmatprep.subr.mxu0 0.0
    %1289 = vmatpush1.xpose.msra.mxu0 0.0
    %1290 = vmatprep.subr.mxu0 0.0
    %1291 = vmatpush1.xpose.msra.mxu0 0.0
    %1292 = vmatprep.mubr.f32.mxu0 0.0
    %1293 = vmatmul.mubr.f32.gmra.mrb[0].mxu0 %v1218
    %v1294 = vpop.f32.mrb[0].mxu0
    %v1295 = vadd.f32 0.0, %v1294
    %v1296 = vpop.f32.mrb[0].mxu0
    %1297 = vdwg.mxu0
    %v1298 = vmul.f32 %v1202, 1.442695
    %v1299 = vpow.pop %v1298
    %v1300 = vmul.f32 %v1295, 1.442695
    %v1301 = vpow.pop %v1300
    %v1303 = vsel %vm59, %v1299, 0
    %v1306 = vsel %vm59, %v1301, 0
    %1308 = vmatprep.subr.mxu0 0.0
    %1309 = vmatpush1.msra.mxu0 %v44
    %1310 = vmatprep.subr.mxu0 0.0
    %1311 = vmatpush1.msra.mxu0 %v45
    %1312 = vmatprep.subr.mxu0 0.0
    %1313 = vmatpush1.msra.mxu0 %v46
    %1314 = vmatprep.subr.mxu0 0.0
    %1315 = vmatpush1.msra.mxu0 %v47
    %1316 = vmatprep.subr.mxu0 0.0
    %1317 = vmatpush1.msra.mxu0 0.0
    %1318 = vmatprep.subr.mxu0 0.0
    %1319 = vmatpush1.msra.mxu0 0.0
    %1320 = vmatprep.subr.mxu0 0.0
    %1321 = vmatpush1.msra.mxu0 0.0
    %1322 = vmatprep.subr.mxu0 0.0
    %1323 = vmatpush1.msra.mxu0 0.0
    %1324 = vmatprep.subr.mxu0 0.0
    %1325 = vmatpush1.msra.mxu0 0.0
    %1326 = vmatprep.subr.mxu0 0.0
    %1327 = vmatpush1.msra.mxu0 0.0
    %1328 = vmatprep.subr.mxu0 0.0
    %1329 = vmatpush1.msra.mxu0 0.0
    %1330 = vmatprep.subr.mxu0 0.0
    %1331 = vmatpush1.msra.mxu0 0.0
    %1332 = vmatprep.subr.mxu0 0.0
    %1333 = vmatpush1.msra.mxu0 0.0
    %1334 = vmatprep.subr.mxu0 0.0
    %1335 = vmatpush1.msra.mxu0 0.0
    %1336 = vmatprep.subr.mxu0 0.0
    %1337 = vmatpush1.msra.mxu0 0.0
    %1338 = vmatprep.subr.mxu0 0.0
    %1339 = vmatpush1.msra.mxu0 0.0
    %1340 = vmatprep.subr.mxu0 0.0
    %1341 = vmatpush1.msra.mxu0 0.0
    %1342 = vmatprep.subr.mxu0 0.0
    %1343 = vmatpush1.msra.mxu0 0.0
    %1344 = vmatprep.subr.mxu0 0.0
    %1345 = vmatpush1.msra.mxu0 0.0
    %1346 = vmatprep.subr.mxu0 0.0
    %1347 = vmatpush1.msra.mxu0 0.0
    %1348 = vmatprep.subr.mxu0 0.0
    %1349 = vmatpush1.msra.mxu0 0.0
    %1350 = vmatprep.subr.mxu0 0.0
    %1351 = vmatpush1.msra.mxu0 0.0
    %1352 = vmatprep.subr.mxu0 0.0
    %1353 = vmatpush1.msra.mxu0 0.0
    %1354 = vmatprep.subr.mxu0 0.0
    %1355 = vmatpush1.msra.mxu0 0.0
    %1356 = vmatprep.subr.mxu0 0.0
    %1357 = vmatpush1.msra.mxu0 0.0
    %1358 = vmatprep.subr.mxu0 0.0
    %1359 = vmatpush1.msra.mxu0 0.0
    %1360 = vmatprep.subr.mxu0 0.0
    %1361 = vmatpush1.msra.mxu0 0.0
    %1362 = vmatprep.subr.mxu0 0.0
    %1363 = vmatpush1.msra.mxu0 0.0
    %1364 = vmatprep.subr.mxu0 0.0
    %1365 = vmatpush1.msra.mxu0 0.0
    %1366 = vmatprep.subr.mxu0 0.0
    %1367 = vmatpush1.msra.mxu0 0.0
    %1368 = vmatprep.subr.mxu0 0.0
    %1369 = vmatpush1.msra.mxu0 0.0
    %1370 = vmatprep.subr.mxu0 0.0
    %1371 = vmatpush1.msra.mxu0 0.0
    %1372 = vmatprep.mubr.f32.mxu0 0.0
    %1373 = vmatmul.mubr.f32.gmra.mrb[0].mxu0 %v1303
    %v1374 = vpop.f32.mrb[0].mxu0
    %v1375 = vadd.f32 0.0, %v1374
    %v1376 = vpop.f32.mrb[0].mxu0
    %1377 = vmatprep.mubr.f32.mxu0 0.0
    %1378 = vmatmul.mubr.f32.gmra.mrb[0].mxu0 %v1306
    %v1379 = vpop.f32.mrb[0].mxu0
    %v1380 = vadd.f32 0.0, %v1379
    %v1381 = vpop.f32.mrb[0].mxu0
    %1382 = vdwg.mxu0
    %v1383 = vrcp.pop %v1375
    %v1384 = vrcp.pop %v1380
    %v1385 = vmul.f32 %v1375, %v1383
    %v1386 = vmul.f32 %v1380, %v1384
    %v1387 = vsub.f32 2.0, %v1385
    %v1388 = vsub.f32 2.0, %v1386
    %v1389 = vmul.f32 %v1383, %v1387
    %v1390 = vmul.f32 %v1384, %v1388
    %v1391 = vmul.f32 %v1299, %v1389
    %v1392 = vmul.f32 %v1301, %v1390
    %1397 = vrot.lane.b32.xlu0 %v1104, 64
    %v1398 = vpop.permute.xlu0 %1397
    %1399 = vrot.lane.b32.xlu0 %v1105, 64
    %v1400 = vpop.permute.xlu0 %1399
    %1401 = vrot.lane.b32.xlu0 %v1106, 64
    %v1402 = vpop.permute.xlu0 %1401
    %1403 = vrot.lane.b32.xlu0 %v1107, 64
    %v1404 = vpop.permute.xlu0 %1403
    %v1410 = vsel %vm59, %v1391, 0
    %1412 = vmatprep.subr.mxu0 0.0
    %1413 = vmatpush1.msra.mxu0 %v1398
    %1414 = vmatprep.subr.mxu0 0.0
    %1415 = vmatpush1.msra.mxu0 %v1400
    %1416 = vmatprep.subr.mxu0 0.0
    %1417 = vmatpush1.msra.mxu0 %v1402
    %1418 = vmatprep.subr.mxu0 0.0
    %1419 = vmatpush1.msra.mxu0 %v1404
    %1420 = vmatprep.subr.mxu0 0.0
    %1421 = vmatpush1.msra.mxu0 0.0
    %1422 = vmatprep.subr.mxu0 0.0
    %1423 = vmatpush1.msra.mxu0 0.0
    %1424 = vmatprep.subr.mxu0 0.0
    %1425 = vmatpush1.msra.mxu0 0.0
    %1426 = vmatprep.subr.mxu0 0.0
    %1427 = vmatpush1.msra.mxu0 0.0
    %1428 = vmatprep.subr.mxu0 0.0
    %1429 = vmatpush1.msra.mxu0 0.0
    %1430 = vmatprep.subr.mxu0 0.0
    %1431 = vmatpush1.msra.mxu0 0.0
    %1432 = vmatprep.subr.mxu0 0.0
    %1433 = vmatpush1.msra.mxu0 0.0
    %1434 = vmatprep.subr.mxu0 0.0
    %1435 = vmatpush1.msra.mxu0 0.0
    %1436 = vmatprep.subr.mxu0 0.0
    %1437 = vmatpush1.msra.mxu0 0.0
    %1438 = vmatprep.subr.mxu0 0.0
    %1439 = vmatpush1.msra.mxu0 0.0
    %1440 = vmatprep.subr.mxu0 0.0
    %1441 = vmatpush1.msra.mxu0 0.0
    %1442 = vmatprep.subr.mxu0 0.0
    %1443 = vmatpush1.msra.mxu0 0.0
    %1444 = vmatprep.subr.mxu0 0.0
    %1445 = vmatpush1.msra.mxu0 0.0
    %1446 = vmatprep.subr.mxu0 0.0
    %1447 = vmatpush1.msra.mxu0 0.0
    %1448 = vmatprep.subr.mxu0 0.0
    %1449 = vmatpush1.msra.mxu0 0.0
    %1450 = vmatprep.subr.mxu0 0.0
    %1451 = vmatpush1.msra.mxu0 0.0
    %1452 = vmatprep.subr.mxu0 0.0
    %1453 = vmatpush1.msra.mxu0 0.0
    %1454 = vmatprep.subr.mxu0 0.0
    %1455 = vmatpush1.msra.mxu0 0.0
    %1456 = vmatprep.subr.mxu0 0.0
    %1457 = vmatpush1.msra.mxu0 0.0
    %1458 = vmatprep.subr.mxu0 0.0
    %1459 = vmatpush1.msra.mxu0 0.0
    %1460 = vmatprep.subr.mxu0 0.0
    %1461 = vmatpush1.msra.mxu0 0.0
    %1462 = vmatprep.subr.mxu0 0.0
    %1463 = vmatpush1.msra.mxu0 0.0
    %1464 = vmatprep.subr.mxu0 0.0
    %1465 = vmatpush1.msra.mxu0 0.0
    %1466 = vmatprep.subr.mxu0 0.0
    %1467 = vmatpush1.msra.mxu0 0.0
    %1468 = vmatprep.subr.mxu0 0.0
    %1469 = vmatpush1.msra.mxu0 0.0
    %1470 = vmatprep.subr.mxu0 0.0
    %1471 = vmatpush1.msra.mxu0 0.0
    %1472 = vmatprep.subr.mxu0 0.0
    %1473 = vmatpush1.msra.mxu0 0.0
    %1474 = vmatprep.subr.mxu0 0.0
    %1475 = vmatpush1.msra.mxu0 0.0
    %1476 = vmatprep.mubr.f32.mxu0 0.0
    %1477 = vmatmul.mubr.f32.gmra.mrb[0].mxu0 %v1410
    %v1478 = vpop.f32.mrb[0].mxu0
    %v1479 = vadd.f32 0.0, %v1478
    %v1480 = vpop.f32.mrb[0].mxu0
    %1481 = vdwg.mxu0
    %1486 = vrot.lane.b32.xlu0 %v1108, 64
    %v1487 = vpop.permute.xlu0 %1486
    %1488 = vrot.lane.b32.xlu0 %v1109, 64
    %v1489 = vpop.permute.xlu0 %1488
    %1490 = vrot.lane.b32.xlu0 %v1110, 64
    %v1491 = vpop.permute.xlu0 %1490
    %1492 = vrot.lane.b32.xlu0 %v1111, 64
    %v1493 = vpop.permute.xlu0 %1492
    %v1499 = vsel %vm59, %v1392, 0
    %1501 = vmatprep.subr.mxu0 0.0
    %1502 = vmatpush1.msra.mxu0 %v1487
    %1503 = vmatprep.subr.mxu0 0.0
    %1504 = vmatpush1.msra.mxu0 %v1489
    %1505 = vmatprep.subr.mxu0 0.0
    %1506 = vmatpush1.msra.mxu0 %v1491
    %1507 = vmatprep.subr.mxu0 0.0
    %1508 = vmatpush1.msra.mxu0 %v1493
    %1509 = vmatprep.subr.mxu0 0.0
    %1510 = vmatpush1.msra.mxu0 0.0
    %1511 = vmatprep.subr.mxu0 0.0
    %1512 = vmatpush1.msra.mxu0 0.0
    %1513 = vmatprep.subr.mxu0 0.0
    %1514 = vmatpush1.msra.mxu0 0.0
    %1515 = vmatprep.subr.mxu0 0.0
    %1516 = vmatpush1.msra.mxu0 0.0
    %1517 = vmatprep.subr.mxu0 0.0
    %1518 = vmatpush1.msra.mxu0 0.0
    %1519 = vmatprep.subr.mxu0 0.0
    %1520 = vmatpush1.msra.mxu0 0.0
    %1521 = vmatprep.subr.mxu0 0.0
    %1522 = vmatpush1.msra.mxu0 0.0
    %1523 = vmatprep.subr.mxu0 0.0
    %1524 = vmatpush1.msra.mxu0 0.0
    %1525 = vmatprep.subr.mxu0 0.0
    %1526 = vmatpush1.msra.mxu0 0.0
    %1527 = vmatprep.subr.mxu0 0.0
    %1528 = vmatpush1.msra.mxu0 0.0
    %1529 = vmatprep.subr.mxu0 0.0
    %1530 = vmatpush1.msra.mxu0 0.0
    %1531 = vmatprep.subr.mxu0 0.0
    %1532 = vmatpush1.msra.mxu0 0.0
    %1533 = vmatprep.subr.mxu0 0.0
    %1534 = vmatpush1.msra.mxu0 0.0
    %1535 = vmatprep.subr.mxu0 0.0
    %1536 = vmatpush1.msra.mxu0 0.0
    %1537 = vmatprep.subr.mxu0 0.0
    %1538 = vmatpush1.msra.mxu0 0.0
    %1539 = vmatprep.subr.mxu0 0.0
    %1540 = vmatpush1.msra.mxu0 0.0
    %1541 = vmatprep.subr.mxu0 0.0
    %1542 = vmatpush1.msra.mxu0 0.0
    %1543 = vmatprep.subr.mxu0 0.0
    %1544 = vmatpush1.msra.mxu0 0.0
    %1545 = vmatprep.subr.mxu0 0.0
    %1546 = vmatpush1.msra.mxu0 0.0
    %1547 = vmatprep.subr.mxu0 0.0
    %1548 = vmatpush1.msra.mxu0 0.0
    %1549 = vmatprep.subr.mxu0 0.0
    %1550 = vmatpush1.msra.mxu0 0.0
    %1551 = vmatprep.subr.mxu0 0.0
    %1552 = vmatpush1.msra.mxu0 0.0
    %1553 = vmatprep.subr.mxu0 0.0
    %1554 = vmatpush1.msra.mxu0 0.0
    %1555 = vmatprep.subr.mxu0 0.0
    %1556 = vmatpush1.msra.mxu0 0.0
    %1557 = vmatprep.subr.mxu0 0.0
    %1558 = vmatpush1.msra.mxu0 0.0
    %1559 = vmatprep.subr.mxu0 0.0
    %1560 = vmatpush1.msra.mxu0 0.0
    %1561 = vmatprep.subr.mxu0 0.0
    %1562 = vmatpush1.msra.mxu0 0.0
    %1563 = vmatprep.subr.mxu0 0.0
    %1564 = vmatpush1.msra.mxu0 0.0
    %1565 = vmatprep.mubr.f32.mxu0 0.0
    %1566 = vmatmul.mubr.f32.gmra.mrb[0].mxu0 %v1499
    %v1567 = vpop.f32.mrb[0].mxu0
    %v1568 = vadd.f32 0.0, %v1567
    %v1569 = vpop.f32.mrb[0].mxu0
    %1570 = vdwg.mxu0
    %v1571 = vld [vmem:[#allocation5 + $0x148] sm:$0xff]
    %v1572 = vld [vmem:[#allocation5 + $0x150] sm:$0xff]
    %v1573 = vld [vmem:[#allocation5 + $0x158] sm:$0xff]
    %v1574 = vld [vmem:[#allocation5 + $0x160] sm:$0xff]
    %v1575 = vld [vmem:[#allocation5 + $0x168] sm:$0x1]
    %v1576 = vlaneseq
    %v1577 = vshrl.u32 %v1576, 7
    %v1578 = vsub.s32 0, %v1577
    %v1579 = vrot.slane %v1575, %v1578
    %v1581 = vsel %vm59, %v1479, 0
    %v1584 = vsel %vm59, %v1568, 0
    %1586 = vmatprep.subr.mxu0 0.0
    %1587 = vmatpush1.msra.mxu0 %v1571
    %1588 = vmatprep.subr.mxu0 0.0
    %1589 = vmatpush1.msra.mxu0 %v1572
    %1590 = vmatprep.subr.mxu0 0.0
    %1591 = vmatpush1.msra.mxu0 %v1573
    %1592 = vmatprep.subr.mxu0 0.0
    %1593 = vmatpush1.msra.mxu0 %v1574
    %1594 = vmatprep.subr.mxu0 0.0
    %1595 = vmatpush1.msra.mxu0 0.0
    %1596 = vmatprep.subr.mxu0 0.0
    %1597 = vmatpush1.msra.mxu0 0.0
    %1598 = vmatprep.subr.mxu0 0.0
    %1599 = vmatpush1.msra.mxu0 0.0
    %1600 = vmatprep.subr.mxu0 0.0
    %1601 = vmatpush1.msra.mxu0 0.0
    %1602 = vmatprep.subr.mxu0 0.0
    %1603 = vmatpush1.msra.mxu0 0.0
    %1604 = vmatprep.subr.mxu0 0.0
    %1605 = vmatpush1.msra.mxu0 0.0
    %1606 = vmatprep.subr.mxu0 0.0
    %1607 = vmatpush1.msra.mxu0 0.0
    %1608 = vmatprep.subr.mxu0 0.0
    %1609 = vmatpush1.msra.mxu0 0.0
    %1610 = vmatprep.subr.mxu0 0.0
    %1611 = vmatpush1.msra.mxu0 0.0
    %1612 = vmatprep.subr.mxu0 0.0
    %1613 = vmatpush1.msra.mxu0 0.0
    %1614 = vmatprep.subr.mxu0 0.0
    %1615 = vmatpush1.msra.mxu0 0.0
    %1616 = vmatprep.subr.mxu0 0.0
    %1617 = vmatpush1.msra.mxu0 0.0
    %1618 = vmatprep.subr.mxu0 0.0
    %1619 = vmatpush1.msra.mxu0 0.0
    %1620 = vmatprep.subr.mxu0 0.0
    %1621 = vmatpush1.msra.mxu0 0.0
    %1622 = vmatprep.subr.mxu0 0.0
    %1623 = vmatpush1.msra.mxu0 0.0
    %1624 = vmatprep.subr.mxu0 0.0
    %1625 = vmatpush1.msra.mxu0 0.0
    %1626 = vmatprep.subr.mxu0 0.0
    %1627 = vmatpush1.msra.mxu0 0.0
    %1628 = vmatprep.subr.mxu0 0.0
    %1629 = vmatpush1.msra.mxu0 0.0
    %1630 = vmatprep.subr.mxu0 0.0
    %1631 = vmatpush1.msra.mxu0 0.0
    %1632 = vmatprep.subr.mxu0 0.0
    %1633 = vmatpush1.msra.mxu0 0.0
    %1634 = vmatprep.subr.mxu0 0.0
    %1635 = vmatpush1.msra.mxu0 0.0
    %1636 = vmatprep.subr.mxu0 0.0
    %1637 = vmatpush1.msra.mxu0 0.0
    %1638 = vmatprep.subr.mxu0 0.0
    %1639 = vmatpush1.msra.mxu0 0.0
    %1640 = vmatprep.subr.mxu0 0.0
    %1641 = vmatpush1.msra.mxu0 0.0
    %1642 = vmatprep.subr.mxu0 0.0
    %1643 = vmatpush1.msra.mxu0 0.0
    %1644 = vmatprep.subr.mxu0 0.0
    %1645 = vmatpush1.msra.mxu0 0.0
    %1646 = vmatprep.subr.mxu0 0.0
    %1647 = vmatpush1.msra.mxu0 0.0
    %1648 = vmatprep.subr.mxu0 0.0
    %1649 = vmatpush1.msra.mxu0 0.0
    %1650 = vmatprep.mubr.f32.mxu0 0.0
    %1651 = vmatmul.mubr.f32.gmra.mrb[0].mxu0 %v1581
    %v1652 = vpop.f32.mrb[0].mxu0
    %v1653 = vadd.f32 %v1579, %v1652
    %v1654 = vpop.f32.mrb[0].mxu0
    %1655 = vmatprep.mubr.f32.mxu0 0.0
    %1656 = vmatmul.mubr.f32.gmra.mrb[0].mxu0 %v1584
    %v1657 = vpop.f32.mrb[0].mxu0
    %v1658 = vadd.f32 %v1579, %v1657
    %v1659 = vpop.f32.mrb[0].mxu0
    %1660 = vdwg.mxu0
    %v1661 = vadd.f32 %v1004, %v1653
    %v1662 = vadd.f32 %v1005, %v1658
    %v1663 = vsel %vm59, %v1661, 0.0
    %1664 = vadd.xlane.f32.xlu0 %v1663
    %v1665 = vpop.xlane.xlu0 %1664
    %v1666 = vsel %vm59, %v1662, 0.0
    %1667 = vadd.xlane.f32.xlu0 %v1666
    %v1668 = vpop.xlane.xlu0 %1667
    %v1669 = vmul.f32 %v1665, %v742
    %v1670 = vmul.f32 %v1668, %v742
    %v1671 = vsub.f32 %v1661, %v1669
    %v1672 = vsub.f32 %v1662, %v1670
    %v1673 = vmul.f32 %v1671, %v1671
    %v1674 = vmul.f32 %v1672, %v1672
    %v1675 = vsel %vm59, %v1673, 0.0
    %1676 = vadd.xlane.f32.xlu0 %v1675
    %v1677 = vpop.xlane.xlu0 %1676
    %v1678 = vsel %vm59, %v1674, 0.0
    %1679 = vadd.xlane.f32.xlu0 %v1678
    %v1680 = vpop.xlane.xlu0 %1679
    %v1681 = vmul.f32 %v1677, %v742
    %v1682 = vmul.f32 %v1680, %v742
    %v1683 = vadd.f32 %v1681, 1e-05
    %v1684 = vadd.f32 %v1682, 1e-05
    %v1685 = vrsqrt.pop %v1683
    %v1686 = vrsqrt.pop %v1684
    %v1687 = vmul.f32 %v1671, %v1685
    %v1688 = vmul.f32 %v1672, %v1686
    %v1689 = vld [vmem:[#allocation5 + $0x1e0] sm:$0x1]
    %v1690 = vlaneseq
    %v1691 = vshrl.u32 %v1690, 7
    %v1692 = vsub.s32 0, %v1691
    %v1693 = vrot.slane %v1689, %v1692
    %v1694 = vmul.f32 %v1687, %v1693
    %v1695 = vmul.f32 %v1688, %v1693
    %v1696 = vld [vmem:[#allocation5 + $0x1e8] sm:$0x1]
    %v1697 = vlaneseq
    %v1698 = vshrl.u32 %v1697, 7
    %v1699 = vsub.s32 0, %v1698
    %v1700 = vrot.slane %v1696, %v1699
    %v1701 = vadd.f32 %v1694, %v1700
    %v1702 = vadd.f32 %v1695, %v1700
    %v1703 = vld [vmem:[#allocation5 + $0x170] sm:$0xff]
    %v1704 = vld [vmem:[#allocation5 + $0x178] sm:$0xff]
    %v1705 = vld [vmem:[#allocation5 + $0x180] sm:$0xff]
    %v1706 = vld [vmem:[#allocation5 + $0x188] sm:$0xff]
    %v1707 = vld [vmem:[#allocation5 + $0x190] sm:$0x1]
    %v1708 = vlaneseq
    %v1709 = vshrl.u32 %v1708, 7
    %v1710 = vsub.s32 0, %v1709
    %v1711 = vrot.slane %v1707, %v1710
    %v1713 = vsel %vm59, %v1701, 0
    %v1716 = vsel %vm59, %v1702, 0
    %1718 = vmatprep.subr.mxu0 0.0
    %1719 = vmatpush1.msra.mxu0 %v1703
    %1720 = vmatprep.subr.mxu0 0.0
    %1721 = vmatpush1.msra.mxu0 %v1704
    %1722 = vmatprep.subr.mxu0 0.0
    %1723 = vmatpush1.msra.mxu0 %v1705
    %1724 = vmatprep.subr.mxu0 0.0
    %1725 = vmatpush1.msra.mxu0 %v1706
    %1726 = vmatprep.subr.mxu0 0.0
    %1727 = vmatpush1.msra.mxu0 0.0
    %1728 = vmatprep.subr.mxu0 0.0
    %1729 = vmatpush1.msra.mxu0 0.0
    %1730 = vmatprep.subr.mxu0 0.0
    %1731 = vmatpush1.msra.mxu0 0.0
    %1732 = vmatprep.subr.mxu0 0.0
    %1733 = vmatpush1.msra.mxu0 0.0
    %1734 = vmatprep.subr.mxu0 0.0
    %1735 = vmatpush1.msra.mxu0 0.0
    %1736 = vmatprep.subr.mxu0 0.0
    %1737 = vmatpush1.msra.mxu0 0.0
    %1738 = vmatprep.subr.mxu0 0.0
    %1739 = vmatpush1.msra.mxu0 0.0
    %1740 = vmatprep.subr.mxu0 0.0
    %1741 = vmatpush1.msra.mxu0 0.0
    %1742 = vmatprep.subr.mxu0 0.0
    %1743 = vmatpush1.msra.mxu0 0.0
    %1744 = vmatprep.subr.mxu0 0.0
    %1745 = vmatpush1.msra.mxu0 0.0
    %1746 = vmatprep.subr.mxu0 0.0
    %1747 = vmatpush1.msra.mxu0 0.0
    %1748 = vmatprep.subr.mxu0 0.0
    %1749 = vmatpush1.msra.mxu0 0.0
    %1750 = vmatprep.subr.mxu0 0.0
    %1751 = vmatpush1.msra.mxu0 0.0
    %1752 = vmatprep.subr.mxu0 0.0
    %1753 = vmatpush1.msra.mxu0 0.0
    %1754 = vmatprep.subr.mxu0 0.0
    %1755 = vmatpush1.msra.mxu0 0.0
    %1756 = vmatprep.subr.mxu0 0.0
    %1757 = vmatpush1.msra.mxu0 0.0
    %1758 = vmatprep.subr.mxu0 0.0
    %1759 = vmatpush1.msra.mxu0 0.0
    %1760 = vmatprep.subr.mxu0 0.0
    %1761 = vmatpush1.msra.mxu0 0.0
    %1762 = vmatprep.subr.mxu0 0.0
    %1763 = vmatpush1.msra.mxu0 0.0
    %1764 = vmatprep.subr.mxu0 0.0
    %1765 = vmatpush1.msra.mxu0 0.0
    %1766 = vmatprep.subr.mxu0 0.0
    %1767 = vmatpush1.msra.mxu0 0.0
    %1768 = vmatprep.subr.mxu0 0.0
    %1769 = vmatpush1.msra.mxu0 0.0
    %1770 = vmatprep.subr.mxu0 0.0
    %1771 = vmatpush1.msra.mxu0 0.0
    %1772 = vmatprep.subr.mxu0 0.0
    %1773 = vmatpush1.msra.mxu0 0.0
    %1774 = vmatprep.subr.mxu0 0.0
    %1775 = vmatpush1.msra.mxu0 0.0
    %1776 = vmatprep.subr.mxu0 0.0
    %1777 = vmatpush1.msra.mxu0 0.0
    %1778 = vmatprep.subr.mxu0 0.0
    %1779 = vmatpush1.msra.mxu0 0.0
    %1780 = vmatprep.subr.mxu0 0.0
    %1781 = vmatpush1.msra.mxu0 0.0
    %1782 = vmatprep.mubr.f32.mxu0 0.0
    %1783 = vmatmul.mubr.f32.gmra.mrb[0].mxu0 %v1713
    %v1784 = vpop.f32.mrb[0].mxu0
    %v1785 = vadd.f32 %v1711, %v1784
    %v1786 = vpop.f32.mrb[0].mxu0
    %1787 = vmatprep.mubr.f32.mxu0 0.0
    %1788 = vmatmul.mubr.f32.gmra.mrb[0].mxu0 %v1716
    %v1789 = vpop.f32.mrb[0].mxu0
    %v1790 = vadd.f32 %v1711, %v1789
    %v1791 = vpop.f32.mrb[0].mxu0
    %1792 = vdwg.mxu0
    %v1793 = vmax.f32 %v1785, 0.0
    %v1794 = vmax.f32 %v1790, 0.0
    %v1795 = vld [vmem:[#allocation5 + $0x198] sm:$0xff]
    %v1796 = vld [vmem:[#allocation5 + $0x1a0] sm:$0xff]
    %v1797 = vld [vmem:[#allocation5 + $0x1a8] sm:$0xff]
    %v1798 = vld [vmem:[#allocation5 + $0x1b0] sm:$0xff]
    %v1799 = vld [vmem:[#allocation5 + $0x1b8] sm:$0xff]
    %v1800 = vld [vmem:[#allocation5 + $0x1c0] sm:$0xff]
    %v1801 = vld [vmem:[#allocation5 + $0x1c8] sm:$0xff]
    %v1802 = vld [vmem:[#allocation5 + $0x1d0] sm:$0xff]
    %v1803 = vld [vmem:[#allocation5 + $0x1d8] sm:$0x1]
    %v1804 = vlaneseq
    %v1805 = vshrl.u32 %v1804, 7
    %v1806 = vsub.s32 0, %v1805
    %v1807 = vrot.slane %v1803, %v1806
    %v1809 = vsel %vm882, %v1793, 0
    %v1812 = vsel %vm882, %v1794, 0
    %1814 = vmatprep.subr.mxu0 0.0
    %1815 = vmatpush1.msra.mxu0 %v1795
    %1816 = vmatprep.subr.mxu0 0.0
    %1817 = vmatpush1.msra.mxu0 %v1796
    %1818 = vmatprep.subr.mxu0 0.0
    %1819 = vmatpush1.msra.mxu0 %v1797
    %1820 = vmatprep.subr.mxu0 0.0
    %1821 = vmatpush1.msra.mxu0 %v1798
    %1822 = vmatprep.subr.mxu0 0.0
    %1823 = vmatpush1.msra.mxu0 %v1799
    %1824 = vmatprep.subr.mxu0 0.0
    %1825 = vmatpush1.msra.mxu0 %v1800
    %1826 = vmatprep.subr.mxu0 0.0
    %1827 = vmatpush1.msra.mxu0 %v1801
    %1828 = vmatprep.subr.mxu0 0.0
    %1829 = vmatpush1.msra.mxu0 %v1802
    %1830 = vmatprep.subr.mxu0 0.0
    %1831 = vmatpush1.msra.mxu0 0.0
    %1832 = vmatprep.subr.mxu0 0.0
    %1833 = vmatpush1.msra.mxu0 0.0
    %1834 = vmatprep.subr.mxu0 0.0
    %1835 = vmatpush1.msra.mxu0 0.0
    %1836 = vmatprep.subr.mxu0 0.0
    %1837 = vmatpush1.msra.mxu0 0.0
    %1838 = vmatprep.subr.mxu0 0.0
    %1839 = vmatpush1.msra.mxu0 0.0
    %1840 = vmatprep.subr.mxu0 0.0
    %1841 = vmatpush1.msra.mxu0 0.0
    %1842 = vmatprep.subr.mxu0 0.0
    %1843 = vmatpush1.msra.mxu0 0.0
    %1844 = vmatprep.subr.mxu0 0.0
    %1845 = vmatpush1.msra.mxu0 0.0
    %1846 = vmatprep.subr.mxu0 0.0
    %1847 = vmatpush1.msra.mxu0 0.0
    %1848 = vmatprep.subr.mxu0 0.0
    %1849 = vmatpush1.msra.mxu0 0.0
    %1850 = vmatprep.subr.mxu0 0.0
    %1851 = vmatpush1.msra.mxu0 0.0
    %1852 = vmatprep.subr.mxu0 0.0
    %1853 = vmatpush1.msra.mxu0 0.0
    %1854 = vmatprep.subr.mxu0 0.0
    %1855 = vmatpush1.msra.mxu0 0.0
    %1856 = vmatprep.subr.mxu0 0.0
    %1857 = vmatpush1.msra.mxu0 0.0
    %1858 = vmatprep.subr.mxu0 0.0
    %1859 = vmatpush1.msra.mxu0 0.0
    %1860 = vmatprep.subr.mxu0 0.0
    %1861 = vmatpush1.msra.mxu0 0.0
    %1862 = vmatprep.subr.mxu0 0.0
    %1863 = vmatpush1.msra.mxu0 0.0
    %1864 = vmatprep.subr.mxu0 0.0
    %1865 = vmatpush1.msra.mxu0 0.0
    %1866 = vmatprep.subr.mxu0 0.0
    %1867 = vmatpush1.msra.mxu0 0.0
    %1868 = vmatprep.subr.mxu0 0.0
    %1869 = vmatpush1.msra.mxu0 0.0
    %1870 = vmatprep.subr.mxu0 0.0
    %1871 = vmatpush1.msra.mxu0 0.0
    %1872 = vmatprep.subr.mxu0 0.0
    %1873 = vmatpush1.msra.mxu0 0.0
    %1874 = vmatprep.subr.mxu0 0.0
    %1875 = vmatpush1.msra.mxu0 0.0
    %1876 = vmatprep.subr.mxu0 0.0
    %1877 = vmatpush1.msra.mxu0 0.0
    %1878 = vmatprep.mubr.f32.mxu0 0.0
    %1879 = vmatmul.mubr.f32.gmra.mrb[0].mxu0 %v1809
    %v1880 = vpop.f32.mrb[0].mxu0
    %v1881 = vadd.f32 %v1807, %v1880
    %v1882 = vpop.f32.mrb[0].mxu0
    %1883 = vmatprep.mubr.f32.mxu0 0.0
    %1884 = vmatmul.mubr.f32.gmra.mrb[0].mxu0 %v1812
    %v1885 = vpop.f32.mrb[0].mxu0
    %v1886 = vadd.f32 %v1807, %v1885
    %v1887 = vpop.f32.mrb[0].mxu0
    %1888 = vdwg.mxu0
    %v1889 = vadd.f32 %v1701, %v1881
    %v1890 = vadd.f32 %v1702, %v1886
    %v1891 = vsel %vm59, %v1889, 0.0
    %1892 = vadd.xlane.f32.xlu0 %v1891
    %v1893 = vpop.xlane.xlu0 %1892
    %v1894 = vsel %vm59, %v1890, 0.0
    %1895 = vadd.xlane.f32.xlu0 %v1894
    %v1896 = vpop.xlane.xlu0 %1895
    %v1897 = vmul.f32 %v1893, %v742
    %v1898 = vmul.f32 %v1896, %v742
    %v1899 = vsub.f32 %v1889, %v1897
    %v1900 = vsub.f32 %v1890, %v1898
    %v1901 = vmul.f32 %v1899, %v1899
    %v1902 = vmul.f32 %v1900, %v1900
    %v1903 = vsel %vm59, %v1901, 0.0
    %1904 = vadd.xlane.f32.xlu0 %v1903
    %v1905 = vpop.xlane.xlu0 %1904
    %v1906 = vsel %vm59, %v1902, 0.0
    %1907 = vadd.xlane.f32.xlu0 %v1906
    %v1908 = vpop.xlane.xlu0 %1907
    %v1909 = vmul.f32 %v1905, %v742
    %v1910 = vmul.f32 %v1908, %v742
    %v1911 = vadd.f32 %v1909, 1e-05
    %v1912 = vadd.f32 %v1910, 1e-05
    %v1913 = vrsqrt.pop %v1911
    %v1914 = vrsqrt.pop %v1912
    %v1915 = vmul.f32 %v1899, %v1913
    %v1916 = vmul.f32 %v1900, %v1914
    %v1917 = vld [vmem:[#allocation5 + $0x1f0] sm:$0x1]
    %v1918 = vlaneseq
    %v1919 = vshrl.u32 %v1918, 7
    %v1920 = vsub.s32 0, %v1919
    %v1921 = vrot.slane %v1917, %v1920
    %v1922 = vmul.f32 %v1915, %v1921
    %v1923 = vmul.f32 %v1916, %v1921
    %v1924 = vld [vmem:[#allocation5 + $0x1f8] sm:$0x1]
    %v1925 = vlaneseq
    %v1926 = vshrl.u32 %v1925, 7
    %v1927 = vsub.s32 0, %v1926
    %v1928 = vrot.slane %v1924, %v1927
    %v1929 = vadd.f32 %v1922, %v1928
    %v1930 = vadd.f32 %v1923, %v1928
    %v1931 = vsel %vm59, %v1929, 0.0
    %1932 = vadd.xlane.f32.xlu0 %v1931
    %v1933 = vpop.xlane.xlu0 %1932
    %v1934 = vsel %vm59, %v1930, 0.0
    %1935 = vadd.xlane.f32.xlu0 %v1934
    %v1936 = vpop.xlane.xlu0 %1935
    %v1937 = vmul.f32 %v1933, %v742
    %v1938 = vmul.f32 %v1936, %v742
    %v1939 = vsub.f32 %v1929, %v1937
    %v1940 = vsub.f32 %v1930, %v1938
    %v1941 = vmul.f32 %v1939, %v1939
    %v1942 = vmul.f32 %v1940, %v1940
    %v1943 = vsel %vm59, %v1941, 0.0
    %1944 = vadd.xlane.f32.xlu0 %v1943
    %v1945 = vpop.xlane.xlu0 %1944
    %v1946 = vsel %vm59, %v1942, 0.0
    %1947 = vadd.xlane.f32.xlu0 %v1946
    %v1948 = vpop.xlane.xlu0 %1947
    %v1949 = vmul.f32 %v1945, %v742
    %v1950 = vmul.f32 %v1948, %v742
    %v1951 = vadd.f32 %v1949, 1e-05
    %v1952 = vadd.f32 %v1950, 1e-05
    %v1953 = vrsqrt.pop %v1951
    %v1954 = vrsqrt.pop %v1952
    %v1955 = vmul.f32 %v1939, %v1953
    %v1956 = vmul.f32 %v1940, %v1954
    %v1957 = vld [vmem:[#allocation5 + $0x200] sm:$0x1]
    %v1958 = vlaneseq
    %v1959 = vshrl.u32 %v1958, 7
    %v1960 = vsub.s32 0, %v1959
    %v1961 = vrot.slane %v1957, %v1960
    %v1962 = vmul.f32 %v1955, %v1961
    %v1963 = vmul.f32 %v1956, %v1961
    %v1964 = vld [vmem:[#allocation5 + $0x208] sm:$0x1]
    %v1965 = vlaneseq
    %v1966 = vshrl.u32 %v1965, 7
    %v1967 = vsub.s32 0, %v1966
    %v1968 = vrot.slane %v1964, %v1967
    %v1969 = vadd.f32 %v1962, %v1968
    %v1970 = vadd.f32 %v1963, %v1968
    %v1971 = vld [vmem:[#allocation5 + $0x210] sm:$0xff]
    %v1972 = vld [vmem:[#allocation5 + $0x218] sm:$0xff]
    %v1973 = vld [vmem:[#allocation5 + $0x220] sm:$0xff]
    %v1974 = vld [vmem:[#allocation5 + $0x228] sm:$0xff]
    %v1975 = vld [vmem:[#allocation5 + $0x230] sm:$0x1]
    %v1976 = vlaneseq
    %v1977 = vshrl.u32 %v1976, 7
    %v1978 = vsub.s32 0, %v1977
    %v1979 = vrot.slane %v1975, %v1978
    %v1981 = vsel %vm59, %v1969, 0
    %v1984 = vsel %vm59, %v1970, 0
    %1986 = vmatprep.subr.mxu0 0.0
    %1987 = vmatpush1.msra.mxu0 %v1971
    %1988 = vmatprep.subr.mxu0 0.0
    %1989 = vmatpush1.msra.mxu0 %v1972
    %1990 = vmatprep.subr.mxu0 0.0
    %1991 = vmatpush1.msra.mxu0 %v1973
    %1992 = vmatprep.subr.mxu0 0.0
    %1993 = vmatpush1.msra.mxu0 %v1974
    %1994 = vmatprep.subr.mxu0 0.0
    %1995 = vmatpush1.msra.mxu0 0.0
    %1996 = vmatprep.subr.mxu0 0.0
    %1997 = vmatpush1.msra.mxu0 0.0
    %1998 = vmatprep.subr.mxu0 0.0
    %1999 = vmatpush1.msra.mxu0 0.0
    %2000 = vmatprep.subr.mxu0 0.0
    %2001 = vmatpush1.msra.mxu0 0.0
    %2002 = vmatprep.subr.mxu0 0.0
    %2003 = vmatpush1.msra.mxu0 0.0
    %2004 = vmatprep.subr.mxu0 0.0
    %2005 = vmatpush1.msra.mxu0 0.0
    %2006 = vmatprep.subr.mxu0 0.0
    %2007 = vmatpush1.msra.mxu0 0.0
    %2008 = vmatprep.subr.mxu0 0.0
    %2009 = vmatpush1.msra.mxu0 0.0
    %2010 = vmatprep.subr.mxu0 0.0
    %2011 = vmatpush1.msra.mxu0 0.0
    %2012 = vmatprep.subr.mxu0 0.0
    %2013 = vmatpush1.msra.mxu0 0.0
    %2014 = vmatprep.subr.mxu0 0.0
    %2015 = vmatpush1.msra.mxu0 0.0
    %2016 = vmatprep.subr.mxu0 0.0
    %2017 = vmatpush1.msra.mxu0 0.0
    %2018 = vmatprep.subr.mxu0 0.0
    %2019 = vmatpush1.msra.mxu0 0.0
    %2020 = vmatprep.subr.mxu0 0.0
    %2021 = vmatpush1.msra.mxu0 0.0
    %2022 = vmatprep.subr.mxu0 0.0
    %2023 = vmatpush1.msra.mxu0 0.0
    %2024 = vmatprep.subr.mxu0 0.0
    %2025 = vmatpush1.msra.mxu0 0.0
    %2026 = vmatprep.subr.mxu0 0.0
    %2027 = vmatpush1.msra.mxu0 0.0
    %2028 = vmatprep.subr.mxu0 0.0
    %2029 = vmatpush1.msra.mxu0 0.0
    %2030 = vmatprep.subr.mxu0 0.0
    %2031 = vmatpush1.msra.mxu0 0.0
    %2032 = vmatprep.subr.mxu0 0.0
    %2033 = vmatpush1.msra.mxu0 0.0
    %2034 = vmatprep.subr.mxu0 0.0
    %2035 = vmatpush1.msra.mxu0 0.0
    %2036 = vmatprep.subr.mxu0 0.0
    %2037 = vmatpush1.msra.mxu0 0.0
    %2038 = vmatprep.subr.mxu0 0.0
    %2039 = vmatpush1.msra.mxu0 0.0
    %2040 = vmatprep.subr.mxu0 0.0
    %2041 = vmatpush1.msra.mxu0 0.0
    %2042 = vmatprep.subr.mxu0 0.0
    %2043 = vmatpush1.msra.mxu0 0.0
    %2044 = vmatprep.subr.mxu0 0.0
    %2045 = vmatpush1.msra.mxu0 0.0
    %2046 = vmatprep.subr.mxu0 0.0
    %2047 = vmatpush1.msra.mxu0 0.0
    %2048 = vmatprep.subr.mxu0 0.0
    %2049 = vmatpush1.msra.mxu0 0.0
    %2050 = vmatprep.mubr.f32.mxu0 0.0
    %2051 = vmatmul.mubr.f32.gmra.mrb[0].mxu0 %v1981
    %v2052 = vpop.f32.mrb[0].mxu0
    %v2053 = vadd.f32 %v1979, %v2052
    %v2054 = vpop.f32.mrb[0].mxu0
    %2055 = vmatprep.mubr.f32.mxu0 0.0
    %2056 = vmatmul.mubr.f32.gmra.mrb[0].mxu0 %v1984
    %v2057 = vpop.f32.mrb[0].mxu0
    %v2058 = vadd.f32 %v1979, %v2057
    %v2059 = vpop.f32.mrb[0].mxu0
    %2060 = vdwg.mxu0
    %v2061 = vld [vmem:[#allocation5 + $0x238] sm:$0xff]
    %v2062 = vld [vmem:[#allocation5 + $0x240] sm:$0xff]
    %v2063 = vld [vmem:[#allocation5 + $0x248] sm:$0xff]
    %v2064 = vld [vmem:[#allocation5 + $0x250] sm:$0xff]
    %v2065 = vld [vmem:[#allocation5 + $0x258] sm:$0x1]
    %v2066 = vlaneseq
    %v2067 = vshrl.u32 %v2066, 7
    %v2068 = vsub.s32 0, %v2067
    %v2069 = vrot.slane %v2065, %v2068
    %v2070 = vrot.slane %v48, 7
    %v2071 = vrot.slane %v49, 6
    %vm2072 = vcmask 1041409
    %v2073 = vsel %vm2072, %v2071, %v2070
    %v2074 = vsel %vm59, %v2073, 0
    %2076 = vmatprep.subr.mxu0 0.0
    %2077 = vmatpush1.msra.mxu0 %v2061
    %2078 = vmatprep.subr.mxu0 0.0
    %2079 = vmatpush1.msra.mxu0 %v2062
    %2080 = vmatprep.subr.mxu0 0.0
    %2081 = vmatpush1.msra.mxu0 %v2063
    %2082 = vmatprep.subr.mxu0 0.0
    %2083 = vmatpush1.msra.mxu0 %v2064
    %2084 = vmatprep.subr.mxu0 0.0
    %2085 = vmatpush1.msra.mxu0 0.0
    %2086 = vmatprep.subr.mxu0 0.0
    %2087 = vmatpush1.msra.mxu0 0.0
    %2088 = vmatprep.subr.mxu0 0.0
    %2089 = vmatpush1.msra.mxu0 0.0
    %2090 = vmatprep.subr.mxu0 0.0
    %2091 = vmatpush1.msra.mxu0 0.0
    %2092 = vmatprep.subr.mxu0 0.0
    %2093 = vmatpush1.msra.mxu0 0.0
    %2094 = vmatprep.subr.mxu0 0.0
    %2095 = vmatpush1.msra.mxu0 0.0
    %2096 = vmatprep.subr.mxu0 0.0
    %2097 = vmatpush1.msra.mxu0 0.0
    %2098 = vmatprep.subr.mxu0 0.0
    %2099 = vmatpush1.msra.mxu0 0.0
    %2100 = vmatprep.subr.mxu0 0.0
    %2101 = vmatpush1.msra.mxu0 0.0
    %2102 = vmatprep.subr.mxu0 0.0
    %2103 = vmatpush1.msra.mxu0 0.0
    %2104 = vmatprep.subr.mxu0 0.0
    %2105 = vmatpush1.msra.mxu0 0.0
    %2106 = vmatprep.subr.mxu0 0.0
    %2107 = vmatpush1.msra.mxu0 0.0
    %2108 = vmatprep.subr.mxu0 0.0
    %2109 = vmatpush1.msra.mxu0 0.0
    %2110 = vmatprep.subr.mxu0 0.0
    %2111 = vmatpush1.msra.mxu0 0.0
    %2112 = vmatprep.subr.mxu0 0.0
    %2113 = vmatpush1.msra.mxu0 0.0
    %2114 = vmatprep.subr.mxu0 0.0
    %2115 = vmatpush1.msra.mxu0 0.0
    %2116 = vmatprep.subr.mxu0 0.0
    %2117 = vmatpush1.msra.mxu0 0.0
    %2118 = vmatprep.subr.mxu0 0.0
    %2119 = vmatpush1.msra.mxu0 0.0
    %2120 = vmatprep.subr.mxu0 0.0
    %2121 = vmatpush1.msra.mxu0 0.0
    %2122 = vmatprep.subr.mxu0 0.0
    %2123 = vmatpush1.msra.mxu0 0.0
    %2124 = vmatprep.subr.mxu0 0.0
    %2125 = vmatpush1.msra.mxu0 0.0
    %2126 = vmatprep.subr.mxu0 0.0
    %2127 = vmatpush1.msra.mxu0 0.0
    %2128 = vmatprep.subr.mxu0 0.0
    %2129 = vmatpush1.msra.mxu0 0.0
    %2130 = vmatprep.subr.mxu0 0.0
    %2131 = vmatpush1.msra.mxu0 0.0
    %2132 = vmatprep.subr.mxu0 0.0
    %2133 = vmatpush1.msra.mxu0 0.0
    %2134 = vmatprep.subr.mxu0 0.0
    %2135 = vmatpush1.msra.mxu0 0.0
    %2136 = vmatprep.subr.mxu0 0.0
    %2137 = vmatpush1.msra.mxu0 0.0
    %2138 = vmatprep.subr.mxu0 0.0
    %2139 = vmatpush1.msra.mxu0 0.0
    %2140 = vmatprep.mubr.f32.mxu0 0.0
    %2141 = vmatmul.mubr.f32.gmra.mrb[0].mxu0 %v2074
    %v2142 = vpop.f32.mrb[0].mxu0
    %v2143 = vadd.f32 %v2069, %v2142
    %v2144 = vpop.f32.mrb[0].mxu0
    %2145 = vdwg.mxu0
    %v2147 = vrot.slane %v2143, 1
    %v2148 = vrot.slane %v2143, 2
    %v2151 = vadd.f32 %v48, %v2147
    %v2152 = vadd.f32 %v49, %v2148
    %v2155 = vrot.slane %v2152, 7
    %vm2158 = vcmask 261127
    %v2159 = vsel %vm2158, %v2151, 0.0
    %2160 = vadd.xlane.f32.xlu0 %v2159
    %v2161 = vpop.xlane.xlu0 %2160
    %vm2162 = vcmask 253952
    %v2163 = vsel %vm2162, %v2155, 0.0
    %2164 = vadd.xlane.f32.xlu0 %v2163
    %v2165 = vpop.xlane.xlu0 %2164
    %v2166 = vmul.f32 %v2161, %v742
    %v2167 = vmul.f32 %v2165, %v742
    %v2170 = vrot.slane %v2167, 1
    %v2173 = vsub.f32 %v2151, %v2166
    %v2174 = vsub.f32 %v2152, %v2170
    %v2175 = vmul.f32 %v2173, %v2173
    %v2176 = vmul.f32 %v2174, %v2174
    %v2179 = vrot.slane %v2176, 7
    %v2182 = vsel %vm2158, %v2175, 0.0
    %2183 = vadd.xlane.f32.xlu0 %v2182
    %v2184 = vpop.xlane.xlu0 %2183
    %v2185 = vsel %vm2162, %v2179, 0.0
    %2186 = vadd.xlane.f32.xlu0 %v2185
    %v2187 = vpop.xlane.xlu0 %2186
    %v2188 = vmul.f32 %v2184, %v742
    %v2189 = vmul.f32 %v2187, %v742
    %v2190 = vadd.f32 %v2188, 1e-05
    %v2191 = vadd.f32 %v2189, 1e-05
    %v2192 = vrsqrt.pop %v2190
    %v2193 = vrsqrt.pop %v2191
    %v2196 = vrot.slane %v2193, 1
    %v2199 = vmul.f32 %v2173, %v2192
    %v2200 = vmul.f32 %v2174, %v2196
    %v2201 = vld [vmem:[#allocation5 + $0x320] sm:$0x1]
    %v2202 = vlaneseq
    %v2203 = vshrl.u32 %v2202, 7
    %v2204 = vsub.s32 0, %v2203
    %v2205 = vrot.slane %v2201, %v2204
    %v2206 = vmul.f32 %v2199, %v2205
    %v2207 = vmul.f32 %v2200, %v2205
    %v2208 = vld [vmem:[#allocation5 + $0x328] sm:$0x1]
    %v2209 = vlaneseq
    %v2210 = vshrl.u32 %v2209, 7
    %v2211 = vsub.s32 0, %v2210
    %v2212 = vrot.slane %v2208, %v2211
    %v2213 = vadd.f32 %v2206, %v2212
    %v2214 = vadd.f32 %v2207, %v2212
    %v2215 = vld [vmem:[#allocation5 + $0x260] sm:$0xff]
    %v2216 = vld [vmem:[#allocation5 + $0x268] sm:$0xff]
    %v2217 = vld [vmem:[#allocation5 + $0x270] sm:$0xff]
    %v2218 = vld [vmem:[#allocation5 + $0x278] sm:$0xff]
    %v2219 = vld [vmem:[#allocation5 + $0x280] sm:$0x1]
    %v2220 = vlaneseq
    %v2221 = vshrl.u32 %v2220, 7
    %v2222 = vsub.s32 0, %v2221
    %v2223 = vrot.slane %v2219, %v2222
    %v2226 = vrot.slane %v2213, 7
    %v2227 = vrot.slane %v2214, 6
    %v2228 = vsel %vm2072, %v2227, %v2226
    %v2229 = vsel %vm59, %v2228, 0
    %2231 = vmatprep.subr.mxu0 0.0
    %2232 = vmatpush1.msra.mxu0 %v2215
    %2233 = vmatprep.subr.mxu0 0.0
    %2234 = vmatpush1.msra.mxu0 %v2216
    %2235 = vmatprep.subr.mxu0 0.0
    %2236 = vmatpush1.msra.mxu0 %v2217
    %2237 = vmatprep.subr.mxu0 0.0
    %2238 = vmatpush1.msra.mxu0 %v2218
    %2239 = vmatprep.subr.mxu0 0.0
    %2240 = vmatpush1.msra.mxu0 0.0
    %2241 = vmatprep.subr.mxu0 0.0
    %2242 = vmatpush1.msra.mxu0 0.0
    %2243 = vmatprep.subr.mxu0 0.0
    %2244 = vmatpush1.msra.mxu0 0.0
    %2245 = vmatprep.subr.mxu0 0.0
    %2246 = vmatpush1.msra.mxu0 0.0
    %2247 = vmatprep.subr.mxu0 0.0
    %2248 = vmatpush1.msra.mxu0 0.0
    %2249 = vmatprep.subr.mxu0 0.0
    %2250 = vmatpush1.msra.mxu0 0.0
    %2251 = vmatprep.subr.mxu0 0.0
    %2252 = vmatpush1.msra.mxu0 0.0
    %2253 = vmatprep.subr.mxu0 0.0
    %2254 = vmatpush1.msra.mxu0 0.0
    %2255 = vmatprep.subr.mxu0 0.0
    %2256 = vmatpush1.msra.mxu0 0.0
    %2257 = vmatprep.subr.mxu0 0.0
    %2258 = vmatpush1.msra.mxu0 0.0
    %2259 = vmatprep.subr.mxu0 0.0
    %2260 = vmatpush1.msra.mxu0 0.0
    %2261 = vmatprep.subr.mxu0 0.0
    %2262 = vmatpush1.msra.mxu0 0.0
    %2263 = vmatprep.subr.mxu0 0.0
    %2264 = vmatpush1.msra.mxu0 0.0
    %2265 = vmatprep.subr.mxu0 0.0
    %2266 = vmatpush1.msra.mxu0 0.0
    %2267 = vmatprep.subr.mxu0 0.0
    %2268 = vmatpush1.msra.mxu0 0.0
    %2269 = vmatprep.subr.mxu0 0.0
    %2270 = vmatpush1.msra.mxu0 0.0
    %2271 = vmatprep.subr.mxu0 0.0
    %2272 = vmatpush1.msra.mxu0 0.0
    %2273 = vmatprep.subr.mxu0 0.0
    %2274 = vmatpush1.msra.mxu0 0.0
    %2275 = vmatprep.subr.mxu0 0.0
    %2276 = vmatpush1.msra.mxu0 0.0
    %2277 = vmatprep.subr.mxu0 0.0
    %2278 = vmatpush1.msra.mxu0 0.0
    %2279 = vmatprep.subr.mxu0 0.0
    %2280 = vmatpush1.msra.mxu0 0.0
    %2281 = vmatprep.subr.mxu0 0.0
    %2282 = vmatpush1.msra.mxu0 0.0
    %2283 = vmatprep.subr.mxu0 0.0
    %2284 = vmatpush1.msra.mxu0 0.0
    %2285 = vmatprep.subr.mxu0 0.0
    %2286 = vmatpush1.msra.mxu0 0.0
    %2287 = vmatprep.subr.mxu0 0.0
    %2288 = vmatpush1.msra.mxu0 0.0
    %2289 = vmatprep.subr.mxu0 0.0
    %2290 = vmatpush1.msra.mxu0 0.0
    %2291 = vmatprep.subr.mxu0 0.0
    %2292 = vmatpush1.msra.mxu0 0.0
    %2293 = vmatprep.subr.mxu0 0.0
    %2294 = vmatpush1.msra.mxu0 0.0
    %2295 = vmatprep.mubr.f32.mxu0 0.0
    %2296 = vmatmul.mubr.f32.gmra.mrb[0].mxu0 %v2229
    %v2297 = vpop.f32.mrb[0].mxu0
    %v2298 = vadd.f32 %v2223, %v2297
    %v2299 = vpop.f32.mrb[0].mxu0
    %2300 = vdwg.mxu0
    %v2303 = vunpack.c.l.s4 1966171168
    %v2304 = vunpack.c.0.s8 %v2303
    %v2305 = vlaneseq
    %v2306 = vshrl.u32 %v2305, 7
    %v2307 = vsub.s32 %v2304, %v2306
    %v2308 = vrot.slane %v2298, %v2307
    %v2309 = vcombine.high %v2308, %v2308
    %v2311 = vunpack.c.l.s4 1966171168
    %v2312 = vunpack.c.0.s8 %v2311
    %v2313 = vlaneseq
    %v2314 = vshrl.u32 %v2313, 7
    %v2315 = vsub.s32 %v2312, %v2314
    %v2316 = vrot.slane %v2308, %v2315
    %v2318 = vunpack.c.l.s4 1966171168
    %v2319 = vunpack.c.0.s8 %v2318
    %v2320 = vlaneseq
    %v2321 = vshrl.u32 %v2320, 7
    %v2322 = vsub.s32 %v2319, %v2321
    %v2323 = vrot.slane %v2309, %v2322
    %v2324 = vmul.f32 %v2053, %v40
    %v2325 = vmul.f32 %v2053, %v41
    %v2326 = vmul.f32 %v2053, %v42
    %v2327 = vmul.f32 %v2053, %v43
    %v2328 = vmul.f32 %v2058, %v40
    %v2329 = vmul.f32 %v2058, %v41
    %v2330 = vmul.f32 %v2058, %v42
    %v2331 = vmul.f32 %v2058, %v43
    %v2332 = vmul.f32 %v2053, %v146
    %v2333 = vmul.f32 %v2053, %v148
    %v2334 = vmul.f32 %v2053, %v150
    %v2335 = vmul.f32 %v2053, %v152
    %v2336 = vmul.f32 %v2058, %v146
    %v2337 = vmul.f32 %v2058, %v148
    %v2338 = vmul.f32 %v2058, %v150
    %v2339 = vmul.f32 %v2058, %v152
    %v2340 = vsel %vm59, %v2316, 0
    %v2343 = vsel %vm59, %v2324, 0
    %v2346 = vsel %vm59, %v2325, 0
    %v2349 = vsel %vm59, %v2326, 0
    %v2352 = vsel %vm59, %v2327, 0
    %2354 = vmatprep.subr.mxu0 0.0
    %2355 = vmatpush1.xpose.msra.mxu0 %v2343
    %2356 = vmatprep.subr.mxu0 0.0
    %2357 = vmatpush1.xpose.msra.mxu0 %v2346
    %2358 = vmatprep.subr.mxu0 0.0
    %2359 = vmatpush1.xpose.msra.mxu0 %v2349
    %2360 = vmatprep.subr.mxu0 0.0
    %2361 = vmatpush1.xpose.msra.mxu0 %v2352
    %2362 = vmatprep.subr.mxu0 0.0
    %2363 = vmatpush1.xpose.msra.mxu0 0.0
    %2364 = vmatprep.subr.mxu0 0.0
    %2365 = vmatpush1.xpose.msra.mxu0 0.0
    %2366 = vmatprep.subr.mxu0 0.0
    %2367 = vmatpush1.xpose.msra.mxu0 0.0
    %2368 = vmatprep.subr.mxu0 0.0
    %2369 = vmatpush1.xpose.msra.mxu0 0.0
    %2370 = vmatprep.subr.mxu0 0.0
    %2371 = vmatpush1.xpose.msra.mxu0 0.0
    %2372 = vmatprep.subr.mxu0 0.0
    %2373 = vmatpush1.xpose.msra.mxu0 0.0
    %2374 = vmatprep.subr.mxu0 0.0
    %2375 = vmatpush1.xpose.msra.mxu0 0.0
    %2376 = vmatprep.subr.mxu0 0.0
    %2377 = vmatpush1.xpose.msra.mxu0 0.0
    %2378 = vmatprep.subr.mxu0 0.0
    %2379 = vmatpush1.xpose.msra.mxu0 0.0
    %2380 = vmatprep.subr.mxu0 0.0
    %2381 = vmatpush1.xpose.msra.mxu0 0.0
    %2382 = vmatprep.subr.mxu0 0.0
    %2383 = vmatpush1.xpose.msra.mxu0 0.0
    %2384 = vmatprep.subr.mxu0 0.0
    %2385 = vmatpush1.xpose.msra.mxu0 0.0
    %2386 = vmatprep.subr.mxu0 0.0
    %2387 = vmatpush1.xpose.msra.mxu0 0.0
    %2388 = vmatprep.subr.mxu0 0.0
    %2389 = vmatpush1.xpose.msra.mxu0 0.0
    %2390 = vmatprep.subr.mxu0 0.0
    %2391 = vmatpush1.xpose.msra.mxu0 0.0
    %2392 = vmatprep.subr.mxu0 0.0
    %2393 = vmatpush1.xpose.msra.mxu0 0.0
    %2394 = vmatprep.subr.mxu0 0.0
    %2395 = vmatpush1.xpose.msra.mxu0 0.0
    %2396 = vmatprep.subr.mxu0 0.0
    %2397 = vmatpush1.xpose.msra.mxu0 0.0
    %2398 = vmatprep.subr.mxu0 0.0
    %2399 = vmatpush1.xpose.msra.mxu0 0.0
    %2400 = vmatprep.subr.mxu0 0.0
    %2401 = vmatpush1.xpose.msra.mxu0 0.0
    %2402 = vmatprep.subr.mxu0 0.0
    %2403 = vmatpush1.xpose.msra.mxu0 0.0
    %2404 = vmatprep.subr.mxu0 0.0
    %2405 = vmatpush1.xpose.msra.mxu0 0.0
    %2406 = vmatprep.subr.mxu0 0.0
    %2407 = vmatpush1.xpose.msra.mxu0 0.0
    %2408 = vmatprep.subr.mxu0 0.0
    %2409 = vmatpush1.xpose.msra.mxu0 0.0
    %2410 = vmatprep.subr.mxu0 0.0
    %2411 = vmatpush1.xpose.msra.mxu0 0.0
    %2412 = vmatprep.subr.mxu0 0.0
    %2413 = vmatpush1.xpose.msra.mxu0 0.0
    %2414 = vmatprep.subr.mxu0 0.0
    %2415 = vmatpush1.xpose.msra.mxu0 0.0
    %2416 = vmatprep.subr.mxu0 0.0
    %2417 = vmatpush1.xpose.msra.mxu0 0.0
    %2418 = vmatprep.mubr.f32.mxu0 0.0
    %2419 = vmatmul.mubr.f32.gmra.mrb[0].mxu0 %v2340
    %v2420 = vpop.f32.mrb[0].mxu0
    %v2421 = vadd.f32 0.0, %v2420
    %v2422 = vpop.f32.mrb[0].mxu0
    %2423 = vdwg.mxu0
    %v2424 = vsel %vm59, %v2323, 0
    %v2427 = vsel %vm59, %v2328, 0
    %v2430 = vsel %vm59, %v2329, 0
    %v2433 = vsel %vm59, %v2330, 0
    %v2436 = vsel %vm59, %v2331, 0
    %2438 = vmatprep.subr.mxu0 0.0
    %2439 = vmatpush1.xpose.msra.mxu0 %v2427
    %2440 = vmatprep.subr.mxu0 0.0
    %2441 = vmatpush1.xpose.msra.mxu0 %v2430
    %2442 = vmatprep.subr.mxu0 0.0
    %2443 = vmatpush1.xpose.msra.mxu0 %v2433
    %2444 = vmatprep.subr.mxu0 0.0
    %2445 = vmatpush1.xpose.msra.mxu0 %v2436
    %2446 = vmatprep.subr.mxu0 0.0
    %2447 = vmatpush1.xpose.msra.mxu0 0.0
    %2448 = vmatprep.subr.mxu0 0.0
    %2449 = vmatpush1.xpose.msra.mxu0 0.0
    %2450 = vmatprep.subr.mxu0 0.0
    %2451 = vmatpush1.xpose.msra.mxu0 0.0
    %2452 = vmatprep.subr.mxu0 0.0
    %2453 = vmatpush1.xpose.msra.mxu0 0.0
    %2454 = vmatprep.subr.mxu0 0.0
    %2455 = vmatpush1.xpose.msra.mxu0 0.0
    %2456 = vmatprep.subr.mxu0 0.0
    %2457 = vmatpush1.xpose.msra.mxu0 0.0
    %2458 = vmatprep.subr.mxu0 0.0
    %2459 = vmatpush1.xpose.msra.mxu0 0.0
    %2460 = vmatprep.subr.mxu0 0.0
    %2461 = vmatpush1.xpose.msra.mxu0 0.0
    %2462 = vmatprep.subr.mxu0 0.0
    %2463 = vmatpush1.xpose.msra.mxu0 0.0
    %2464 = vmatprep.subr.mxu0 0.0
    %2465 = vmatpush1.xpose.msra.mxu0 0.0
    %2466 = vmatprep.subr.mxu0 0.0
    %2467 = vmatpush1.xpose.msra.mxu0 0.0
    %2468 = vmatprep.subr.mxu0 0.0
    %2469 = vmatpush1.xpose.msra.mxu0 0.0
    %2470 = vmatprep.subr.mxu0 0.0
    %2471 = vmatpush1.xpose.msra.mxu0 0.0
    %2472 = vmatprep.subr.mxu0 0.0
    %2473 = vmatpush1.xpose.msra.mxu0 0.0
    %2474 = vmatprep.subr.mxu0 0.0
    %2475 = vmatpush1.xpose.msra.mxu0 0.0
    %2476 = vmatprep.subr.mxu0 0.0
    %2477 = vmatpush1.xpose.msra.mxu0 0.0
    %2478 = vmatprep.subr.mxu0 0.0
    %2479 = vmatpush1.xpose.msra.mxu0 0.0
    %2480 = vmatprep.subr.mxu0 0.0
    %2481 = vmatpush1.xpose.msra.mxu0 0.0
    %2482 = vmatprep.subr.mxu0 0.0
    %2483 = vmatpush1.xpose.msra.mxu0 0.0
    %2484 = vmatprep.subr.mxu0 0.0
    %2485 = vmatpush1.xpose.msra.mxu0 0.0
    %2486 = vmatprep.subr.mxu0 0.0
    %2487 = vmatpush1.xpose.msra.mxu0 0.0
    %2488 = vmatprep.subr.mxu0 0.0
    %2489 = vmatpush1.xpose.msra.mxu0 0.0
    %2490 = vmatprep.subr.mxu0 0.0
    %2491 = vmatpush1.xpose.msra.mxu0 0.0
    %2492 = vmatprep.subr.mxu0 0.0
    %2493 = vmatpush1.xpose.msra.mxu0 0.0
    %2494 = vmatprep.subr.mxu0 0.0
    %2495 = vmatpush1.xpose.msra.mxu0 0.0
    %2496 = vmatprep.subr.mxu0 0.0
    %2497 = vmatpush1.xpose.msra.mxu0 0.0
    %2498 = vmatprep.subr.mxu0 0.0
    %2499 = vmatpush1.xpose.msra.mxu0 0.0
    %2500 = vmatprep.subr.mxu0 0.0
    %2501 = vmatpush1.xpose.msra.mxu0 0.0
    %2502 = vmatprep.mubr.f32.mxu0 0.0
    %2503 = vmatmul.mubr.f32.gmra.mrb[0].mxu0 %v2424
    %v2504 = vpop.f32.mrb[0].mxu0
    %v2505 = vadd.f32 0.0, %v2504
    %v2506 = vpop.f32.mrb[0].mxu0
    %2507 = vdwg.mxu0
    %v2508 = vmul.f32 %v2421, 1.442695
    %v2509 = vpow.pop %v2508
    %v2510 = vmul.f32 %v2505, 1.442695
    %v2511 = vpow.pop %v2510
    %v2514 = vrot.slane %v2511, 7
    %v2515 = vsel %vm2072, %v2514, %v2509
    %v2516 = vsel %vm59, %v2515, 0
    %2518 = vmatprep.subr.mxu0 0.0
    %2519 = vmatpush1.msra.mxu0 %v44
    %2520 = vmatprep.subr.mxu0 0.0
    %2521 = vmatpush1.msra.mxu0 %v45
    %2522 = vmatprep.subr.mxu0 0.0
    %2523 = vmatpush1.msra.mxu0 %v46
    %2524 = vmatprep.subr.mxu0 0.0
    %2525 = vmatpush1.msra.mxu0 %v47
    %2526 = vmatprep.subr.mxu0 0.0
    %2527 = vmatpush1.msra.mxu0 0.0
    %2528 = vmatprep.subr.mxu0 0.0
    %2529 = vmatpush1.msra.mxu0 0.0
    %2530 = vmatprep.subr.mxu0 0.0
    %2531 = vmatpush1.msra.mxu0 0.0
    %2532 = vmatprep.subr.mxu0 0.0
    %2533 = vmatpush1.msra.mxu0 0.0
    %2534 = vmatprep.subr.mxu0 0.0
    %2535 = vmatpush1.msra.mxu0 0.0
    %2536 = vmatprep.subr.mxu0 0.0
    %2537 = vmatpush1.msra.mxu0 0.0
    %2538 = vmatprep.subr.mxu0 0.0
    %2539 = vmatpush1.msra.mxu0 0.0
    %2540 = vmatprep.subr.mxu0 0.0
    %2541 = vmatpush1.msra.mxu0 0.0
    %2542 = vmatprep.subr.mxu0 0.0
    %2543 = vmatpush1.msra.mxu0 0.0
    %2544 = vmatprep.subr.mxu0 0.0
    %2545 = vmatpush1.msra.mxu0 0.0
    %2546 = vmatprep.subr.mxu0 0.0
    %2547 = vmatpush1.msra.mxu0 0.0
    %2548 = vmatprep.subr.mxu0 0.0
    %2549 = vmatpush1.msra.mxu0 0.0
    %2550 = vmatprep.subr.mxu0 0.0
    %2551 = vmatpush1.msra.mxu0 0.0
    %2552 = vmatprep.subr.mxu0 0.0
    %2553 = vmatpush1.msra.mxu0 0.0
    %2554 = vmatprep.subr.mxu0 0.0
    %2555 = vmatpush1.msra.mxu0 0.0
    %2556 = vmatprep.subr.mxu0 0.0
    %2557 = vmatpush1.msra.mxu0 0.0
    %2558 = vmatprep.subr.mxu0 0.0
    %2559 = vmatpush1.msra.mxu0 0.0
    %2560 = vmatprep.subr.mxu0 0.0
    %2561 = vmatpush1.msra.mxu0 0.0
    %2562 = vmatprep.subr.mxu0 0.0
    %2563 = vmatpush1.msra.mxu0 0.0
    %2564 = vmatprep.subr.mxu0 0.0
    %2565 = vmatpush1.msra.mxu0 0.0
    %2566 = vmatprep.subr.mxu0 0.0
    %2567 = vmatpush1.msra.mxu0 0.0
    %2568 = vmatprep.subr.mxu0 0.0
    %2569 = vmatpush1.msra.mxu0 0.0
    %2570 = vmatprep.subr.mxu0 0.0
    %2571 = vmatpush1.msra.mxu0 0.0
    %2572 = vmatprep.subr.mxu0 0.0
    %2573 = vmatpush1.msra.mxu0 0.0
    %2574 = vmatprep.subr.mxu0 0.0
    %2575 = vmatpush1.msra.mxu0 0.0
    %2576 = vmatprep.subr.mxu0 0.0
    %2577 = vmatpush1.msra.mxu0 0.0
    %2578 = vmatprep.subr.mxu0 0.0
    %2579 = vmatpush1.msra.mxu0 0.0
    %2580 = vmatprep.subr.mxu0 0.0
    %2581 = vmatpush1.msra.mxu0 0.0
    %2582 = vmatprep.mubr.f32.mxu0 0.0
    %2583 = vmatmul.mubr.f32.gmra.mrb[0].mxu0 %v2516
    %v2584 = vpop.f32.mrb[0].mxu0
    %v2585 = vadd.f32 0.0, %v2584
    %v2586 = vpop.f32.mrb[0].mxu0
    %2587 = vdwg.mxu0
    %v2588 = vrcp.pop %v2585
    %v2589 = vmul.f32 %v2585, %v2588
    %v2590 = vsub.f32 2.0, %v2589
    %v2591 = vmul.f32 %v2588, %v2590
    %v2593 = vrot.slane %v2591, 1
    %v2596 = vmul.f32 %v2509, %v2591
    %v2597 = vmul.f32 %v2511, %v2593
    %2602 = vrot.lane.b32.xlu0 %v2332, 96
    %v2603 = vpop.permute.xlu0 %2602
    %2604 = vrot.lane.b32.xlu0 %v2333, 96
    %v2605 = vpop.permute.xlu0 %2604
    %2606 = vrot.lane.b32.xlu0 %v2334, 96
    %v2607 = vpop.permute.xlu0 %2606
    %2608 = vrot.lane.b32.xlu0 %v2335, 96
    %v2609 = vpop.permute.xlu0 %2608
    %v2615 = vsel %vm59, %v2596, 0
    %2617 = vmatprep.subr.mxu0 0.0
    %2618 = vmatpush1.msra.mxu0 %v2603
    %2619 = vmatprep.subr.mxu0 0.0
    %2620 = vmatpush1.msra.mxu0 %v2605
    %2621 = vmatprep.subr.mxu0 0.0
    %2622 = vmatpush1.msra.mxu0 %v2607
    %2623 = vmatprep.subr.mxu0 0.0
    %2624 = vmatpush1.msra.mxu0 %v2609
    %2625 = vmatprep.subr.mxu0 0.0
    %2626 = vmatpush1.msra.mxu0 0.0
    %2627 = vmatprep.subr.mxu0 0.0
    %2628 = vmatpush1.msra.mxu0 0.0
    %2629 = vmatprep.subr.mxu0 0.0
    %2630 = vmatpush1.msra.mxu0 0.0
    %2631 = vmatprep.subr.mxu0 0.0
    %2632 = vmatpush1.msra.mxu0 0.0
    %2633 = vmatprep.subr.mxu0 0.0
    %2634 = vmatpush1.msra.mxu0 0.0
    %2635 = vmatprep.subr.mxu0 0.0
    %2636 = vmatpush1.msra.mxu0 0.0
    %2637 = vmatprep.subr.mxu0 0.0
    %2638 = vmatpush1.msra.mxu0 0.0
    %2639 = vmatprep.subr.mxu0 0.0
    %2640 = vmatpush1.msra.mxu0 0.0
    %2641 = vmatprep.subr.mxu0 0.0
    %2642 = vmatpush1.msra.mxu0 0.0
    %2643 = vmatprep.subr.mxu0 0.0
    %2644 = vmatpush1.msra.mxu0 0.0
    %2645 = vmatprep.subr.mxu0 0.0
    %2646 = vmatpush1.msra.mxu0 0.0
    %2647 = vmatprep.subr.mxu0 0.0
    %2648 = vmatpush1.msra.mxu0 0.0
    %2649 = vmatprep.subr.mxu0 0.0
    %2650 = vmatpush1.msra.mxu0 0.0
    %2651 = vmatprep.subr.mxu0 0.0
    %2652 = vmatpush1.msra.mxu0 0.0
    %2653 = vmatprep.subr.mxu0 0.0
    %2654 = vmatpush1.msra.mxu0 0.0
    %2655 = vmatprep.subr.mxu0 0.0
    %2656 = vmatpush1.msra.mxu0 0.0
    %2657 = vmatprep.subr.mxu0 0.0
    %2658 = vmatpush1.msra.mxu0 0.0
    %2659 = vmatprep.subr.mxu0 0.0
    %2660 = vmatpush1.msra.mxu0 0.0
    %2661 = vmatprep.subr.mxu0 0.0
    %2662 = vmatpush1.msra.mxu0 0.0
    %2663 = vmatprep.subr.mxu0 0.0
    %2664 = vmatpush1.msra.mxu0 0.0
    %2665 = vmatprep.subr.mxu0 0.0
    %2666 = vmatpush1.msra.mxu0 0.0
    %2667 = vmatprep.subr.mxu0 0.0
    %2668 = vmatpush1.msra.mxu0 0.0
    %2669 = vmatprep.subr.mxu0 0.0
    %2670 = vmatpush1.msra.mxu0 0.0
    %2671 = vmatprep.subr.mxu0 0.0
    %2672 = vmatpush1.msra.mxu0 0.0
    %2673 = vmatprep.subr.mxu0 0.0
    %2674 = vmatpush1.msra.mxu0 0.0
    %2675 = vmatprep.subr.mxu0 0.0
    %2676 = vmatpush1.msra.mxu0 0.0
    %2677 = vmatprep.subr.mxu0 0.0
    %2678 = vmatpush1.msra.mxu0 0.0
    %2679 = vmatprep.subr.mxu0 0.0
    %2680 = vmatpush1.msra.mxu0 0.0
    %2681 = vmatprep.mubr.f32.mxu0 0.0
    %2682 = vmatmul.mubr.f32.gmra.mrb[0].mxu0 %v2615
    %v2683 = vpop.f32.mrb[0].mxu0
    %v2684 = vadd.f32 0.0, %v2683
    %v2685 = vpop.f32.mrb[0].mxu0
    %2686 = vdwg.mxu0
    %2691 = vrot.lane.b32.xlu0 %v2336, 96
    %v2692 = vpop.permute.xlu0 %2691
    %2693 = vrot.lane.b32.xlu0 %v2337, 96
    %v2694 = vpop.permute.xlu0 %2693
    %2695 = vrot.lane.b32.xlu0 %v2338, 96
    %v2696 = vpop.permute.xlu0 %2695
    %2697 = vrot.lane.b32.xlu0 %v2339, 96
    %v2698 = vpop.permute.xlu0 %2697
    %v2704 = vsel %vm59, %v2597, 0
    %2706 = vmatprep.subr.mxu0 0.0
    %2707 = vmatpush1.msra.mxu0 %v2692
    %2708 = vmatprep.subr.mxu0 0.0
    %2709 = vmatpush1.msra.mxu0 %v2694
    %2710 = vmatprep.subr.mxu0 0.0
    %2711 = vmatpush1.msra.mxu0 %v2696
    %2712 = vmatprep.subr.mxu0 0.0
    %2713 = vmatpush1.msra.mxu0 %v2698
    %2714 = vmatprep.subr.mxu0 0.0
    %2715 = vmatpush1.msra.mxu0 0.0
    %2716 = vmatprep.subr.mxu0 0.0
    %2717 = vmatpush1.msra.mxu0 0.0
    %2718 = vmatprep.subr.mxu0 0.0
    %2719 = vmatpush1.msra.mxu0 0.0
    %2720 = vmatprep.subr.mxu0 0.0
    %2721 = vmatpush1.msra.mxu0 0.0
    %2722 = vmatprep.subr.mxu0 0.0
    %2723 = vmatpush1.msra.mxu0 0.0
    %2724 = vmatprep.subr.mxu0 0.0
    %2725 = vmatpush1.msra.mxu0 0.0
    %2726 = vmatprep.subr.mxu0 0.0
    %2727 = vmatpush1.msra.mxu0 0.0
    %2728 = vmatprep.subr.mxu0 0.0
    %2729 = vmatpush1.msra.mxu0 0.0
    %2730 = vmatprep.subr.mxu0 0.0
    %2731 = vmatpush1.msra.mxu0 0.0
    %2732 = vmatprep.subr.mxu0 0.0
    %2733 = vmatpush1.msra.mxu0 0.0
    %2734 = vmatprep.subr.mxu0 0.0
    %2735 = vmatpush1.msra.mxu0 0.0
    %2736 = vmatprep.subr.mxu0 0.0
    %2737 = vmatpush1.msra.mxu0 0.0
    %2738 = vmatprep.subr.mxu0 0.0
    %2739 = vmatpush1.msra.mxu0 0.0
    %2740 = vmatprep.subr.mxu0 0.0
    %2741 = vmatpush1.msra.mxu0 0.0
    %2742 = vmatprep.subr.mxu0 0.0
    %2743 = vmatpush1.msra.mxu0 0.0
    %2744 = vmatprep.subr.mxu0 0.0
    %2745 = vmatpush1.msra.mxu0 0.0
    %2746 = vmatprep.subr.mxu0 0.0
    %2747 = vmatpush1.msra.mxu0 0.0
    %2748 = vmatprep.subr.mxu0 0.0
    %2749 = vmatpush1.msra.mxu0 0.0
    %2750 = vmatprep.subr.mxu0 0.0
    %2751 = vmatpush1.msra.mxu0 0.0
    %2752 = vmatprep.subr.mxu0 0.0
    %2753 = vmatpush1.msra.mxu0 0.0
    %2754 = vmatprep.subr.mxu0 0.0
    %2755 = vmatpush1.msra.mxu0 0.0
    %2756 = vmatprep.subr.mxu0 0.0
    %2757 = vmatpush1.msra.mxu0 0.0
    %2758 = vmatprep.subr.mxu0 0.0
    %2759 = vmatpush1.msra.mxu0 0.0
    %2760 = vmatprep.subr.mxu0 0.0
    %2761 = vmatpush1.msra.mxu0 0.0
    %2762 = vmatprep.subr.mxu0 0.0
    %2763 = vmatpush1.msra.mxu0 0.0
    %2764 = vmatprep.subr.mxu0 0.0
    %2765 = vmatpush1.msra.mxu0 0.0
    %2766 = vmatprep.subr.mxu0 0.0
    %2767 = vmatpush1.msra.mxu0 0.0
    %2768 = vmatprep.subr.mxu0 0.0
    %2769 = vmatpush1.msra.mxu0 0.0
    %2770 = vmatprep.mubr.f32.mxu0 0.0
    %2771 = vmatmul.mubr.f32.gmra.mrb[0].mxu0 %v2704
    %v2772 = vpop.f32.mrb[0].mxu0
    %v2773 = vadd.f32 0.0, %v2772
    %v2774 = vpop.f32.mrb[0].mxu0
    %2775 = vdwg.mxu0
    %v2776 = vld [vmem:[#allocation5 + $0x288] sm:$0xff]
    %v2777 = vld [vmem:[#allocation5 + $0x290] sm:$0xff]
    %v2778 = vld [vmem:[#allocation5 + $0x298] sm:$0xff]
    %v2779 = vld [vmem:[#allocation5 + $0x2a0] sm:$0xff]
    %v2780 = vld [vmem:[#allocation5 + $0x2a8] sm:$0x1]
    %v2781 = vlaneseq
    %v2782 = vshrl.u32 %v2781, 7
    %v2783 = vsub.s32 0, %v2782
    %v2784 = vrot.slane %v2780, %v2783
    %v2787 = vrot.slane %v2773, 7
    %v2788 = vsel %vm2072, %v2787, %v2684
    %v2789 = vsel %vm59, %v2788, 0
    %2791 = vmatprep.subr.mxu0 0.0
    %2792 = vmatpush1.msra.mxu0 %v2776
    %2793 = vmatprep.subr.mxu0 0.0
    %2794 = vmatpush1.msra.mxu0 %v2777
    %2795 = vmatprep.subr.mxu0 0.0
    %2796 = vmatpush1.msra.mxu0 %v2778
    %2797 = vmatprep.subr.mxu0 0.0
    %2798 = vmatpush1.msra.mxu0 %v2779
    %2799 = vmatprep.subr.mxu0 0.0
    %2800 = vmatpush1.msra.mxu0 0.0
    %2801 = vmatprep.subr.mxu0 0.0
    %2802 = vmatpush1.msra.mxu0 0.0
    %2803 = vmatprep.subr.mxu0 0.0
    %2804 = vmatpush1.msra.mxu0 0.0
    %2805 = vmatprep.subr.mxu0 0.0
    %2806 = vmatpush1.msra.mxu0 0.0
    %2807 = vmatprep.subr.mxu0 0.0
    %2808 = vmatpush1.msra.mxu0 0.0
    %2809 = vmatprep.subr.mxu0 0.0
    %2810 = vmatpush1.msra.mxu0 0.0
    %2811 = vmatprep.subr.mxu0 0.0
    %2812 = vmatpush1.msra.mxu0 0.0
    %2813 = vmatprep.subr.mxu0 0.0
    %2814 = vmatpush1.msra.mxu0 0.0
    %2815 = vmatprep.subr.mxu0 0.0
    %2816 = vmatpush1.msra.mxu0 0.0
    %2817 = vmatprep.subr.mxu0 0.0
    %2818 = vmatpush1.msra.mxu0 0.0
    %2819 = vmatprep.subr.mxu0 0.0
    %2820 = vmatpush1.msra.mxu0 0.0
    %2821 = vmatprep.subr.mxu0 0.0
    %2822 = vmatpush1.msra.mxu0 0.0
    %2823 = vmatprep.subr.mxu0 0.0
    %2824 = vmatpush1.msra.mxu0 0.0
    %2825 = vmatprep.subr.mxu0 0.0
    %2826 = vmatpush1.msra.mxu0 0.0
    %2827 = vmatprep.subr.mxu0 0.0
    %2828 = vmatpush1.msra.mxu0 0.0
    %2829 = vmatprep.subr.mxu0 0.0
    %2830 = vmatpush1.msra.mxu0 0.0
    %2831 = vmatprep.subr.mxu0 0.0
    %2832 = vmatpush1.msra.mxu0 0.0
    %2833 = vmatprep.subr.mxu0 0.0
    %2834 = vmatpush1.msra.mxu0 0.0
    %2835 = vmatprep.subr.mxu0 0.0
    %2836 = vmatpush1.msra.mxu0 0.0
    %2837 = vmatprep.subr.mxu0 0.0
    %2838 = vmatpush1.msra.mxu0 0.0
    %2839 = vmatprep.subr.mxu0 0.0
    %2840 = vmatpush1.msra.mxu0 0.0
    %2841 = vmatprep.subr.mxu0 0.0
    %2842 = vmatpush1.msra.mxu0 0.0
    %2843 = vmatprep.subr.mxu0 0.0
    %2844 = vmatpush1.msra.mxu0 0.0
    %2845 = vmatprep.subr.mxu0 0.0
    %2846 = vmatpush1.msra.mxu0 0.0
    %2847 = vmatprep.subr.mxu0 0.0
    %2848 = vmatpush1.msra.mxu0 0.0
    %2849 = vmatprep.subr.mxu0 0.0
    %2850 = vmatpush1.msra.mxu0 0.0
    %2851 = vmatprep.subr.mxu0 0.0
    %2852 = vmatpush1.msra.mxu0 0.0
    %2853 = vmatprep.subr.mxu0 0.0
    %2854 = vmatpush1.msra.mxu0 0.0
    %2855 = vmatprep.mubr.f32.mxu0 0.0
    %2856 = vmatmul.mubr.f32.gmra.mrb[0].mxu0 %v2789
    %v2857 = vpop.f32.mrb[0].mxu0
    %v2858 = vadd.f32 %v2784, %v2857
    %v2859 = vpop.f32.mrb[0].mxu0
    %2860 = vdwg.mxu0
    %v2862 = vrot.slane %v2858, 1
    %v2863 = vrot.slane %v2858, 2
    %v2866 = vadd.f32 %v2213, %v2862
    %v2867 = vadd.f32 %v2214, %v2863
    %v2870 = vrot.slane %v2867, 7
    %v2873 = vsel %vm2158, %v2866, 0.0
    %2874 = vadd.xlane.f32.xlu0 %v2873
    %v2875 = vpop.xlane.xlu0 %2874
    %v2876 = vsel %vm2162, %v2870, 0.0
    %2877 = vadd.xlane.f32.xlu0 %v2876
    %v2878 = vpop.xlane.xlu0 %2877
    %v2879 = vmul.f32 %v2875, %v742
    %v2880 = vmul.f32 %v2878, %v742
    %v2883 = vrot.slane %v2880, 1
    %v2886 = vsub.f32 %v2866, %v2879
    %v2887 = vsub.f32 %v2867, %v2883
    %v2888 = vmul.f32 %v2886, %v2886
    %v2889 = vmul.f32 %v2887, %v2887
    %v2892 = vrot.slane %v2889, 7
    %v2895 = vsel %vm2158, %v2888, 0.0
    %2896 = vadd.xlane.f32.xlu0 %v2895
    %v2897 = vpop.xlane.xlu0 %2896
    %v2898 = vsel %vm2162, %v2892, 0.0
    %2899 = vadd.xlane.f32.xlu0 %v2898
    %v2900 = vpop.xlane.xlu0 %2899
    %v2901 = vmul.f32 %v2897, %v742
    %v2902 = vmul.f32 %v2900, %v742
    %v2903 = vadd.f32 %v2901, 1e-05
    %v2904 = vadd.f32 %v2902, 1e-05
    %v2905 = vrsqrt.pop %v2903
    %v2906 = vrsqrt.pop %v2904
    %v2909 = vrot.slane %v2906, 1
    %v2912 = vmul.f32 %v2886, %v2905
    %v2913 = vmul.f32 %v2887, %v2909
    %v2914 = vld [vmem:[#allocation5 + $0x330] sm:$0x1]
    %v2915 = vlaneseq
    %v2916 = vshrl.u32 %v2915, 7
    %v2917 = vsub.s32 0, %v2916
    %v2918 = vrot.slane %v2914, %v2917
    %v2919 = vmul.f32 %v2912, %v2918
    %v2920 = vmul.f32 %v2913, %v2918
    %v2921 = vld [vmem:[#allocation5 + $0x338] sm:$0x1]
    %v2922 = vlaneseq
    %v2923 = vshrl.u32 %v2922, 7
    %v2924 = vsub.s32 0, %v2923
    %v2925 = vrot.slane %v2921, %v2924
    %v2926 = vadd.f32 %v2919, %v2925
    %v2927 = vadd.f32 %v2920, %v2925
    %v2928 = vld [vmem:[#allocation5 + $0x2b0] sm:$0xff]
    %v2929 = vld [vmem:[#allocation5 + $0x2b8] sm:$0xff]
    %v2930 = vld [vmem:[#allocation5 + $0x2c0] sm:$0xff]
    %v2931 = vld [vmem:[#allocation5 + $0x2c8] sm:$0xff]
    %v2932 = vld [vmem:[#allocation5 + $0x2d0] sm:$0x1]
    %v2933 = vlaneseq
    %v2934 = vshrl.u32 %v2933, 7
    %v2935 = vsub.s32 0, %v2934
    %v2936 = vrot.slane %v2932, %v2935
    %v2939 = vrot.slane %v2926, 7
    %v2940 = vrot.slane %v2927, 6
    %v2941 = vsel %vm2072, %v2940, %v2939
    %v2942 = vsel %vm59, %v2941, 0
    %2944 = vmatprep.subr.mxu0 0.0
    %2945 = vmatpush1.msra.mxu0 %v2928
    %2946 = vmatprep.subr.mxu0 0.0
    %2947 = vmatpush1.msra.mxu0 %v2929
    %2948 = vmatprep.subr.mxu0 0.0
    %2949 = vmatpush1.msra.mxu0 %v2930
    %2950 = vmatprep.subr.mxu0 0.0
    %2951 = vmatpush1.msra.mxu0 %v2931
    %2952 = vmatprep.subr.mxu0 0.0
    %2953 = vmatpush1.msra.mxu0 0.0
    %2954 = vmatprep.subr.mxu0 0.0
    %2955 = vmatpush1.msra.mxu0 0.0
    %2956 = vmatprep.subr.mxu0 0.0
    %2957 = vmatpush1.msra.mxu0 0.0
    %2958 = vmatprep.subr.mxu0 0.0
    %2959 = vmatpush1.msra.mxu0 0.0
    %2960 = vmatprep.subr.mxu0 0.0
    %2961 = vmatpush1.msra.mxu0 0.0
    %2962 = vmatprep.subr.mxu0 0.0
    %2963 = vmatpush1.msra.mxu0 0.0
    %2964 = vmatprep.subr.mxu0 0.0
    %2965 = vmatpush1.msra.mxu0 0.0
    %2966 = vmatprep.subr.mxu0 0.0
    %2967 = vmatpush1.msra.mxu0 0.0
    %2968 = vmatprep.subr.mxu0 0.0
    %2969 = vmatpush1.msra.mxu0 0.0
    %2970 = vmatprep.subr.mxu0 0.0
    %2971 = vmatpush1.msra.mxu0 0.0
    %2972 = vmatprep.subr.mxu0 0.0
    %2973 = vmatpush1.msra.mxu0 0.0
    %2974 = vmatprep.subr.mxu0 0.0
    %2975 = vmatpush1.msra.mxu0 0.0
    %2976 = vmatprep.subr.mxu0 0.0
    %2977 = vmatpush1.msra.mxu0 0.0
    %2978 = vmatprep.subr.mxu0 0.0
    %2979 = vmatpush1.msra.mxu0 0.0
    %2980 = vmatprep.subr.mxu0 0.0
    %2981 = vmatpush1.msra.mxu0 0.0
    %2982 = vmatprep.subr.mxu0 0.0
    %2983 = vmatpush1.msra.mxu0 0.0
    %2984 = vmatprep.subr.mxu0 0.0
    %2985 = vmatpush1.msra.mxu0 0.0
    %2986 = vmatprep.subr.mxu0 0.0
    %2987 = vmatpush1.msra.mxu0 0.0
    %2988 = vmatprep.subr.mxu0 0.0
    %2989 = vmatpush1.msra.mxu0 0.0
    %2990 = vmatprep.subr.mxu0 0.0
    %2991 = vmatpush1.msra.mxu0 0.0
    %2992 = vmatprep.subr.mxu0 0.0
    %2993 = vmatpush1.msra.mxu0 0.0
    %2994 = vmatprep.subr.mxu0 0.0
    %2995 = vmatpush1.msra.mxu0 0.0
    %2996 = vmatprep.subr.mxu0 0.0
    %2997 = vmatpush1.msra.mxu0 0.0
    %2998 = vmatprep.subr.mxu0 0.0
    %2999 = vmatpush1.msra.mxu0 0.0
    %3000 = vmatprep.subr.mxu0 0.0
    %3001 = vmatpush1.msra.mxu0 0.0
    %3002 = vmatprep.subr.mxu0 0.0
    %3003 = vmatpush1.msra.mxu0 0.0
    %3004 = vmatprep.subr.mxu0 0.0
    %3005 = vmatpush1.msra.mxu0 0.0
    %3006 = vmatprep.subr.mxu0 0.0
    %3007 = vmatpush1.msra.mxu0 0.0
    %3008 = vmatprep.mubr.f32.mxu0 0.0
    %3009 = vmatmul.mubr.f32.gmra.mrb[0].mxu0 %v2942
    %v3010 = vpop.f32.mrb[0].mxu0
    %v3011 = vadd.f32 %v2936, %v3010
    %v3012 = vpop.f32.mrb[0].mxu0
    %3013 = vdwg.mxu0
    %v3014 = vmax.f32 %v3011, 0.0
    %v3015 = vld [vmem:[#allocation5 + $0x2d8] sm:$0xff]
    %v3016 = vld [vmem:[#allocation5 + $0x2e0] sm:$0xff]
    %v3017 = vld [vmem:[#allocation5 + $0x2e8] sm:$0xff]
    %v3018 = vld [vmem:[#allocation5 + $0x2f0] sm:$0xff]
    %v3019 = vld [vmem:[#allocation5 + $0x2f8] sm:$0xff]
    %v3020 = vld [vmem:[#allocation5 + $0x300] sm:$0xff]
    %v3021 = vld [vmem:[#allocation5 + $0x308] sm:$0xff]
    %v3022 = vld [vmem:[#allocation5 + $0x310] sm:$0xff]
    %v3023 = vld [vmem:[#allocation5 + $0x318] sm:$0x1]
    %v3024 = vlaneseq
    %v3025 = vshrl.u32 %v3024, 7
    %v3026 = vsub.s32 0, %v3025
    %v3027 = vrot.slane %v3023, %v3026
    %v3029 = vsel %vm882, %v3014, 0
    %3031 = vmatprep.subr.mxu0 0.0
    %3032 = vmatpush1.msra.mxu0 %v3015
    %3033 = vmatprep.subr.mxu0 0.0
    %3034 = vmatpush1.msra.mxu0 %v3016
    %3035 = vmatprep.subr.mxu0 0.0
    %3036 = vmatpush1.msra.mxu0 %v3017
    %3037 = vmatprep.subr.mxu0 0.0
    %3038 = vmatpush1.msra.mxu0 %v3018
    %3039 = vmatprep.subr.mxu0 0.0
    %3040 = vmatpush1.msra.mxu0 %v3019
    %3041 = vmatprep.subr.mxu0 0.0
    %3042 = vmatpush1.msra.mxu0 %v3020
    %3043 = vmatprep.subr.mxu0 0.0
    %3044 = vmatpush1.msra.mxu0 %v3021
    %3045 = vmatprep.subr.mxu0 0.0
    %3046 = vmatpush1.msra.mxu0 %v3022
    %3047 = vmatprep.subr.mxu0 0.0
    %3048 = vmatpush1.msra.mxu0 0.0
    %3049 = vmatprep.subr.mxu0 0.0
    %3050 = vmatpush1.msra.mxu0 0.0
    %3051 = vmatprep.subr.mxu0 0.0
    %3052 = vmatpush1.msra.mxu0 0.0
    %3053 = vmatprep.subr.mxu0 0.0
    %3054 = vmatpush1.msra.mxu0 0.0
    %3055 = vmatprep.subr.mxu0 0.0
    %3056 = vmatpush1.msra.mxu0 0.0
    %3057 = vmatprep.subr.mxu0 0.0
    %3058 = vmatpush1.msra.mxu0 0.0
    %3059 = vmatprep.subr.mxu0 0.0
    %3060 = vmatpush1.msra.mxu0 0.0
    %3061 = vmatprep.subr.mxu0 0.0
    %3062 = vmatpush1.msra.mxu0 0.0
    %3063 = vmatprep.subr.mxu0 0.0
    %3064 = vmatpush1.msra.mxu0 0.0
    %3065 = vmatprep.subr.mxu0 0.0
    %3066 = vmatpush1.msra.mxu0 0.0
    %3067 = vmatprep.subr.mxu0 0.0
    %3068 = vmatpush1.msra.mxu0 0.0
    %3069 = vmatprep.subr.mxu0 0.0
    %3070 = vmatpush1.msra.mxu0 0.0
    %3071 = vmatprep.subr.mxu0 0.0
    %3072 = vmatpush1.msra.mxu0 0.0
    %3073 = vmatprep.subr.mxu0 0.0
    %3074 = vmatpush1.msra.mxu0 0.0
    %3075 = vmatprep.subr.mxu0 0.0
    %3076 = vmatpush1.msra.mxu0 0.0
    %3077 = vmatprep.subr.mxu0 0.0
    %3078 = vmatpush1.msra.mxu0 0.0
    %3079 = vmatprep.subr.mxu0 0.0
    %3080 = vmatpush1.msra.mxu0 0.0
    %3081 = vmatprep.subr.mxu0 0.0
    %3082 = vmatpush1.msra.mxu0 0.0
    %3083 = vmatprep.subr.mxu0 0.0
    %3084 = vmatpush1.msra.mxu0 0.0
    %3085 = vmatprep.subr.mxu0 0.0
    %3086 = vmatpush1.msra.mxu0 0.0
    %3087 = vmatprep.subr.mxu0 0.0
    %3088 = vmatpush1.msra.mxu0 0.0
    %3089 = vmatprep.subr.mxu0 0.0
    %3090 = vmatpush1.msra.mxu0 0.0
    %3091 = vmatprep.subr.mxu0 0.0
    %3092 = vmatpush1.msra.mxu0 0.0
    %3093 = vmatprep.subr.mxu0 0.0
    %3094 = vmatpush1.msra.mxu0 0.0
    %3095 = vmatprep.mubr.f32.mxu0 0.0
    %3096 = vmatmul.mubr.f32.gmra.mrb[0].mxu0 %v3029
    %v3097 = vpop.f32.mrb[0].mxu0
    %v3098 = vadd.f32 %v3027, %v3097
    %v3099 = vpop.f32.mrb[0].mxu0
    %3100 = vdwg.mxu0
    %v3102 = vrot.slane %v3098, 1
    %v3103 = vrot.slane %v3098, 2
    %v3106 = vadd.f32 %v2926, %v3102
    %v3107 = vadd.f32 %v2927, %v3103
    %v3110 = vrot.slane %v3107, 7
    %v3113 = vsel %vm2158, %v3106, 0.0
    %3114 = vadd.xlane.f32.xlu0 %v3113
    %v3115 = vpop.xlane.xlu0 %3114
    %v3116 = vsel %vm2162, %v3110, 0.0
    %3117 = vadd.xlane.f32.xlu0 %v3116
    %v3118 = vpop.xlane.xlu0 %3117
    %v3119 = vmul.f32 %v3115, %v742
    %v3120 = vmul.f32 %v3118, %v742
    %v3123 = vrot.slane %v3120, 1
    %v3126 = vsub.f32 %v3106, %v3119
    %v3127 = vsub.f32 %v3107, %v3123
    %v3128 = vmul.f32 %v3126, %v3126
    %v3129 = vmul.f32 %v3127, %v3127
    %v3132 = vrot.slane %v3129, 7
    %v3135 = vsel %vm2158, %v3128, 0.0
    %3136 = vadd.xlane.f32.xlu0 %v3135
    %v3137 = vpop.xlane.xlu0 %3136
    %v3138 = vsel %vm2162, %v3132, 0.0
    %3139 = vadd.xlane.f32.xlu0 %v3138
    %v3140 = vpop.xlane.xlu0 %3139
    %v3141 = vmul.f32 %v3137, %v742
    %v3142 = vmul.f32 %v3140, %v742
    %v3143 = vadd.f32 %v3141, 1e-05
    %v3144 = vadd.f32 %v3142, 1e-05
    %v3145 = vrsqrt.pop %v3143
    %v3146 = vrsqrt.pop %v3144
    %v3149 = vrot.slane %v3146, 1
    %v3152 = vmul.f32 %v3126, %v3145
    %v3153 = vmul.f32 %v3127, %v3149
    %v3154 = vld [vmem:[#allocation5 + $0x340] sm:$0x1]
    %v3155 = vlaneseq
    %v3156 = vshrl.u32 %v3155, 7
    %v3157 = vsub.s32 0, %v3156
    %v3158 = vrot.slane %v3154, %v3157
    %v3159 = vmul.f32 %v3152, %v3158
    %v3160 = vmul.f32 %v3153, %v3158
    %v3161 = vld [vmem:[#allocation5 + $0x348] sm:$0x1]
    %v3162 = vlaneseq
    %v3163 = vshrl.u32 %v3162, 7
    %v3164 = vsub.s32 0, %v3163
    %v3165 = vrot.slane %v3161, %v3164
    %v3166 = vadd.f32 %v3159, %v3165
    %v3167 = vadd.f32 %v3160, %v3165
    %v3168 = vld [vmem:[#allocation5 + $0x350] sm:$0xff]
    %v3169 = vld [vmem:[#allocation5 + $0x358] sm:$0xff]
    %v3170 = vld [vmem:[#allocation5 + $0x360] sm:$0xff]
    %v3171 = vld [vmem:[#allocation5 + $0x368] sm:$0xff]
    %v3172 = vld [vmem:[#allocation5 + $0x370] sm:$0x1]
    %v3173 = vlaneseq
    %v3174 = vshrl.u32 %v3173, 7
    %v3175 = vsub.s32 0, %v3174
    %v3176 = vrot.slane %v3172, %v3175
    %v3179 = vrot.slane %v3166, 7
    %v3180 = vrot.slane %v3167, 6
    %v3181 = vsel %vm2072, %v3180, %v3179
    %v3182 = vsel %vm59, %v3181, 0
    %3184 = vmatprep.subr.mxu0 0.0
    %3185 = vmatpush1.msra.mxu0 %v3168
    %3186 = vmatprep.subr.mxu0 0.0
    %3187 = vmatpush1.msra.mxu0 %v3169
    %3188 = vmatprep.subr.mxu0 0.0
    %3189 = vmatpush1.msra.mxu0 %v3170
    %3190 = vmatprep.subr.mxu0 0.0
    %3191 = vmatpush1.msra.mxu0 %v3171
    %3192 = vmatprep.subr.mxu0 0.0
    %3193 = vmatpush1.msra.mxu0 0.0
    %3194 = vmatprep.subr.mxu0 0.0
    %3195 = vmatpush1.msra.mxu0 0.0
    %3196 = vmatprep.subr.mxu0 0.0
    %3197 = vmatpush1.msra.mxu0 0.0
    %3198 = vmatprep.subr.mxu0 0.0
    %3199 = vmatpush1.msra.mxu0 0.0
    %3200 = vmatprep.subr.mxu0 0.0
    %3201 = vmatpush1.msra.mxu0 0.0
    %3202 = vmatprep.subr.mxu0 0.0
    %3203 = vmatpush1.msra.mxu0 0.0
    %3204 = vmatprep.subr.mxu0 0.0
    %3205 = vmatpush1.msra.mxu0 0.0
    %3206 = vmatprep.subr.mxu0 0.0
    %3207 = vmatpush1.msra.mxu0 0.0
    %3208 = vmatprep.subr.mxu0 0.0
    %3209 = vmatpush1.msra.mxu0 0.0
    %3210 = vmatprep.subr.mxu0 0.0
    %3211 = vmatpush1.msra.mxu0 0.0
    %3212 = vmatprep.subr.mxu0 0.0
    %3213 = vmatpush1.msra.mxu0 0.0
    %3214 = vmatprep.subr.mxu0 0.0
    %3215 = vmatpush1.msra.mxu0 0.0
    %3216 = vmatprep.subr.mxu0 0.0
    %3217 = vmatpush1.msra.mxu0 0.0
    %3218 = vmatprep.subr.mxu0 0.0
    %3219 = vmatpush1.msra.mxu0 0.0
    %3220 = vmatprep.subr.mxu0 0.0
    %3221 = vmatpush1.msra.mxu0 0.0
    %3222 = vmatprep.subr.mxu0 0.0
    %3223 = vmatpush1.msra.mxu0 0.0
    %3224 = vmatprep.subr.mxu0 0.0
    %3225 = vmatpush1.msra.mxu0 0.0
    %3226 = vmatprep.subr.mxu0 0.0
    %3227 = vmatpush1.msra.mxu0 0.0
    %3228 = vmatprep.subr.mxu0 0.0
    %3229 = vmatpush1.msra.mxu0 0.0
    %3230 = vmatprep.subr.mxu0 0.0
    %3231 = vmatpush1.msra.mxu0 0.0
    %3232 = vmatprep.subr.mxu0 0.0
    %3233 = vmatpush1.msra.mxu0 0.0
    %3234 = vmatprep.subr.mxu0 0.0
    %3235 = vmatpush1.msra.mxu0 0.0
    %3236 = vmatprep.subr.mxu0 0.0
    %3237 = vmatpush1.msra.mxu0 0.0
    %3238 = vmatprep.subr.mxu0 0.0
    %3239 = vmatpush1.msra.mxu0 0.0
    %3240 = vmatprep.subr.mxu0 0.0
    %3241 = vmatpush1.msra.mxu0 0.0
    %3242 = vmatprep.subr.mxu0 0.0
    %3243 = vmatpush1.msra.mxu0 0.0
    %3244 = vmatprep.subr.mxu0 0.0
    %3245 = vmatpush1.msra.mxu0 0.0
    %3246 = vmatprep.subr.mxu0 0.0
    %3247 = vmatpush1.msra.mxu0 0.0
    %3248 = vmatprep.mubr.f32.mxu0 0.0
    %3249 = vmatmul.mubr.f32.gmra.mrb[0].mxu0 %v3182
    %v3250 = vpop.f32.mrb[0].mxu0
    %v3251 = vadd.f32 %v3176, %v3250
    %v3252 = vpop.f32.mrb[0].mxu0
    %3253 = vdwg.mxu0
    %v3255 = vrot.slane %v3251, 1
    %v3256 = vrot.slane %v3251, 2
    %v3259 = vadd.f32 %v3166, %v3255
    %v3260 = vadd.f32 %v3167, %v3256
    %v3263 = vrot.slane %v3260, 7
    %v3266 = vsel %vm2158, %v3259, 0.0
    %3267 = vadd.xlane.f32.xlu0 %v3266
    %v3268 = vpop.xlane.xlu0 %3267
    %v3269 = vsel %vm2162, %v3263, 0.0
    %3270 = vadd.xlane.f32.xlu0 %v3269
    %v3271 = vpop.xlane.xlu0 %3270
    %v3272 = vmul.f32 %v3268, %v742
    %v3273 = vmul.f32 %v3271, %v742
    %v3276 = vrot.slane %v3273, 1
    %v3279 = vsub.f32 %v3259, %v3272
    %v3280 = vsub.f32 %v3260, %v3276
    %v3281 = vmul.f32 %v3279, %v3279
    %v3282 = vmul.f32 %v3280, %v3280
    %v3285 = vrot.slane %v3282, 7
    %v3288 = vsel %vm2158, %v3281, 0.0
    %3289 = vadd.xlane.f32.xlu0 %v3288
    %v3290 = vpop.xlane.xlu0 %3289
    %v3291 = vsel %vm2162, %v3285, 0.0
    %3292 = vadd.xlane.f32.xlu0 %v3291
    %v3293 = vpop.xlane.xlu0 %3292
    %v3294 = vmul.f32 %v3290, %v742
    %v3295 = vmul.f32 %v3293, %v742
    %v3296 = vadd.f32 %v3294, 1e-05
    %v3297 = vadd.f32 %v3295, 1e-05
    %v3298 = vrsqrt.pop %v3296
    %v3299 = vrsqrt.pop %v3297
    %v3302 = vrot.slane %v3299, 1
    %v3305 = vmul.f32 %v3279, %v3298
    %v3306 = vmul.f32 %v3280, %v3302
    %v3307 = vld [vmem:[#allocation5 + $0x438] sm:$0x1]
    %v3308 = vlaneseq
    %v3309 = vshrl.u32 %v3308, 7
    %v3310 = vsub.s32 0, %v3309
    %v3311 = vrot.slane %v3307, %v3310
    %v3312 = vmul.f32 %v3305, %v3311
    %v3313 = vmul.f32 %v3306, %v3311
    %v3314 = vld [vmem:[#allocation5 + $0x440] sm:$0x1]
    %v3315 = vlaneseq
    %v3316 = vshrl.u32 %v3315, 7
    %v3317 = vsub.s32 0, %v3316
    %v3318 = vrot.slane %v3314, %v3317
    %v3319 = vadd.f32 %v3312, %v3318
    %v3320 = vadd.f32 %v3313, %v3318
    %v3321 = vld [vmem:[#allocation5 + $0x378] sm:$0xff]
    %v3322 = vld [vmem:[#allocation5 + $0x380] sm:$0xff]
    %v3323 = vld [vmem:[#allocation5 + $0x388] sm:$0xff]
    %v3324 = vld [vmem:[#allocation5 + $0x390] sm:$0xff]
    %v3325 = vld [vmem:[#allocation5 + $0x398] sm:$0x1]
    %v3326 = vlaneseq
    %v3327 = vshrl.u32 %v3326, 7
    %v3328 = vsub.s32 0, %v3327
    %v3329 = vrot.slane %v3325, %v3328
    %v3332 = vrot.slane %v3319, 7
    %v3333 = vrot.slane %v3320, 6
    %v3334 = vsel %vm2072, %v3333, %v3332
    %v3335 = vsel %vm59, %v3334, 0
    %3337 = vmatprep.subr.mxu0 0.0
    %3338 = vmatpush1.msra.mxu0 %v3321
    %3339 = vmatprep.subr.mxu0 0.0
    %3340 = vmatpush1.msra.mxu0 %v3322
    %3341 = vmatprep.subr.mxu0 0.0
    %3342 = vmatpush1.msra.mxu0 %v3323
    %3343 = vmatprep.subr.mxu0 0.0
    %3344 = vmatpush1.msra.mxu0 %v3324
    %3345 = vmatprep.subr.mxu0 0.0
    %3346 = vmatpush1.msra.mxu0 0.0
    %3347 = vmatprep.subr.mxu0 0.0
    %3348 = vmatpush1.msra.mxu0 0.0
    %3349 = vmatprep.subr.mxu0 0.0
    %3350 = vmatpush1.msra.mxu0 0.0
    %3351 = vmatprep.subr.mxu0 0.0
    %3352 = vmatpush1.msra.mxu0 0.0
    %3353 = vmatprep.subr.mxu0 0.0
    %3354 = vmatpush1.msra.mxu0 0.0
    %3355 = vmatprep.subr.mxu0 0.0
    %3356 = vmatpush1.msra.mxu0 0.0
    %3357 = vmatprep.subr.mxu0 0.0
    %3358 = vmatpush1.msra.mxu0 0.0
    %3359 = vmatprep.subr.mxu0 0.0
    %3360 = vmatpush1.msra.mxu0 0.0
    %3361 = vmatprep.subr.mxu0 0.0
    %3362 = vmatpush1.msra.mxu0 0.0
    %3363 = vmatprep.subr.mxu0 0.0
    %3364 = vmatpush1.msra.mxu0 0.0
    %3365 = vmatprep.subr.mxu0 0.0
    %3366 = vmatpush1.msra.mxu0 0.0
    %3367 = vmatprep.subr.mxu0 0.0
    %3368 = vmatpush1.msra.mxu0 0.0
    %3369 = vmatprep.subr.mxu0 0.0
    %3370 = vmatpush1.msra.mxu0 0.0
    %3371 = vmatprep.subr.mxu0 0.0
    %3372 = vmatpush1.msra.mxu0 0.0
    %3373 = vmatprep.subr.mxu0 0.0
    %3374 = vmatpush1.msra.mxu0 0.0
    %3375 = vmatprep.subr.mxu0 0.0
    %3376 = vmatpush1.msra.mxu0 0.0
    %3377 = vmatprep.subr.mxu0 0.0
    %3378 = vmatpush1.msra.mxu0 0.0
    %3379 = vmatprep.subr.mxu0 0.0
    %3380 = vmatpush1.msra.mxu0 0.0
    %3381 = vmatprep.subr.mxu0 0.0
    %3382 = vmatpush1.msra.mxu0 0.0
    %3383 = vmatprep.subr.mxu0 0.0
    %3384 = vmatpush1.msra.mxu0 0.0
    %3385 = vmatprep.subr.mxu0 0.0
    %3386 = vmatpush1.msra.mxu0 0.0
    %3387 = vmatprep.subr.mxu0 0.0
    %3388 = vmatpush1.msra.mxu0 0.0
    %3389 = vmatprep.subr.mxu0 0.0
    %3390 = vmatpush1.msra.mxu0 0.0
    %3391 = vmatprep.subr.mxu0 0.0
    %3392 = vmatpush1.msra.mxu0 0.0
    %3393 = vmatprep.subr.mxu0 0.0
    %3394 = vmatpush1.msra.mxu0 0.0
    %3395 = vmatprep.subr.mxu0 0.0
    %3396 = vmatpush1.msra.mxu0 0.0
    %3397 = vmatprep.subr.mxu0 0.0
    %3398 = vmatpush1.msra.mxu0 0.0
    %3399 = vmatprep.subr.mxu0 0.0
    %3400 = vmatpush1.msra.mxu0 0.0
    %3401 = vmatprep.mubr.f32.mxu0 0.0
    %3402 = vmatmul.mubr.f32.gmra.mrb[0].mxu0 %v3335
    %v3403 = vpop.f32.mrb[0].mxu0
    %v3404 = vadd.f32 %v3329, %v3403
    %v3405 = vpop.f32.mrb[0].mxu0
    %3406 = vdwg.mxu0
    %v3409 = vunpack.c.l.s4 1966171168
    %v3410 = vunpack.c.0.s8 %v3409
    %v3411 = vlaneseq
    %v3412 = vshrl.u32 %v3411, 7
    %v3413 = vsub.s32 %v3410, %v3412
    %v3414 = vrot.slane %v3404, %v3413
    %v3415 = vcombine.high %v3414, %v3414
    %v3417 = vunpack.c.l.s4 1966171168
    %v3418 = vunpack.c.0.s8 %v3417
    %v3419 = vlaneseq
    %v3420 = vshrl.u32 %v3419, 7
    %v3421 = vsub.s32 %v3418, %v3420
    %v3422 = vrot.slane %v3414, %v3421
    %v3424 = vunpack.c.l.s4 1966171168
    %v3425 = vunpack.c.0.s8 %v3424
    %v3426 = vlaneseq
    %v3427 = vshrl.u32 %v3426, 7
    %v3428 = vsub.s32 %v3425, %v3427
    %v3429 = vrot.slane %v3415, %v3428
    %v3430 = vmul.f32 %v2053, %v166
    %v3431 = vmul.f32 %v2053, %v168
    %v3432 = vmul.f32 %v2053, %v170
    %v3433 = vmul.f32 %v2053, %v172
    %v3434 = vmul.f32 %v2058, %v166
    %v3435 = vmul.f32 %v2058, %v168
    %v3436 = vmul.f32 %v2058, %v170
    %v3437 = vmul.f32 %v2058, %v172
    %3438 = vrot.lane.b32.xlu0 %v40, 96
    %v3439 = vpop.permute.xlu0 %3438
    %3440 = vrot.lane.b32.xlu0 %v41, 96
    %v3441 = vpop.permute.xlu0 %3440
    %3442 = vrot.lane.b32.xlu0 %v42, 96
    %v3443 = vpop.permute.xlu0 %3442
    %3444 = vrot.lane.b32.xlu0 %v43, 96
    %v3445 = vpop.permute.xlu0 %3444
    %v3450 = vmul.f32 %v2053, %v3439
    %v3451 = vmul.f32 %v2053, %v3441
    %v3452 = vmul.f32 %v2053, %v3443
    %v3453 = vmul.f32 %v2053, %v3445
    %v3454 = vmul.f32 %v2058, %v3439
    %v3455 = vmul.f32 %v2058, %v3441
    %v3456 = vmul.f32 %v2058, %v3443
    %v3457 = vmul.f32 %v2058, %v3445
    %3462 = vrot.lane.b32.xlu0 %v3430, 64
    %v3463 = vpop.permute.xlu0 %3462
    %3464 = vrot.lane.b32.xlu0 %v3431, 64
    %v3465 = vpop.permute.xlu0 %3464
    %3466 = vrot.lane.b32.xlu0 %v3432, 64
    %v3467 = vpop.permute.xlu0 %3466
    %3468 = vrot.lane.b32.xlu0 %v3433, 64
    %v3469 = vpop.permute.xlu0 %3468
    %v3470 = vsel %vm59, %v3422, 0
    %v3472 = vsel %vm59, %v3463, 0
    %v3474 = vsel %vm59, %v3465, 0
    %v3476 = vsel %vm59, %v3467, 0
    %v3478 = vsel %vm59, %v3469, 0
    %3480 = vmatprep.subr.mxu0 0.0
    %3481 = vmatpush1.xpose.msra.mxu0 %v3472
    %3482 = vmatprep.subr.mxu0 0.0
    %3483 = vmatpush1.xpose.msra.mxu0 %v3474
    %3484 = vmatprep.subr.mxu0 0.0
    %3485 = vmatpush1.xpose.msra.mxu0 %v3476
    %3486 = vmatprep.subr.mxu0 0.0
    %3487 = vmatpush1.xpose.msra.mxu0 %v3478
    %3488 = vmatprep.subr.mxu0 0.0
    %3489 = vmatpush1.xpose.msra.mxu0 0.0
    %3490 = vmatprep.subr.mxu0 0.0
    %3491 = vmatpush1.xpose.msra.mxu0 0.0
    %3492 = vmatprep.subr.mxu0 0.0
    %3493 = vmatpush1.xpose.msra.mxu0 0.0
    %3494 = vmatprep.subr.mxu0 0.0
    %3495 = vmatpush1.xpose.msra.mxu0 0.0
    %3496 = vmatprep.subr.mxu0 0.0
    %3497 = vmatpush1.xpose.msra.mxu0 0.0
    %3498 = vmatprep.subr.mxu0 0.0
    %3499 = vmatpush1.xpose.msra.mxu0 0.0
    %3500 = vmatprep.subr.mxu0 0.0
    %3501 = vmatpush1.xpose.msra.mxu0 0.0
    %3502 = vmatprep.subr.mxu0 0.0
    %3503 = vmatpush1.xpose.msra.mxu0 0.0
    %3504 = vmatprep.subr.mxu0 0.0
    %3505 = vmatpush1.xpose.msra.mxu0 0.0
    %3506 = vmatprep.subr.mxu0 0.0
    %3507 = vmatpush1.xpose.msra.mxu0 0.0
    %3508 = vmatprep.subr.mxu0 0.0
    %3509 = vmatpush1.xpose.msra.mxu0 0.0
    %3510 = vmatprep.subr.mxu0 0.0
    %3511 = vmatpush1.xpose.msra.mxu0 0.0
    %3512 = vmatprep.subr.mxu0 0.0
    %3513 = vmatpush1.xpose.msra.mxu0 0.0
    %3514 = vmatprep.subr.mxu0 0.0
    %3515 = vmatpush1.xpose.msra.mxu0 0.0
    %3516 = vmatprep.subr.mxu0 0.0
    %3517 = vmatpush1.xpose.msra.mxu0 0.0
    %3518 = vmatprep.subr.mxu0 0.0
    %3519 = vmatpush1.xpose.msra.mxu0 0.0
    %3520 = vmatprep.subr.mxu0 0.0
    %3521 = vmatpush1.xpose.msra.mxu0 0.0
    %3522 = vmatprep.subr.mxu0 0.0
    %3523 = vmatpush1.xpose.msra.mxu0 0.0
    %3524 = vmatprep.subr.mxu0 0.0
    %3525 = vmatpush1.xpose.msra.mxu0 0.0
    %3526 = vmatprep.subr.mxu0 0.0
    %3527 = vmatpush1.xpose.msra.mxu0 0.0
    %3528 = vmatprep.subr.mxu0 0.0
    %3529 = vmatpush1.xpose.msra.mxu0 0.0
    %3530 = vmatprep.subr.mxu0 0.0
    %3531 = vmatpush1.xpose.msra.mxu0 0.0
    %3532 = vmatprep.subr.mxu0 0.0
    %3533 = vmatpush1.xpose.msra.mxu0 0.0
    %3534 = vmatprep.subr.mxu0 0.0
    %3535 = vmatpush1.xpose.msra.mxu0 0.0
    %3536 = vmatprep.subr.mxu0 0.0
    %3537 = vmatpush1.xpose.msra.mxu0 0.0
    %3538 = vmatprep.subr.mxu0 0.0
    %3539 = vmatpush1.xpose.msra.mxu0 0.0
    %3540 = vmatprep.subr.mxu0 0.0
    %3541 = vmatpush1.xpose.msra.mxu0 0.0
    %3542 = vmatprep.subr.mxu0 0.0
    %3543 = vmatpush1.xpose.msra.mxu0 0.0
    %3544 = vmatprep.mubr.f32.mxu0 0.0
    %3545 = vmatmul.mubr.f32.gmra.mrb[0].mxu0 %v3470
    %v3546 = vpop.f32.mrb[0].mxu0
    %v3547 = vadd.f32 0.0, %v3546
    %v3548 = vpop.f32.mrb[0].mxu0
    %3549 = vdwg.mxu0
    %3554 = vrot.lane.b32.xlu0 %v3434, 64
    %v3555 = vpop.permute.xlu0 %3554
    %3556 = vrot.lane.b32.xlu0 %v3435, 64
    %v3557 = vpop.permute.xlu0 %3556
    %3558 = vrot.lane.b32.xlu0 %v3436, 64
    %v3559 = vpop.permute.xlu0 %3558
    %3560 = vrot.lane.b32.xlu0 %v3437, 64
    %v3561 = vpop.permute.xlu0 %3560
    %v3562 = vsel %vm59, %v3429, 0
    %v3564 = vsel %vm59, %v3555, 0
    %v3566 = vsel %vm59, %v3557, 0
    %v3568 = vsel %vm59, %v3559, 0
    %v3570 = vsel %vm59, %v3561, 0
    %3572 = vmatprep.subr.mxu0 0.0
    %3573 = vmatpush1.xpose.msra.mxu0 %v3564
    %3574 = vmatprep.subr.mxu0 0.0
    %3575 = vmatpush1.xpose.msra.mxu0 %v3566
    %3576 = vmatprep.subr.mxu0 0.0
    %3577 = vmatpush1.xpose.msra.mxu0 %v3568
    %3578 = vmatprep.subr.mxu0 0.0
    %3579 = vmatpush1.xpose.msra.mxu0 %v3570
    %3580 = vmatprep.subr.mxu0 0.0
    %3581 = vmatpush1.xpose.msra.mxu0 0.0
    %3582 = vmatprep.subr.mxu0 0.0
    %3583 = vmatpush1.xpose.msra.mxu0 0.0
    %3584 = vmatprep.subr.mxu0 0.0
    %3585 = vmatpush1.xpose.msra.mxu0 0.0
    %3586 = vmatprep.subr.mxu0 0.0
    %3587 = vmatpush1.xpose.msra.mxu0 0.0
    %3588 = vmatprep.subr.mxu0 0.0
    %3589 = vmatpush1.xpose.msra.mxu0 0.0
    %3590 = vmatprep.subr.mxu0 0.0
    %3591 = vmatpush1.xpose.msra.mxu0 0.0
    %3592 = vmatprep.subr.mxu0 0.0
    %3593 = vmatpush1.xpose.msra.mxu0 0.0
    %3594 = vmatprep.subr.mxu0 0.0
    %3595 = vmatpush1.xpose.msra.mxu0 0.0
    %3596 = vmatprep.subr.mxu0 0.0
    %3597 = vmatpush1.xpose.msra.mxu0 0.0
    %3598 = vmatprep.subr.mxu0 0.0
    %3599 = vmatpush1.xpose.msra.mxu0 0.0
    %3600 = vmatprep.subr.mxu0 0.0
    %3601 = vmatpush1.xpose.msra.mxu0 0.0
    %3602 = vmatprep.subr.mxu0 0.0
    %3603 = vmatpush1.xpose.msra.mxu0 0.0
    %3604 = vmatprep.subr.mxu0 0.0
    %3605 = vmatpush1.xpose.msra.mxu0 0.0
    %3606 = vmatprep.subr.mxu0 0.0
    %3607 = vmatpush1.xpose.msra.mxu0 0.0
    %3608 = vmatprep.subr.mxu0 0.0
    %3609 = vmatpush1.xpose.msra.mxu0 0.0
    %3610 = vmatprep.subr.mxu0 0.0
    %3611 = vmatpush1.xpose.msra.mxu0 0.0
    %3612 = vmatprep.subr.mxu0 0.0
    %3613 = vmatpush1.xpose.msra.mxu0 0.0
    %3614 = vmatprep.subr.mxu0 0.0
    %3615 = vmatpush1.xpose.msra.mxu0 0.0
    %3616 = vmatprep.subr.mxu0 0.0
    %3617 = vmatpush1.xpose.msra.mxu0 0.0
    %3618 = vmatprep.subr.mxu0 0.0
    %3619 = vmatpush1.xpose.msra.mxu0 0.0
    %3620 = vmatprep.subr.mxu0 0.0
    %3621 = vmatpush1.xpose.msra.mxu0 0.0
    %3622 = vmatprep.subr.mxu0 0.0
    %3623 = vmatpush1.xpose.msra.mxu0 0.0
    %3624 = vmatprep.subr.mxu0 0.0
    %3625 = vmatpush1.xpose.msra.mxu0 0.0
    %3626 = vmatprep.subr.mxu0 0.0
    %3627 = vmatpush1.xpose.msra.mxu0 0.0
    %3628 = vmatprep.subr.mxu0 0.0
    %3629 = vmatpush1.xpose.msra.mxu0 0.0
    %3630 = vmatprep.subr.mxu0 0.0
    %3631 = vmatpush1.xpose.msra.mxu0 0.0
    %3632 = vmatprep.subr.mxu0 0.0
    %3633 = vmatpush1.xpose.msra.mxu0 0.0
    %3634 = vmatprep.subr.mxu0 0.0
    %3635 = vmatpush1.xpose.msra.mxu0 0.0
    %3636 = vmatprep.mubr.f32.mxu0 0.0
    %3637 = vmatmul.mubr.f32.gmra.mrb[0].mxu0 %v3562
    %v3638 = vpop.f32.mrb[0].mxu0
    %v3639 = vadd.f32 0.0, %v3638
    %v3640 = vpop.f32.mrb[0].mxu0
    %3641 = vdwg.mxu0
    %v3642 = vmul.f32 %v3547, 1.442695
    %v3643 = vpow.pop %v3642
    %v3644 = vmul.f32 %v3639, 1.442695
    %v3645 = vpow.pop %v3644
    %v3648 = vrot.slane %v3645, 7
    %v3649 = vsel %vm2072, %v3648, %v3643
    %v3650 = vsel %vm59, %v3649, 0
    %3652 = vmatprep.subr.mxu0 0.0
    %3653 = vmatpush1.msra.mxu0 %v44
    %3654 = vmatprep.subr.mxu0 0.0
    %3655 = vmatpush1.msra.mxu0 %v45
    %3656 = vmatprep.subr.mxu0 0.0
    %3657 = vmatpush1.msra.mxu0 %v46
    %3658 = vmatprep.subr.mxu0 0.0
    %3659 = vmatpush1.msra.mxu0 %v47
    %3660 = vmatprep.subr.mxu0 0.0
    %3661 = vmatpush1.msra.mxu0 0.0
    %3662 = vmatprep.subr.mxu0 0.0
    %3663 = vmatpush1.msra.mxu0 0.0
    %3664 = vmatprep.subr.mxu0 0.0
    %3665 = vmatpush1.msra.mxu0 0.0
    %3666 = vmatprep.subr.mxu0 0.0
    %3667 = vmatpush1.msra.mxu0 0.0
    %3668 = vmatprep.subr.mxu0 0.0
    %3669 = vmatpush1.msra.mxu0 0.0
    %3670 = vmatprep.subr.mxu0 0.0
    %3671 = vmatpush1.msra.mxu0 0.0
    %3672 = vmatprep.subr.mxu0 0.0
    %3673 = vmatpush1.msra.mxu0 0.0
    %3674 = vmatprep.subr.mxu0 0.0
    %3675 = vmatpush1.msra.mxu0 0.0
    %3676 = vmatprep.subr.mxu0 0.0
    %3677 = vmatpush1.msra.mxu0 0.0
    %3678 = vmatprep.subr.mxu0 0.0
    %3679 = vmatpush1.msra.mxu0 0.0
    %3680 = vmatprep.subr.mxu0 0.0
    %3681 = vmatpush1.msra.mxu0 0.0
    %3682 = vmatprep.subr.mxu0 0.0
    %3683 = vmatpush1.msra.mxu0 0.0
    %3684 = vmatprep.subr.mxu0 0.0
    %3685 = vmatpush1.msra.mxu0 0.0
    %3686 = vmatprep.subr.mxu0 0.0
    %3687 = vmatpush1.msra.mxu0 0.0
    %3688 = vmatprep.subr.mxu0 0.0
    %3689 = vmatpush1.msra.mxu0 0.0
    %3690 = vmatprep.subr.mxu0 0.0
    %3691 = vmatpush1.msra.mxu0 0.0
    %3692 = vmatprep.subr.mxu0 0.0
    %3693 = vmatpush1.msra.mxu0 0.0
    %3694 = vmatprep.subr.mxu0 0.0
    %3695 = vmatpush1.msra.mxu0 0.0
    %3696 = vmatprep.subr.mxu0 0.0
    %3697 = vmatpush1.msra.mxu0 0.0
    %3698 = vmatprep.subr.mxu0 0.0
    %3699 = vmatpush1.msra.mxu0 0.0
    %3700 = vmatprep.subr.mxu0 0.0
    %3701 = vmatpush1.msra.mxu0 0.0
    %3702 = vmatprep.subr.mxu0 0.0
    %3703 = vmatpush1.msra.mxu0 0.0
    %3704 = vmatprep.subr.mxu0 0.0
    %3705 = vmatpush1.msra.mxu0 0.0
    %3706 = vmatprep.subr.mxu0 0.0
    %3707 = vmatpush1.msra.mxu0 0.0
    %3708 = vmatprep.subr.mxu0 0.0
    %3709 = vmatpush1.msra.mxu0 0.0
    %3710 = vmatprep.subr.mxu0 0.0
    %3711 = vmatpush1.msra.mxu0 0.0
    %3712 = vmatprep.subr.mxu0 0.0
    %3713 = vmatpush1.msra.mxu0 0.0
    %3714 = vmatprep.subr.mxu0 0.0
    %3715 = vmatpush1.msra.mxu0 0.0
    %3716 = vmatprep.mubr.f32.mxu0 0.0
    %3717 = vmatmul.mubr.f32.gmra.mrb[0].mxu0 %v3650
    %v3718 = vpop.f32.mrb[0].mxu0
    %v3719 = vadd.f32 0.0, %v3718
    %v3720 = vpop.f32.mrb[0].mxu0
    %3721 = vdwg.mxu0
    %v3722 = vrcp.pop %v3719
    %v3723 = vmul.f32 %v3719, %v3722
    %v3724 = vsub.f32 2.0, %v3723
    %v3725 = vmul.f32 %v3722, %v3724
    %v3727 = vrot.slane %v3725, 1
    %v3730 = vmul.f32 %v3643, %v3725
    %v3731 = vmul.f32 %v3645, %v3727
    %3736 = vrot.lane.b32.xlu0 %v3450, 32
    %v3737 = vpop.permute.xlu0 %3736
    %3738 = vrot.lane.b32.xlu0 %v3451, 32
    %v3739 = vpop.permute.xlu0 %3738
    %3740 = vrot.lane.b32.xlu0 %v3452, 32
    %v3741 = vpop.permute.xlu0 %3740
    %3742 = vrot.lane.b32.xlu0 %v3453, 32
    %v3743 = vpop.permute.xlu0 %3742
    %v3749 = vsel %vm59, %v3730, 0
    %3751 = vmatprep.subr.mxu0 0.0
    %3752 = vmatpush1.msra.mxu0 %v3737
    %3753 = vmatprep.subr.mxu0 0.0
    %3754 = vmatpush1.msra.mxu0 %v3739
    %3755 = vmatprep.subr.mxu0 0.0
    %3756 = vmatpush1.msra.mxu0 %v3741
    %3757 = vmatprep.subr.mxu0 0.0
    %3758 = vmatpush1.msra.mxu0 %v3743
    %3759 = vmatprep.subr.mxu0 0.0
    %3760 = vmatpush1.msra.mxu0 0.0
    %3761 = vmatprep.subr.mxu0 0.0
    %3762 = vmatpush1.msra.mxu0 0.0
    %3763 = vmatprep.subr.mxu0 0.0
    %3764 = vmatpush1.msra.mxu0 0.0
    %3765 = vmatprep.subr.mxu0 0.0
    %3766 = vmatpush1.msra.mxu0 0.0
    %3767 = vmatprep.subr.mxu0 0.0
    %3768 = vmatpush1.msra.mxu0 0.0
    %3769 = vmatprep.subr.mxu0 0.0
    %3770 = vmatpush1.msra.mxu0 0.0
    %3771 = vmatprep.subr.mxu0 0.0
    %3772 = vmatpush1.msra.mxu0 0.0
    %3773 = vmatprep.subr.mxu0 0.0
    %3774 = vmatpush1.msra.mxu0 0.0
    %3775 = vmatprep.subr.mxu0 0.0
    %3776 = vmatpush1.msra.mxu0 0.0
    %3777 = vmatprep.subr.mxu0 0.0
    %3778 = vmatpush1.msra.mxu0 0.0
    %3779 = vmatprep.subr.mxu0 0.0
    %3780 = vmatpush1.msra.mxu0 0.0
    %3781 = vmatprep.subr.mxu0 0.0
    %3782 = vmatpush1.msra.mxu0 0.0
    %3783 = vmatprep.subr.mxu0 0.0
    %3784 = vmatpush1.msra.mxu0 0.0
    %3785 = vmatprep.subr.mxu0 0.0
    %3786 = vmatpush1.msra.mxu0 0.0
    %3787 = vmatprep.subr.mxu0 0.0
    %3788 = vmatpush1.msra.mxu0 0.0
    %3789 = vmatprep.subr.mxu0 0.0
    %3790 = vmatpush1.msra.mxu0 0.0
    %3791 = vmatprep.subr.mxu0 0.0
    %3792 = vmatpush1.msra.mxu0 0.0
    %3793 = vmatprep.subr.mxu0 0.0
    %3794 = vmatpush1.msra.mxu0 0.0
    %3795 = vmatprep.subr.mxu0 0.0
    %3796 = vmatpush1.msra.mxu0 0.0
    %3797 = vmatprep.subr.mxu0 0.0
    %3798 = vmatpush1.msra.mxu0 0.0
    %3799 = vmatprep.subr.mxu0 0.0
    %3800 = vmatpush1.msra.mxu0 0.0
    %3801 = vmatprep.subr.mxu0 0.0
    %3802 = vmatpush1.msra.mxu0 0.0
    %3803 = vmatprep.subr.mxu0 0.0
    %3804 = vmatpush1.msra.mxu0 0.0
    %3805 = vmatprep.subr.mxu0 0.0
    %3806 = vmatpush1.msra.mxu0 0.0
    %3807 = vmatprep.subr.mxu0 0.0
    %3808 = vmatpush1.msra.mxu0 0.0
    %3809 = vmatprep.subr.mxu0 0.0
    %3810 = vmatpush1.msra.mxu0 0.0
    %3811 = vmatprep.subr.mxu0 0.0
    %3812 = vmatpush1.msra.mxu0 0.0
    %3813 = vmatprep.subr.mxu0 0.0
    %3814 = vmatpush1.msra.mxu0 0.0
    %3815 = vmatprep.mubr.f32.mxu0 0.0
    %3816 = vmatmul.mubr.f32.gmra.mrb[0].mxu0 %v3749
    %v3817 = vpop.f32.mrb[0].mxu0
    %v3818 = vadd.f32 0.0, %v3817
    %v3819 = vpop.f32.mrb[0].mxu0
    %3820 = vdwg.mxu0
    %3825 = vrot.lane.b32.xlu0 %v3454, 32
    %v3826 = vpop.permute.xlu0 %3825
    %3827 = vrot.lane.b32.xlu0 %v3455, 32
    %v3828 = vpop.permute.xlu0 %3827
    %3829 = vrot.lane.b32.xlu0 %v3456, 32
    %v3830 = vpop.permute.xlu0 %3829
    %3831 = vrot.lane.b32.xlu0 %v3457, 32
    %v3832 = vpop.permute.xlu0 %3831
    %v3838 = vsel %vm59, %v3731, 0
    %3840 = vmatprep.subr.mxu0 0.0
    %3841 = vmatpush1.msra.mxu0 %v3826
    %3842 = vmatprep.subr.mxu0 0.0
    %3843 = vmatpush1.msra.mxu0 %v3828
    %3844 = vmatprep.subr.mxu0 0.0
    %3845 = vmatpush1.msra.mxu0 %v3830
    %3846 = vmatprep.subr.mxu0 0.0
    %3847 = vmatpush1.msra.mxu0 %v3832
    %3848 = vmatprep.subr.mxu0 0.0
    %3849 = vmatpush1.msra.mxu0 0.0
    %3850 = vmatprep.subr.mxu0 0.0
    %3851 = vmatpush1.msra.mxu0 0.0
    %3852 = vmatprep.subr.mxu0 0.0
    %3853 = vmatpush1.msra.mxu0 0.0
    %3854 = vmatprep.subr.mxu0 0.0
    %3855 = vmatpush1.msra.mxu0 0.0
    %3856 = vmatprep.subr.mxu0 0.0
    %3857 = vmatpush1.msra.mxu0 0.0
    %3858 = vmatprep.subr.mxu0 0.0
    %3859 = vmatpush1.msra.mxu0 0.0
    %3860 = vmatprep.subr.mxu0 0.0
    %3861 = vmatpush1.msra.mxu0 0.0
    %3862 = vmatprep.subr.mxu0 0.0
    %3863 = vmatpush1.msra.mxu0 0.0
    %3864 = vmatprep.subr.mxu0 0.0
    %3865 = vmatpush1.msra.mxu0 0.0
    %3866 = vmatprep.subr.mxu0 0.0
    %3867 = vmatpush1.msra.mxu0 0.0
    %3868 = vmatprep.subr.mxu0 0.0
    %3869 = vmatpush1.msra.mxu0 0.0
    %3870 = vmatprep.subr.mxu0 0.0
    %3871 = vmatpush1.msra.mxu0 0.0
    %3872 = vmatprep.subr.mxu0 0.0
    %3873 = vmatpush1.msra.mxu0 0.0
    %3874 = vmatprep.subr.mxu0 0.0
    %3875 = vmatpush1.msra.mxu0 0.0
    %3876 = vmatprep.subr.mxu0 0.0
    %3877 = vmatpush1.msra.mxu0 0.0
    %3878 = vmatprep.subr.mxu0 0.0
    %3879 = vmatpush1.msra.mxu0 0.0
    %3880 = vmatprep.subr.mxu0 0.0
    %3881 = vmatpush1.msra.mxu0 0.0
    %3882 = vmatprep.subr.mxu0 0.0
    %3883 = vmatpush1.msra.mxu0 0.0
    %3884 = vmatprep.subr.mxu0 0.0
    %3885 = vmatpush1.msra.mxu0 0.0
    %3886 = vmatprep.subr.mxu0 0.0
    %3887 = vmatpush1.msra.mxu0 0.0
    %3888 = vmatprep.subr.mxu0 0.0
    %3889 = vmatpush1.msra.mxu0 0.0
    %3890 = vmatprep.subr.mxu0 0.0
    %3891 = vmatpush1.msra.mxu0 0.0
    %3892 = vmatprep.subr.mxu0 0.0
    %3893 = vmatpush1.msra.mxu0 0.0
    %3894 = vmatprep.subr.mxu0 0.0
    %3895 = vmatpush1.msra.mxu0 0.0
    %3896 = vmatprep.subr.mxu0 0.0
    %3897 = vmatpush1.msra.mxu0 0.0
    %3898 = vmatprep.subr.mxu0 0.0
    %3899 = vmatpush1.msra.mxu0 0.0
    %3900 = vmatprep.subr.mxu0 0.0
    %3901 = vmatpush1.msra.mxu0 0.0
    %3902 = vmatprep.subr.mxu0 0.0
    %3903 = vmatpush1.msra.mxu0 0.0
    %3904 = vmatprep.mubr.f32.mxu0 0.0
    %3905 = vmatmul.mubr.f32.gmra.mrb[0].mxu0 %v3838
    %v3906 = vpop.f32.mrb[0].mxu0
    %v3907 = vadd.f32 0.0, %v3906
    %v3908 = vpop.f32.mrb[0].mxu0
    %3909 = vdwg.mxu0
    %v3910 = vld [vmem:[#allocation5 + $0x3a0] sm:$0xff]
    %v3911 = vld [vmem:[#allocation5 + $0x3a8] sm:$0xff]
    %v3912 = vld [vmem:[#allocation5 + $0x3b0] sm:$0xff]
    %v3913 = vld [vmem:[#allocation5 + $0x3b8] sm:$0xff]
    %v3914 = vld [vmem:[#allocation5 + $0x3c0] sm:$0x1]
    %v3915 = vlaneseq
    %v3916 = vshrl.u32 %v3915, 7
    %v3917 = vsub.s32 0, %v3916
    %v3918 = vrot.slane %v3914, %v3917
    %v3921 = vrot.slane %v3907, 7
    %v3922 = vsel %vm2072, %v3921, %v3818
    %v3923 = vsel %vm59, %v3922, 0
    %3925 = vmatprep.subr.mxu0 0.0
    %3926 = vmatpush1.msra.mxu0 %v3910
    %3927 = vmatprep.subr.mxu0 0.0
    %3928 = vmatpush1.msra.mxu0 %v3911
    %3929 = vmatprep.subr.mxu0 0.0
    %3930 = vmatpush1.msra.mxu0 %v3912
    %3931 = vmatprep.subr.mxu0 0.0
    %3932 = vmatpush1.msra.mxu0 %v3913
    %3933 = vmatprep.subr.mxu0 0.0
    %3934 = vmatpush1.msra.mxu0 0.0
    %3935 = vmatprep.subr.mxu0 0.0
    %3936 = vmatpush1.msra.mxu0 0.0
    %3937 = vmatprep.subr.mxu0 0.0
    %3938 = vmatpush1.msra.mxu0 0.0
    %3939 = vmatprep.subr.mxu0 0.0
    %3940 = vmatpush1.msra.mxu0 0.0
    %3941 = vmatprep.subr.mxu0 0.0
    %3942 = vmatpush1.msra.mxu0 0.0
    %3943 = vmatprep.subr.mxu0 0.0
    %3944 = vmatpush1.msra.mxu0 0.0
    %3945 = vmatprep.subr.mxu0 0.0
    %3946 = vmatpush1.msra.mxu0 0.0
    %3947 = vmatprep.subr.mxu0 0.0
    %3948 = vmatpush1.msra.mxu0 0.0
    %3949 = vmatprep.subr.mxu0 0.0
    %3950 = vmatpush1.msra.mxu0 0.0
    %3951 = vmatprep.subr.mxu0 0.0
    %3952 = vmatpush1.msra.mxu0 0.0
    %3953 = vmatprep.subr.mxu0 0.0
    %3954 = vmatpush1.msra.mxu0 0.0
    %3955 = vmatprep.subr.mxu0 0.0
    %3956 = vmatpush1.msra.mxu0 0.0
    %3957 = vmatprep.subr.mxu0 0.0
    %3958 = vmatpush1.msra.mxu0 0.0
    %3959 = vmatprep.subr.mxu0 0.0
    %3960 = vmatpush1.msra.mxu0 0.0
    %3961 = vmatprep.subr.mxu0 0.0
    %3962 = vmatpush1.msra.mxu0 0.0
    %3963 = vmatprep.subr.mxu0 0.0
    %3964 = vmatpush1.msra.mxu0 0.0
    %3965 = vmatprep.subr.mxu0 0.0
    %3966 = vmatpush1.msra.mxu0 0.0
    %3967 = vmatprep.subr.mxu0 0.0
    %3968 = vmatpush1.msra.mxu0 0.0
    %3969 = vmatprep.subr.mxu0 0.0
    %3970 = vmatpush1.msra.mxu0 0.0
    %3971 = vmatprep.subr.mxu0 0.0
    %3972 = vmatpush1.msra.mxu0 0.0
    %3973 = vmatprep.subr.mxu0 0.0
    %3974 = vmatpush1.msra.mxu0 0.0
    %3975 = vmatprep.subr.mxu0 0.0
    %3976 = vmatpush1.msra.mxu0 0.0
    %3977 = vmatprep.subr.mxu0 0.0
    %3978 = vmatpush1.msra.mxu0 0.0
    %3979 = vmatprep.subr.mxu0 0.0
    %3980 = vmatpush1.msra.mxu0 0.0
    %3981 = vmatprep.subr.mxu0 0.0
    %3982 = vmatpush1.msra.mxu0 0.0
    %3983 = vmatprep.subr.mxu0 0.0
    %3984 = vmatpush1.msra.mxu0 0.0
    %3985 = vmatprep.subr.mxu0 0.0
    %3986 = vmatpush1.msra.mxu0 0.0
    %3987 = vmatprep.subr.mxu0 0.0
    %3988 = vmatpush1.msra.mxu0 0.0
    %3989 = vmatprep.mubr.f32.mxu0 0.0
    %3990 = vmatmul.mubr.f32.gmra.mrb[0].mxu0 %v3923
    %v3991 = vpop.f32.mrb[0].mxu0
    %v3992 = vadd.f32 %v3918, %v3991
    %v3993 = vpop.f32.mrb[0].mxu0
    %3994 = vdwg.mxu0
    %v3996 = vrot.slane %v3992, 1
    %v3997 = vrot.slane %v3992, 2
    %v4000 = vadd.f32 %v3319, %v3996
    %v4001 = vadd.f32 %v3320, %v3997
    %v4004 = vrot.slane %v4001, 7
    %v4007 = vsel %vm2158, %v4000, 0.0
    %4008 = vadd.xlane.f32.xlu0 %v4007
    %v4009 = vpop.xlane.xlu0 %4008
    %v4010 = vsel %vm2162, %v4004, 0.0
    %4011 = vadd.xlane.f32.xlu0 %v4010
    %v4012 = vpop.xlane.xlu0 %4011
    %v4013 = vmul.f32 %v4009, %v742
    %v4014 = vmul.f32 %v4012, %v742
    %v4017 = vrot.slane %v4014, 1
    %v4020 = vsub.f32 %v4000, %v4013
    %v4021 = vsub.f32 %v4001, %v4017
    %v4022 = vmul.f32 %v4020, %v4020
    %v4023 = vmul.f32 %v4021, %v4021
    %v4026 = vrot.slane %v4023, 7
    %v4029 = vsel %vm2158, %v4022, 0.0
    %4030 = vadd.xlane.f32.xlu0 %v4029
    %v4031 = vpop.xlane.xlu0 %4030
    %v4032 = vsel %vm2162, %v4026, 0.0
    %4033 = vadd.xlane.f32.xlu0 %v4032
    %v4034 = vpop.xlane.xlu0 %4033
    %v4035 = vmul.f32 %v4031, %v742
    %v4036 = vmul.f32 %v4034, %v742
    %v4037 = vadd.f32 %v4035, 1e-05
    %v4038 = vadd.f32 %v4036, 1e-05
    %v4039 = vrsqrt.pop %v4037
    %v4040 = vrsqrt.pop %v4038
    %v4043 = vrot.slane %v4040, 1
    %v4046 = vmul.f32 %v4020, %v4039
    %v4047 = vmul.f32 %v4021, %v4043
    %v4048 = vld [vmem:[#allocation5 + $0x448] sm:$0x1]
    %v4049 = vlaneseq
    %v4050 = vshrl.u32 %v4049, 7
    %v4051 = vsub.s32 0, %v4050
    %v4052 = vrot.slane %v4048, %v4051
    %v4053 = vmul.f32 %v4046, %v4052
    %v4054 = vmul.f32 %v4047, %v4052
    %v4055 = vld [vmem:[#allocation5 + $0x450] sm:$0x1]
    %v4056 = vlaneseq
    %v4057 = vshrl.u32 %v4056, 7
    %v4058 = vsub.s32 0, %v4057
    %v4059 = vrot.slane %v4055, %v4058
    %v4060 = vadd.f32 %v4053, %v4059
    %v4061 = vadd.f32 %v4054, %v4059
    %v4062 = vld [vmem:[#allocation5 + $0x3c8] sm:$0xff]
    %v4063 = vld [vmem:[#allocation5 + $0x3d0] sm:$0xff]
    %v4064 = vld [vmem:[#allocation5 + $0x3d8] sm:$0xff]
    %v4065 = vld [vmem:[#allocation5 + $0x3e0] sm:$0xff]
    %v4066 = vld [vmem:[#allocation5 + $0x3e8] sm:$0x1]
    %v4067 = vlaneseq
    %v4068 = vshrl.u32 %v4067, 7
    %v4069 = vsub.s32 0, %v4068
    %v4070 = vrot.slane %v4066, %v4069
    %v4073 = vrot.slane %v4060, 7
    %v4074 = vrot.slane %v4061, 6
    %v4075 = vsel %vm2072, %v4074, %v4073
    %v4076 = vsel %vm59, %v4075, 0
    %4078 = vmatprep.subr.mxu0 0.0
    %4079 = vmatpush1.msra.mxu0 %v4062
    %4080 = vmatprep.subr.mxu0 0.0
    %4081 = vmatpush1.msra.mxu0 %v4063
    %4082 = vmatprep.subr.mxu0 0.0
    %4083 = vmatpush1.msra.mxu0 %v4064
    %4084 = vmatprep.subr.mxu0 0.0
    %4085 = vmatpush1.msra.mxu0 %v4065
    %4086 = vmatprep.subr.mxu0 0.0
    %4087 = vmatpush1.msra.mxu0 0.0
    %4088 = vmatprep.subr.mxu0 0.0
    %4089 = vmatpush1.msra.mxu0 0.0
    %4090 = vmatprep.subr.mxu0 0.0
    %4091 = vmatpush1.msra.mxu0 0.0
    %4092 = vmatprep.subr.mxu0 0.0
    %4093 = vmatpush1.msra.mxu0 0.0
    %4094 = vmatprep.subr.mxu0 0.0
    %4095 = vmatpush1.msra.mxu0 0.0
    %4096 = vmatprep.subr.mxu0 0.0
    %4097 = vmatpush1.msra.mxu0 0.0
    %4098 = vmatprep.subr.mxu0 0.0
    %4099 = vmatpush1.msra.mxu0 0.0
    %4100 = vmatprep.subr.mxu0 0.0
    %4101 = vmatpush1.msra.mxu0 0.0
    %4102 = vmatprep.subr.mxu0 0.0
    %4103 = vmatpush1.msra.mxu0 0.0
    %4104 = vmatprep.subr.mxu0 0.0
    %4105 = vmatpush1.msra.mxu0 0.0
    %4106 = vmatprep.subr.mxu0 0.0
    %4107 = vmatpush1.msra.mxu0 0.0
    %4108 = vmatprep.subr.mxu0 0.0
    %4109 = vmatpush1.msra.mxu0 0.0
    %4110 = vmatprep.subr.mxu0 0.0
    %4111 = vmatpush1.msra.mxu0 0.0
    %4112 = vmatprep.subr.mxu0 0.0
    %4113 = vmatpush1.msra.mxu0 0.0
    %4114 = vmatprep.subr.mxu0 0.0
    %4115 = vmatpush1.msra.mxu0 0.0
    %4116 = vmatprep.subr.mxu0 0.0
    %4117 = vmatpush1.msra.mxu0 0.0
    %4118 = vmatprep.subr.mxu0 0.0
    %4119 = vmatpush1.msra.mxu0 0.0
    %4120 = vmatprep.subr.mxu0 0.0
    %4121 = vmatpush1.msra.mxu0 0.0
    %4122 = vmatprep.subr.mxu0 0.0
    %4123 = vmatpush1.msra.mxu0 0.0
    %4124 = vmatprep.subr.mxu0 0.0
    %4125 = vmatpush1.msra.mxu0 0.0
    %4126 = vmatprep.subr.mxu0 0.0
    %4127 = vmatpush1.msra.mxu0 0.0
    %4128 = vmatprep.subr.mxu0 0.0
    %4129 = vmatpush1.msra.mxu0 0.0
    %4130 = vmatprep.subr.mxu0 0.0
    %4131 = vmatpush1.msra.mxu0 0.0
    %4132 = vmatprep.subr.mxu0 0.0
    %4133 = vmatpush1.msra.mxu0 0.0
    %4134 = vmatprep.subr.mxu0 0.0
    %4135 = vmatpush1.msra.mxu0 0.0
    %4136 = vmatprep.subr.mxu0 0.0
    %4137 = vmatpush1.msra.mxu0 0.0
    %4138 = vmatprep.subr.mxu0 0.0
    %4139 = vmatpush1.msra.mxu0 0.0
    %4140 = vmatprep.subr.mxu0 0.0
    %4141 = vmatpush1.msra.mxu0 0.0
    %4142 = vmatprep.mubr.f32.mxu0 0.0
    %4143 = vmatmul.mubr.f32.gmra.mrb[0].mxu0 %v4076
    %v4144 = vpop.f32.mrb[0].mxu0
    %v4145 = vadd.f32 %v4070, %v4144
    %v4146 = vpop.f32.mrb[0].mxu0
    %4147 = vdwg.mxu0
    %v4148 = vmax.f32 %v4145, 0.0
    %v4149 = vld [vmem:[#allocation5 + $0x3f0] sm:$0xff]
    %v4150 = vld [vmem:[#allocation5 + $0x3f8] sm:$0xff]
    %v4151 = vld [vmem:[#allocation5 + $0x400] sm:$0xff]
    %v4152 = vld [vmem:[#allocation5 + $0x408] sm:$0xff]
    %v4153 = vld [vmem:[#allocation5 + $0x410] sm:$0xff]
    %v4154 = vld [vmem:[#allocation5 + $0x418] sm:$0xff]
    %v4155 = vld [vmem:[#allocation5 + $0x420] sm:$0xff]
    %v4156 = vld [vmem:[#allocation5 + $0x428] sm:$0xff]
    %v4157 = vld [vmem:[#allocation5 + $0x430] sm:$0x1]
    %v4158 = vlaneseq
    %v4159 = vshrl.u32 %v4158, 7
    %v4160 = vsub.s32 0, %v4159
    %v4161 = vrot.slane %v4157, %v4160
    %v4163 = vsel %vm882, %v4148, 0
    %4165 = vmatprep.subr.mxu0 0.0
    %4166 = vmatpush1.msra.mxu0 %v4149
    %4167 = vmatprep.subr.mxu0 0.0
    %4168 = vmatpush1.msra.mxu0 %v4150
    %4169 = vmatprep.subr.mxu0 0.0
    %4170 = vmatpush1.msra.mxu0 %v4151
    %4171 = vmatprep.subr.mxu0 0.0
    %4172 = vmatpush1.msra.mxu0 %v4152
    %4173 = vmatprep.subr.mxu0 0.0
    %4174 = vmatpush1.msra.mxu0 %v4153
    %4175 = vmatprep.subr.mxu0 0.0
    %4176 = vmatpush1.msra.mxu0 %v4154
    %4177 = vmatprep.subr.mxu0 0.0
    %4178 = vmatpush1.msra.mxu0 %v4155
    %4179 = vmatprep.subr.mxu0 0.0
    %4180 = vmatpush1.msra.mxu0 %v4156
    %4181 = vmatprep.subr.mxu0 0.0
    %4182 = vmatpush1.msra.mxu0 0.0
    %4183 = vmatprep.subr.mxu0 0.0
    %4184 = vmatpush1.msra.mxu0 0.0
    %4185 = vmatprep.subr.mxu0 0.0
    %4186 = vmatpush1.msra.mxu0 0.0
    %4187 = vmatprep.subr.mxu0 0.0
    %4188 = vmatpush1.msra.mxu0 0.0
    %4189 = vmatprep.subr.mxu0 0.0
    %4190 = vmatpush1.msra.mxu0 0.0
    %4191 = vmatprep.subr.mxu0 0.0
    %4192 = vmatpush1.msra.mxu0 0.0
    %4193 = vmatprep.subr.mxu0 0.0
    %4194 = vmatpush1.msra.mxu0 0.0
    %4195 = vmatprep.subr.mxu0 0.0
    %4196 = vmatpush1.msra.mxu0 0.0
    %4197 = vmatprep.subr.mxu0 0.0
    %4198 = vmatpush1.msra.mxu0 0.0
    %4199 = vmatprep.subr.mxu0 0.0
    %4200 = vmatpush1.msra.mxu0 0.0
    %4201 = vmatprep.subr.mxu0 0.0
    %4202 = vmatpush1.msra.mxu0 0.0
    %4203 = vmatprep.subr.mxu0 0.0
    %4204 = vmatpush1.msra.mxu0 0.0
    %4205 = vmatprep.subr.mxu0 0.0
    %4206 = vmatpush1.msra.mxu0 0.0
    %4207 = vmatprep.subr.mxu0 0.0
    %4208 = vmatpush1.msra.mxu0 0.0
    %4209 = vmatprep.subr.mxu0 0.0
    %4210 = vmatpush1.msra.mxu0 0.0
    %4211 = vmatprep.subr.mxu0 0.0
    %4212 = vmatpush1.msra.mxu0 0.0
    %4213 = vmatprep.subr.mxu0 0.0
    %4214 = vmatpush1.msra.mxu0 0.0
    %4215 = vmatprep.subr.mxu0 0.0
    %4216 = vmatpush1.msra.mxu0 0.0
    %4217 = vmatprep.subr.mxu0 0.0
    %4218 = vmatpush1.msra.mxu0 0.0
    %4219 = vmatprep.subr.mxu0 0.0
    %4220 = vmatpush1.msra.mxu0 0.0
    %4221 = vmatprep.subr.mxu0 0.0
    %4222 = vmatpush1.msra.mxu0 0.0
    %4223 = vmatprep.subr.mxu0 0.0
    %4224 = vmatpush1.msra.mxu0 0.0
    %4225 = vmatprep.subr.mxu0 0.0
    %4226 = vmatpush1.msra.mxu0 0.0
    %4227 = vmatprep.subr.mxu0 0.0
    %4228 = vmatpush1.msra.mxu0 0.0
    %4229 = vmatprep.mubr.f32.mxu0 0.0
    %4230 = vmatmul.mubr.f32.gmra.mrb[0].mxu0 %v4163
    %v4231 = vpop.f32.mrb[0].mxu0
    %v4232 = vadd.f32 %v4161, %v4231
    %v4233 = vpop.f32.mrb[0].mxu0
    %4234 = vdwg.mxu0
    %v4236 = vrot.slane %v4232, 1
    %v4237 = vrot.slane %v4232, 2
    %v4240 = vadd.f32 %v4060, %v4236
    %v4241 = vadd.f32 %v4061, %v4237
    %v4244 = vrot.slane %v4241, 7
    %v4247 = vsel %vm2158, %v4240, 0.0
    %4248 = vadd.xlane.f32.xlu0 %v4247
    %v4249 = vpop.xlane.xlu0 %4248
    %v4250 = vsel %vm2162, %v4244, 0.0
    %4251 = vadd.xlane.f32.xlu0 %v4250
    %v4252 = vpop.xlane.xlu0 %4251
    %v4253 = vmul.f32 %v4249, %v742
    %v4254 = vmul.f32 %v4252, %v742
    %v4257 = vrot.slane %v4254, 1
    %v4260 = vsub.f32 %v4240, %v4253
    %v4261 = vsub.f32 %v4241, %v4257
    %v4262 = vmul.f32 %v4260, %v4260
    %v4263 = vmul.f32 %v4261, %v4261
    %v4266 = vrot.slane %v4263, 7
    %v4269 = vsel %vm2158, %v4262, 0.0
    %4270 = vadd.xlane.f32.xlu0 %v4269
    %v4271 = vpop.xlane.xlu0 %4270
    %v4272 = vsel %vm2162, %v4266, 0.0
    %4273 = vadd.xlane.f32.xlu0 %v4272
    %v4274 = vpop.xlane.xlu0 %4273
    %v4275 = vmul.f32 %v4271, %v742
    %v4276 = vmul.f32 %v4274, %v742
    %v4277 = vadd.f32 %v4275, 1e-05
    %v4278 = vadd.f32 %v4276, 1e-05
    %v4279 = vrsqrt.pop %v4277
    %v4280 = vrsqrt.pop %v4278
    %v4283 = vrot.slane %v4280, 1
    %v4286 = vmul.f32 %v4260, %v4279
    %v4287 = vmul.f32 %v4261, %v4283
    %v4288 = vld [vmem:[#allocation5 + $0x458] sm:$0x1]
    %v4289 = vlaneseq
    %v4290 = vshrl.u32 %v4289, 7
    %v4291 = vsub.s32 0, %v4290
    %v4292 = vrot.slane %v4288, %v4291
    %v4293 = vmul.f32 %v4286, %v4292
    %v4294 = vmul.f32 %v4287, %v4292
    %v4295 = vld [vmem:[#allocation5 + $0x460] sm:$0x1]
    %v4296 = vlaneseq
    %v4297 = vshrl.u32 %v4296, 7
    %v4298 = vsub.s32 0, %v4297
    %v4299 = vrot.slane %v4295, %v4298
    %v4300 = vadd.f32 %v4293, %v4299
    %v4301 = vadd.f32 %v4294, %v4299
    %v4304 = vrot.slane %v4301, 7
    %v4307 = vsel %vm2158, %v4300, 0.0
    %4308 = vadd.xlane.f32.xlu0 %v4307
    %v4309 = vpop.xlane.xlu0 %4308
    %v4310 = vsel %vm2162, %v4304, 0.0
    %4311 = vadd.xlane.f32.xlu0 %v4310
    %v4312 = vpop.xlane.xlu0 %4311
    %v4313 = vmul.f32 %v4309, %v742
    %v4314 = vmul.f32 %v4312, %v742
    %v4317 = vrot.slane %v4314, 1
    %v4320 = vsub.f32 %v4300, %v4313
    %v4321 = vsub.f32 %v4301, %v4317
    %v4322 = vmul.f32 %v4320, %v4320
    %v4323 = vmul.f32 %v4321, %v4321
    %v4326 = vrot.slane %v4323, 7
    %v4329 = vsel %vm2158, %v4322, 0.0
    %4330 = vadd.xlane.f32.xlu0 %v4329
    %v4331 = vpop.xlane.xlu0 %4330
    %v4332 = vsel %vm2162, %v4326, 0.0
    %4333 = vadd.xlane.f32.xlu0 %v4332
    %v4334 = vpop.xlane.xlu0 %4333
    %v4335 = vmul.f32 %v4331, %v742
    %v4336 = vmul.f32 %v4334, %v742
    %v4337 = vadd.f32 %v4335, 1e-05
    %v4338 = vadd.f32 %v4336, 1e-05
    %v4339 = vrsqrt.pop %v4337
    %v4340 = vrsqrt.pop %v4338
    %v4343 = vrot.slane %v4340, 1
    %v4346 = vmul.f32 %v4320, %v4339
    %v4347 = vmul.f32 %v4321, %v4343
    %v4348 = vld [vmem:[#allocation5 + $0x468] sm:$0x1]
    %v4349 = vlaneseq
    %v4350 = vshrl.u32 %v4349, 7
    %v4351 = vsub.s32 0, %v4350
    %v4352 = vrot.slane %v4348, %v4351
    %v4353 = vmul.f32 %v4346, %v4352
    %v4354 = vmul.f32 %v4347, %v4352
    %v4355 = vld [vmem:[#allocation5 + $0x470] sm:$0x1]
    %v4356 = vlaneseq
    %v4357 = vshrl.u32 %v4356, 7
    %v4358 = vsub.s32 0, %v4357
    %v4359 = vrot.slane %v4355, %v4358
    %v4360 = vadd.f32 %v4353, %v4359
    %v4361 = vadd.f32 %v4354, %v4359
    %4362 = vst.msk [vmem:[#allocation7 - $0x7] sm:$0x80] %vm2158, %v4360
    %4363 = vst.msk [vmem:[#allocation7 - $0x6] sm:$0x80] %vm2158, %v4361
    // Predicated region
    $region18: #{forward.1} parent=1 // pred_check
      _
    $region19: #{forward.1} parent=1 // pred_check_branch
      %4365 = sbr.rel (0) target = $region21
    $region20: #{forward.1} parent=1 // pred_region
      %s4367 = ssub.s32 32, 32
      %4368 = vsyncadd [#allocation4], %s4367
      %s4369 = sshll.u32 [#allocation7], 4
      %s4370 = int_to_ptr.vmem [resolvable:$true] %s4369
      %4375 = dma.vmem_to_hbm [thread:$0]  %s4370, 32, %s2, [#allocation4], 16, 16, 1
    $region21: #{forward.1} parent=1 // pred_fallthru
      _
    // Predicated region
    $region22: #{forward.1} parent=1 // pred_check
      _
    $region23: #{forward.1} parent=1 // pred_check_branch
      %4377 = sbr.rel (0) target = $region25
    $region24: #{forward.1} parent=1 // pred_region
      %4378 = dma.done [#allocation4], 32
    $region25: #{forward.1} parent=1 // pred_fallthru
      _
    %4379 = vsyncpa [#allocation3], 1
    %4380 = vsyncpa [#allocation6], 1
    %4381 = vsyncpa [#allocation4], 1

</llo_original>
